<compile_context>
chip_gen: v6e
topology: v6e:2x2x1
jax: 0.10.0
libtpu: 0.0.40
codegen_flags: <defaults>
</compile_context>

<pallas_src>
import functools

import jax
import jax.numpy as jnp
from jax.experimental import pallas as pl
from jax.experimental.pallas import tpu as pltpu


# ---------------------------------------------------------------------------
# Fused kernel: biLSTM stack + MHA + mean pool + classifier (eval mode)
# ---------------------------------------------------------------------------

def _fused_kernel(*refs, num_layers, seq_len, batch, hidden, num_heads):
    S, B, H = seq_len, batch, hidden
    E = 2 * H                       # per-token feature width after a biLSTM layer
    T = S * B                       # tokens, time-major rows: r = t*B + b
    dh = E // num_heads
    scale = 1.0 / float(dh) ** 0.5

    o_ref = refs[-1]
    idx = 0
    x_ref = refs[idx]; idx += 1
    layer_refs = []
    for _ in range(num_layers):
        layer_refs.append(refs[idx:idx + 3]); idx += 3
    mask_ref, pool_ref = refs[idx], refs[idx + 1]; idx += 2
    (wq_ref, bq_ref, wk_ref, bk_ref, wv_ref, bv_ref, wo_ref, bo_ref,
     w1_ref, b1_ref, w2_ref, b2_ref, w3_ref, b3_ref) = refs[idx:idx + 14]

    # ---- bidirectional LSTM stack (both directions fused per step) ----------
    x_in = x_ref[...]               # layer 0 rows: [x(t) | x(S-1-t)], time-major
    for v_ref, bias_ref, whh_ref in layer_refs:
        # Input projection for all steps & both directions: one wide GEMM.
        gx = jnp.dot(x_in, v_ref[...], preferred_element_type=jnp.float32) + bias_ref[...]
        whh = whh_ref[...]          # (2H, 8H) block recurrent weight

        h = None
        c = None
        hs = []                     # hs[t] = [h_fwd(t) | h_bwd(S-1-t)]
        for t in range(S):          # S static & small: fully unrolled
            g = gx[t * B:(t + 1) * B, :]                     # leading row-slab slice
            if t > 0:
                g = g + jnp.dot(h, whh, preferred_element_type=jnp.float32)
            sig = jax.nn.sigmoid(g[:, 0:3 * E])              # [i | f | o], both dirs
            gt = jnp.tanh(g[:, 3 * E:4 * E])                 # [g_fwd | g_bwd]
            i_g = sig[:, 0:E]
            f_g = sig[:, E:2 * E]
            o_g = sig[:, 2 * E:3 * E]
            c = i_g * gt if t == 0 else f_g * c + i_g * gt
            h = o_g * jnp.tanh(c)
            hs.append(h)

        # Next consumer sees rows [hs[t] | hs[S-1-t]]; the column shuffle that maps
        # this onto [out(t) | out(S-1-t)] is folded into the next weight matrix.
        slabs = [jnp.concatenate([hs[t], hs[S - 1 - t]], axis=1) for t in range(S)]
        x_in = jnp.concatenate(slabs, axis=0)                # (T, 2E), time-major

    # ---- multi-head self-attention (BN_lstm folded into lifted q/k/v weights)
    z = x_in                                                  # (T, 2E)
    q = jnp.dot(z, wq_ref[...], preferred_element_type=jnp.float32) + bq_ref[...]
    k = jnp.dot(z, wk_ref[...], preferred_element_type=jnp.float32) + bk_ref[...]
    v = jnp.dot(z, wv_ref[...], preferred_element_type=jnp.float32) + bv_ref[...]

    mask = mask_ref[...]            # (T, T): 0 within a sequence, -1e30 across sequences
    head_outs = []
    for hh in range(num_heads):
        lo = hh * dh
        qh = q[:, lo:lo + dh]
        kh = k[:, lo:lo + dh]
        vh = v[:, lo:lo + dh]
        s = jnp.einsum("qd,kd->qk", qh, kh, preferred_element_type=jnp.float32) * scale
        s = s + mask
        m = jnp.max(s, axis=-1, keepdims=True)
        e = jnp.exp(s - m)
        p_att = e / jnp.sum(e, axis=-1, keepdims=True)
        head_outs.append(jnp.dot(p_att, vh, preferred_element_type=jnp.float32))
    a = jnp.concatenate(head_outs, axis=1)                   # (T, E)

    # ---- mean pool BEFORE the out-projection (exact in eval) + classifier ---
    pooled = jnp.dot(pool_ref[...], a, preferred_element_type=jnp.float32)      # (B, E)
    att = jnp.dot(pooled, wo_ref[...], preferred_element_type=jnp.float32) + bo_ref[...]
    h1 = jnp.maximum(
        jnp.dot(att, w1_ref[...], preferred_element_type=jnp.float32) + b1_ref[...], 0.0)
    h2 = jnp.maximum(
        jnp.dot(h1, w2_ref[...], preferred_element_type=jnp.float32) + b2_ref[...], 0.0)
    out = jnp.dot(h2, w3_ref[...], preferred_element_type=jnp.float32) + b3_ref[...]
    o_ref[...] = out.astype(o_ref.dtype)


def _zero_index_map(ndim):
    return lambda i: (0,) * ndim


def forward(x, params, *, hidden_dim, num_heads):
    B, S, F = x.shape
    H = hidden_dim
    T = S * B

    # Wrapper-side layout plumbing: time-major + time-reversed copy so one GEMM
    # covers both directions' input projections.
    x_tm = jnp.transpose(x, (1, 0, 2))                        # (S, B, F)
    x_cat = jnp.concatenate([x_tm, x_tm[::-1]], axis=-1)      # (S, B, 2F)
    x_cat = x_cat.reshape(T, 2 * F).astype(jnp.float32)

    # Shape-only constants: same-sequence additive mask and mean-pool matrix.
    tok_b = jnp.arange(T, dtype=jnp.int32) % B
    attn_mask = jnp.where(tok_b[:, None] == tok_b[None, :], 0.0, -1e30).astype(jnp.float32)
    pool = (jnp.arange(B, dtype=jnp.int32)[:, None] == tok_b[None, :]).astype(jnp.float32) / S

    args = [x_cat]
    for lp in params["layers"]:
        args += [lp["V"], lp["b"], lp["whh"]]
    args += [attn_mask, pool,
             params["wq"], params["bq"], params["wk"], params["bk"],
             params["wv"], params["bv"], params["wo"], params["bo"],
             params["w1"], params["b1"], params["w2"], params["b2"],
             params["w3"], params["b3"]]

    kernel = functools.partial(
        _fused_kernel, num_layers=len(params["layers"]), seq_len=S, batch=B,
        hidden=H, num_heads=num_heads)

    return pl.pallas_call(
        kernel,
        out_shape=jax.ShapeDtypeStruct((B, 1), jnp.float32),
        grid=(1,),
        in_specs=[pl.BlockSpec(a.shape, _zero_index_map(a.ndim)) for a in args],
        out_specs=pl.BlockSpec((B, 1), lambda i: (0, 0)),
        compiler_params=pltpu.CompilerParams(dimension_semantics=("arbitrary",)),
        cost_estimate=pl.CostEstimate(flops=3_000_000, transcendentals=16_000,
                                      bytes_accessed=500_000),
    )(*args)


# ---------------------------------------------------------------------------
# Parameters: synthetic PyTorch-style params, then BN folding / gate packing
# ---------------------------------------------------------------------------

def make_raw_params(key, input_dim, hidden_dim, num_layers):
    """Synthetic parameters in PyTorch-equivalent layout (weights pre-transposed
    to (in, out); LSTM gate order [i, f, g, o]; BN stored as (gamma, beta, mean, var))."""
    E = 2 * hidden_dim
    keys = iter(jax.random.split(key, 64))

    def w(shape, s=0.1):
        return jax.random.normal(next(keys), shape, jnp.float32) * s

    def bn(c):
        gamma = 1.0 + 0.1 * jax.random.normal(next(keys), (c,), jnp.float32)
        beta = 0.1 * jax.random.normal(next(keys), (c,), jnp.float32)
        mean = 0.1 * jax.random.normal(next(keys), (c,), jnp.float32)
        var = 0.5 + jnp.abs(jax.random.normal(next(keys), (c,), jnp.float32))
        return gamma, beta, mean, var

    p = {"bn_in": bn(input_dim), "bn_lstm": bn(E), "bn_attn": bn(E),
         "bn1": bn(hidden_dim), "bn2": bn(32)}
    lstm = []
    for layer in range(num_layers):
        in_sz = input_dim if layer == 0 else E
        dirs = []
        for _ in range(2):                          # forward, backward
            dirs.append((w((in_sz, 4 * hidden_dim)),        # Wih^T
                         w((hidden_dim, 4 * hidden_dim)),   # Whh^T
                         w((4 * hidden_dim,), 0.05)))       # b_ih + b_hh
        lstm.append(dirs)
    p["lstm"] = lstm
    p["mha_in_wt"] = w((E, 3 * E)); p["mha_in_b"] = w((3 * E,), 0.05)
    p["mha_out_wt"] = w((E, E));    p["mha_out_b"] = w((E,), 0.05)
    p["w1"] = w((E, hidden_dim));   p["b1"] = w((hidden_dim,), 0.05)
    p["w2"] = w((hidden_dim, 32));  p["b2"] = w((32,), 0.05)
    p["w3"] = w((32, 1));           p["b3"] = w((1,), 0.05)
    return p


def _bn_scale_shift(bn, eps=1e-5):
    gamma, beta, mean, var = bn
    scale = gamma / jnp.sqrt(var + eps)
    return scale, beta - mean * scale


def fold_params(raw, hidden_dim):
    """Fold all eval-mode BatchNorms into adjacent weights and repack the LSTM
    into the fused-direction layout used by the kernel:
      gate columns (8H): [i_f,i_b | f_f,f_b | o_f,o_b | g_f,g_b]
      recurrent weight (2H,8H) acts on the combined state [h_f | h_b]."""
    H = hidden_dim
    E = 2 * H

    def place_w(w, d):           # w: (in, 4H), torch gate order [i, f, g, o]
        z = jnp.zeros_like(w[:, 0:H])
        gi, gf, gg, go = w[:, 0:H], w[:, H:2 * H], w[:, 2 * H:3 * H], w[:, 3 * H:4 * H]
        blocks = [gi, z, gf, z, go, z, gg, z] if d == 0 else [z, gi, z, gf, z, go, z, gg]
        return jnp.concatenate(blocks, axis=1)                # (in, 8H)

    def place_b(b, d):           # b: (4H,)
        z = jnp.zeros((H,), jnp.float32)
        gi, gf, gg, go = b[0:H], b[H:2 * H], b[2 * H:3 * H], b[3 * H:4 * H]
        blocks = [gi, z, gf, z, go, z, gg, z] if d == 0 else [z, gi, z, gf, z, go, z, gg]
        return jnp.concatenate(blocks)                        # (8H,)

    p = {}
    in_scale, in_shift = _bn_scale_shift(raw["bn_in"])

    layers = []
    for li, dirs in enumerate(raw["lstm"]):
        (wf, whf, bf), (wb, whb, bb) = dirs
        if li == 0:                                           # fold the input BatchNorm
            bf = bf + in_shift @ wf
            wf = in_scale[:, None] * wf
            bb = bb + in_shift @ wb
            wb = in_scale[:, None] * wb
        wfz = place_w(wf, 0)                                  # (in, 8H)
        wbz = place_w(wb, 1)
        if li == 0:
            # kernel input rows: [x(t) | x(S-1-t)]
            V = jnp.concatenate([wfz, wbz], axis=0)                       # (2*in, 8H)
        else:
            # kernel input rows: [h_f(t), h_b(S-1-t), h_f(S-1-t), h_b(t)]
            V = jnp.concatenate([wfz[0:H], wbz[H:2 * H],
                                 wbz[0:H], wfz[H:2 * H]], axis=0)         # (4H, 8H)
        layers.append({
            "V": V,
            "b": (place_b(bf, 0) + place_b(bb, 1)).reshape(1, 8 * H),
            "whh": jnp.concatenate([place_w(whf, 0), place_w(whb, 1)], axis=0),  # (2H, 8H)
        })
    p["layers"] = layers

    # MHA in-projection: fold BN_lstm, split into q/k/v, and "lift" onto the
    # last layer's [h_f(t), h_b(S-1-t), h_f(S-1-t), h_b(t)] row layout.
    ls, lsh = _bn_scale_shift(raw["bn_lstm"])

    def lift(w):                                              # (E, E) -> (2E, E)
        return jnp.concatenate([w[0:H], jnp.zeros((2 * H, E), jnp.float32), w[H:2 * H]],
                               axis=0)

    for name, sl in (("q", slice(0, E)), ("k", slice(E, 2 * E)), ("v", slice(2 * E, 3 * E))):
        w = raw["mha_in_wt"][:, sl]                           # (E, E)
        b = raw["mha_in_b"][sl]
        p["w" + name] = lift(ls[:, None] * w)
        p["b" + name] = (b + lsh @ w).reshape(1, E)

    asc, ash = _bn_scale_shift(raw["bn_attn"])                # fold BN_attn into out-proj
    p["wo"] = raw["mha_out_wt"] * asc[None, :]
    p["bo"] = (raw["mha_out_b"] * asc + ash).reshape(1, E)

    s1, sh1 = _bn_scale_shift(raw["bn1"])                     # classifier BNs
    p["w1"] = raw["w1"] * s1[None, :]
    p["b1"] = (raw["b1"] * s1 + sh1).reshape(1, H)
    s2, sh2 = _bn_scale_shift(raw["bn2"])
    p["w2"] = raw["w2"] * s2[None, :]
    p["b2"] = (raw["b2"] * s2 + sh2).reshape(1, 32)
    p["w3"] = raw["w3"]
    p["b3"] = raw["b3"].reshape(1, 1)
    return p


# ---------------------------------------------------------------------------
# Pure-JAX reference (from the raw, unfolded PyTorch-style params)
# ---------------------------------------------------------------------------

def forward_reference(x, raw, *, hidden_dim, num_heads, eps=1e-5):
    B, S, F = x.shape
    H = hidden_dim
    E = 2 * H

    def bn(t, prm):
        gamma, beta, mean, var = prm
        return (t - mean) / jnp.sqrt(var + eps) * gamma + beta

    h = bn(x.reshape(B * S, F), raw["bn_in"]).reshape(B, S, F)

    for dirs in raw["lstm"]:
        outs = []
        for d, (wih_t, whh_t, bias) in enumerate(dirs):
            xin = h if d == 0 else jnp.flip(h, axis=1)
            hh = jnp.zeros((B, H), jnp.float32)
            cc = jnp.zeros((B, H), jnp.float32)
            hs = []
            for t in range(S):
                g = xin[:, t, :] @ wih_t + bias + hh @ whh_t
                i = jax.nn.sigmoid(g[:, 0:H]);     f = jax.nn.sigmoid(g[:, H:2 * H])
                gg = jnp.tanh(g[:, 2 * H:3 * H]);  o = jax.nn.sigmoid(g[:, 3 * H:4 * H])
                cc = f * cc + i * gg
                hh = o * jnp.tanh(cc)
                hs.append(hh)
            out = jnp.stack(hs, axis=1)
            if d == 1:
                out = jnp.flip(out, axis=1)
            outs.append(out)
        h = jnp.concatenate(outs, axis=-1)

    z = bn(h.reshape(B * S, E), raw["bn_lstm"])
    qkv = z @ raw["mha_in_wt"] + raw["mha_in_b"]
    q, k, v = qkv[:, :E], qkv[:, E:2 * E], qkv[:, 2 * E:]
    dh = E // num_heads

    def heads(t):
        return t.reshape(B, S, num_heads, dh).transpose(0, 2, 1, 3)

    s = jnp.einsum("bhqd,bhkd->bhqk", heads(q), heads(k)) / jnp.sqrt(float(dh))
    a = jnp.einsum("bhqk,bhkd->bhqd", jax.nn.softmax(s, axis=-1), heads(v))
    a = a.transpose(0, 2, 1, 3).reshape(B * S, E)
    ao = bn(a @ raw["mha_out_wt"] + raw["mha_out_b"], raw["bn_attn"]).reshape(B, S, E)

    pooled = jnp.mean(ao, axis=1)
    h1 = jax.nn.relu(bn(pooled @ raw["w1"] + raw["b1"], raw["bn1"]))
    h2 = jax.nn.relu(bn(h1 @ raw["w2"] + raw["b2"], raw["bn2"]))
    return h2 @ raw["w3"] + raw["b3"]


# ---------------------------------------------------------------------------
# Main
# ---------------------------------------------------------------------------

if __name__ == "__main__":
    batch, seq_len, input_dim = 2, 8, 16
    hidden_dim, num_layers, num_heads = 32, 2, 8

    key = jax.random.PRNGKey(0)
    k_x, k_p = jax.random.split(key)
    x = jax.random.normal(k_x, (batch, seq_len, input_dim), jnp.float32)

    raw = make_raw_params(k_p, input_dim, hidden_dim, num_layers)
    params = fold_params(raw, hidden_dim)

    fwd = jax.jit(functools.partial(forward, hidden_dim=hidden_dim,
                                    num_heads=num_heads))
    out = fwd(x, params)
    jax.block_until_ready(out)
    assert out.shape == (batch, 1), out.shape

    ref = forward_reference(x, raw, hidden_dim=hidden_dim, num_heads=num_heads)
    err = float(jnp.max(jnp.abs(out - ref)))
    assert err < 2e-3, f"max abs err vs reference: {err}"
    print("KERNEL_OK")
</pallas_src>

<mosaic_0001>
module attributes {stable_mosaic.version = 11 : i64} {
  func.func @_fused_kernel(%arg0: i32, %arg1: memref<16x32xf32, #tpu.memory_space<vmem>>, %arg2: memref<32x256xf32, #tpu.memory_space<vmem>>, %arg3: memref<1x256xf32, #tpu.memory_space<vmem>>, %arg4: memref<64x256xf32, #tpu.memory_space<vmem>>, %arg5: memref<128x256xf32, #tpu.memory_space<vmem>>, %arg6: memref<1x256xf32, #tpu.memory_space<vmem>>, %arg7: memref<64x256xf32, #tpu.memory_space<vmem>>, %arg8: memref<16x16xf32, #tpu.memory_space<vmem>>, %arg9: memref<2x16xf32, #tpu.memory_space<vmem>>, %arg10: memref<128x64xf32, #tpu.memory_space<vmem>>, %arg11: memref<1x64xf32, #tpu.memory_space<vmem>>, %arg12: memref<128x64xf32, #tpu.memory_space<vmem>>, %arg13: memref<1x64xf32, #tpu.memory_space<vmem>>, %arg14: memref<128x64xf32, #tpu.memory_space<vmem>>, %arg15: memref<1x64xf32, #tpu.memory_space<vmem>>, %arg16: memref<64x64xf32, #tpu.memory_space<vmem>>, %arg17: memref<1x64xf32, #tpu.memory_space<vmem>>, %arg18: memref<64x32xf32, #tpu.memory_space<vmem>>, %arg19: memref<1x32xf32, #tpu.memory_space<vmem>>, %arg20: memref<32x32xf32, #tpu.memory_space<vmem>>, %arg21: memref<1x32xf32, #tpu.memory_space<vmem>>, %arg22: memref<32x1xf32, #tpu.memory_space<vmem>>, %arg23: memref<1x1xf32, #tpu.memory_space<vmem>>, %arg24: memref<2x1xf32, #tpu.memory_space<vmem>>) attributes {dimension_semantics = [#tpu.dimension_semantics<arbitrary>], iteration_bounds = array<i64: 1>, scalar_prefetch = 0 : i64, scratch_operands = 0 : i64, tpu.core_type = #tpu.core_type<tc>, window_params = [{pipeline_mode = #tpu.pipeline_mode<synchronous>, transform_indices = @transform_0, window_bounds = array<i64: 16, 32>}, {pipeline_mode = #tpu.pipeline_mode<synchronous>, transform_indices = @transform_1, window_bounds = array<i64: 32, 256>}, {pipeline_mode = #tpu.pipeline_mode<synchronous>, transform_indices = @transform_2, window_bounds = array<i64: 1, 256>}, {pipeline_mode = #tpu.pipeline_mode<synchronous>, transform_indices = @transform_3, window_bounds = array<i64: 64, 256>}, {pipeline_mode = #tpu.pipeline_mode<synchronous>, transform_indices = @transform_4, window_bounds = array<i64: 128, 256>}, {pipeline_mode = #tpu.pipeline_mode<synchronous>, transform_indices = @transform_5, window_bounds = array<i64: 1, 256>}, {pipeline_mode = #tpu.pipeline_mode<synchronous>, transform_indices = @transform_6, window_bounds = array<i64: 64, 256>}, {pipeline_mode = #tpu.pipeline_mode<synchronous>, transform_indices = @transform_7, window_bounds = array<i64: 16, 16>}, {pipeline_mode = #tpu.pipeline_mode<synchronous>, transform_indices = @transform_8, window_bounds = array<i64: 2, 16>}, {pipeline_mode = #tpu.pipeline_mode<synchronous>, transform_indices = @transform_9, window_bounds = array<i64: 128, 64>}, {pipeline_mode = #tpu.pipeline_mode<synchronous>, transform_indices = @transform_10, window_bounds = array<i64: 1, 64>}, {pipeline_mode = #tpu.pipeline_mode<synchronous>, transform_indices = @transform_11, window_bounds = array<i64: 128, 64>}, {pipeline_mode = #tpu.pipeline_mode<synchronous>, transform_indices = @transform_12, window_bounds = array<i64: 1, 64>}, {pipeline_mode = #tpu.pipeline_mode<synchronous>, transform_indices = @transform_13, window_bounds = array<i64: 128, 64>}, {pipeline_mode = #tpu.pipeline_mode<synchronous>, transform_indices = @transform_14, window_bounds = array<i64: 1, 64>}, {pipeline_mode = #tpu.pipeline_mode<synchronous>, transform_indices = @transform_15, window_bounds = array<i64: 64, 64>}, {pipeline_mode = #tpu.pipeline_mode<synchronous>, transform_indices = @transform_16, window_bounds = array<i64: 1, 64>}, {pipeline_mode = #tpu.pipeline_mode<synchronous>, transform_indices = @transform_17, window_bounds = array<i64: 64, 32>}, {pipeline_mode = #tpu.pipeline_mode<synchronous>, transform_indices = @transform_18, window_bounds = array<i64: 1, 32>}, {pipeline_mode = #tpu.pipeline_mode<synchronous>, transform_indices = @transform_19, window_bounds = array<i64: 32, 32>}, {pipeline_mode = #tpu.pipeline_mode<synchronous>, transform_indices = @transform_20, window_bounds = array<i64: 1, 32>}, {pipeline_mode = #tpu.pipeline_mode<synchronous>, transform_indices = @transform_21, window_bounds = array<i64: 32, 1>}, {pipeline_mode = #tpu.pipeline_mode<synchronous>, transform_indices = @transform_22, window_bounds = array<i64: 1, 1>}, {pipeline_mode = #tpu.pipeline_mode<synchronous>, transform_indices = @transform_23, window_bounds = array<i64: 2, 1>}]} {
    %c0 = arith.constant 0 : index
    %c0_0 = arith.constant 0 : index
    %0 = vector.load %arg1[%c0, %c0_0] : memref<16x32xf32, #tpu.memory_space<vmem>>, vector<16x32xf32>
    %c0_1 = arith.constant 0 : index
    %c0_2 = arith.constant 0 : index
    %1 = vector.load %arg2[%c0_1, %c0_2] : memref<32x256xf32, #tpu.memory_space<vmem>>, vector<32x256xf32>
    %cst = arith.constant dense<0.000000e+00> : vector<16x256xf32>
    %2 = tpu.matmul %0, %1, %cst {dimension_numbers = #tpu.dot_dimension_numbers<[1], [0], [0], [1], [0, 0, 1, 1], [], []>} : vector<16x32xf32>, vector<32x256xf32>, vector<16x256xf32> -> vector<16x256xf32>
    %c0_3 = arith.constant 0 : index
    %c0_4 = arith.constant 0 : index
    %3 = vector.load %arg3[%c0_3, %c0_4] : memref<1x256xf32, #tpu.memory_space<vmem>>, vector<1x256xf32>
    %4 = vector.broadcast %3 : vector<1x256xf32> to vector<16x256xf32>
    %5 = arith.addf %2, %4 : vector<16x256xf32>
    %c0_5 = arith.constant 0 : index
    %c0_6 = arith.constant 0 : index
    %6 = vector.load %arg4[%c0_5, %c0_6] : memref<64x256xf32, #tpu.memory_space<vmem>>, vector<64x256xf32>
    %7 = vector.extract_strided_slice %5 {offsets = [0, 0], sizes = [2, 256], strides = [1, 1]} : vector<16x256xf32> to vector<2x256xf32>
    %8 = vector.extract_strided_slice %7 {offsets = [0, 0], sizes = [2, 192], strides = [1, 1]} : vector<2x256xf32> to vector<2x192xf32>
    %9 = arith.negf %8 : vector<2x192xf32>
    %10 = math.exp %9 : vector<2x192xf32>
    %cst_7 = arith.constant 1.000000e+00 : f32
    %11 = vector.broadcast %cst_7 : f32 to vector<2x192xf32>
    %12 = arith.addf %11, %10 : vector<2x192xf32>
    %13 = arith.divf %11, %12 : vector<2x192xf32>
    %14 = vector.extract_strided_slice %7 {offsets = [0, 192], sizes = [2, 64], strides = [1, 1]} : vector<2x256xf32> to vector<2x64xf32>
    %15 = math.tanh %14 : vector<2x64xf32>
    %16 = vector.extract_strided_slice %13 {offsets = [0, 0], sizes = [2, 64], strides = [1, 1]} : vector<2x192xf32> to vector<2x64xf32>
    %17 = vector.extract_strided_slice %13 {offsets = [0, 128], sizes = [2, 64], strides = [1, 1]} : vector<2x192xf32> to vector<2x64xf32>
    %18 = arith.mulf %16, %15 : vector<2x64xf32>
    %19 = math.tanh %18 : vector<2x64xf32>
    %20 = arith.mulf %17, %19 : vector<2x64xf32>
    %21 = vector.extract_strided_slice %5 {offsets = [2, 0], sizes = [2, 256], strides = [1, 1]} : vector<16x256xf32> to vector<2x256xf32>
    %cst_8 = arith.constant dense<0.000000e+00> : vector<2x256xf32>
    %22 = tpu.matmul %20, %6, %cst_8 {dimension_numbers = #tpu.dot_dimension_numbers<[1], [0], [0], [1], [0, 0, 1, 1], [], []>} : vector<2x64xf32>, vector<64x256xf32>, vector<2x256xf32> -> vector<2x256xf32>
    %23 = arith.addf %21, %22 : vector<2x256xf32>
    %24 = vector.extract_strided_slice %23 {offsets = [0, 0], sizes = [2, 192], strides = [1, 1]} : vector<2x256xf32> to vector<2x192xf32>
    %25 = arith.negf %24 : vector<2x192xf32>
    %26 = math.exp %25 : vector<2x192xf32>
    %cst_9 = arith.constant 1.000000e+00 : f32
    %27 = vector.broadcast %cst_9 : f32 to vector<2x192xf32>
    %28 = arith.addf %27, %26 : vector<2x192xf32>
    %29 = arith.divf %27, %28 : vector<2x192xf32>
    %30 = vector.extract_strided_slice %23 {offsets = [0, 192], sizes = [2, 64], strides = [1, 1]} : vector<2x256xf32> to vector<2x64xf32>
    %31 = math.tanh %30 : vector<2x64xf32>
    %32 = vector.extract_strided_slice %29 {offsets = [0, 0], sizes = [2, 64], strides = [1, 1]} : vector<2x192xf32> to vector<2x64xf32>
    %33 = vector.extract_strided_slice %29 {offsets = [0, 64], sizes = [2, 64], strides = [1, 1]} : vector<2x192xf32> to vector<2x64xf32>
    %34 = vector.extract_strided_slice %29 {offsets = [0, 128], sizes = [2, 64], strides = [1, 1]} : vector<2x192xf32> to vector<2x64xf32>
    %35 = arith.mulf %33, %18 : vector<2x64xf32>
    %36 = arith.mulf %32, %31 : vector<2x64xf32>
    %37 = arith.addf %35, %36 : vector<2x64xf32>
    %38 = math.tanh %37 : vector<2x64xf32>
    %39 = arith.mulf %34, %38 : vector<2x64xf32>
    %40 = vector.extract_strided_slice %5 {offsets = [4, 0], sizes = [2, 256], strides = [1, 1]} : vector<16x256xf32> to vector<2x256xf32>
    %cst_10 = arith.constant dense<0.000000e+00> : vector<2x256xf32>
    %41 = tpu.matmul %39, %6, %cst_10 {dimension_numbers = #tpu.dot_dimension_numbers<[1], [0], [0], [1], [0, 0, 1, 1], [], []>} : vector<2x64xf32>, vector<64x256xf32>, vector<2x256xf32> -> vector<2x256xf32>
    %42 = arith.addf %40, %41 : vector<2x256xf32>
    %43 = vector.extract_strided_slice %42 {offsets = [0, 0], sizes = [2, 192], strides = [1, 1]} : vector<2x256xf32> to vector<2x192xf32>
    %44 = arith.negf %43 : vector<2x192xf32>
    %45 = math.exp %44 : vector<2x192xf32>
    %cst_11 = arith.constant 1.000000e+00 : f32
    %46 = vector.broadcast %cst_11 : f32 to vector<2x192xf32>
    %47 = arith.addf %46, %45 : vector<2x192xf32>
    %48 = arith.divf %46, %47 : vector<2x192xf32>
    %49 = vector.extract_strided_slice %42 {offsets = [0, 192], sizes = [2, 64], strides = [1, 1]} : vector<2x256xf32> to vector<2x64xf32>
    %50 = math.tanh %49 : vector<2x64xf32>
    %51 = vector.extract_strided_slice %48 {offsets = [0, 0], sizes = [2, 64], strides = [1, 1]} : vector<2x192xf32> to vector<2x64xf32>
    %52 = vector.extract_strided_slice %48 {offsets = [0, 64], sizes = [2, 64], strides = [1, 1]} : vector<2x192xf32> to vector<2x64xf32>
    %53 = vector.extract_strided_slice %48 {offsets = [0, 128], sizes = [2, 64], strides = [1, 1]} : vector<2x192xf32> to vector<2x64xf32>
    %54 = arith.mulf %52, %37 : vector<2x64xf32>
    %55 = arith.mulf %51, %50 : vector<2x64xf32>
    %56 = arith.addf %54, %55 : vector<2x64xf32>
    %57 = math.tanh %56 : vector<2x64xf32>
    %58 = arith.mulf %53, %57 : vector<2x64xf32>
    %59 = vector.extract_strided_slice %5 {offsets = [6, 0], sizes = [2, 256], strides = [1, 1]} : vector<16x256xf32> to vector<2x256xf32>
    %cst_12 = arith.constant dense<0.000000e+00> : vector<2x256xf32>
    %60 = tpu.matmul %58, %6, %cst_12 {dimension_numbers = #tpu.dot_dimension_numbers<[1], [0], [0], [1], [0, 0, 1, 1], [], []>} : vector<2x64xf32>, vector<64x256xf32>, vector<2x256xf32> -> vector<2x256xf32>
    %61 = arith.addf %59, %60 : vector<2x256xf32>
    %62 = vector.extract_strided_slice %61 {offsets = [0, 0], sizes = [2, 192], strides = [1, 1]} : vector<2x256xf32> to vector<2x192xf32>
    %63 = arith.negf %62 : vector<2x192xf32>
    %64 = math.exp %63 : vector<2x192xf32>
    %cst_13 = arith.constant 1.000000e+00 : f32
    %65 = vector.broadcast %cst_13 : f32 to vector<2x192xf32>
    %66 = arith.addf %65, %64 : vector<2x192xf32>
    %67 = arith.divf %65, %66 : vector<2x192xf32>
    %68 = vector.extract_strided_slice %61 {offsets = [0, 192], sizes = [2, 64], strides = [1, 1]} : vector<2x256xf32> to vector<2x64xf32>
    %69 = math.tanh %68 : vector<2x64xf32>
    %70 = vector.extract_strided_slice %67 {offsets = [0, 0], sizes = [2, 64], strides = [1, 1]} : vector<2x192xf32> to vector<2x64xf32>
    %71 = vector.extract_strided_slice %67 {offsets = [0, 64], sizes = [2, 64], strides = [1, 1]} : vector<2x192xf32> to vector<2x64xf32>
    %72 = vector.extract_strided_slice %67 {offsets = [0, 128], sizes = [2, 64], strides = [1, 1]} : vector<2x192xf32> to vector<2x64xf32>
    %73 = arith.mulf %71, %56 : vector<2x64xf32>
    %74 = arith.mulf %70, %69 : vector<2x64xf32>
    %75 = arith.addf %73, %74 : vector<2x64xf32>
    %76 = math.tanh %75 : vector<2x64xf32>
    %77 = arith.mulf %72, %76 : vector<2x64xf32>
    %78 = vector.extract_strided_slice %5 {offsets = [8, 0], sizes = [2, 256], strides = [1, 1]} : vector<16x256xf32> to vector<2x256xf32>
    %cst_14 = arith.constant dense<0.000000e+00> : vector<2x256xf32>
    %79 = tpu.matmul %77, %6, %cst_14 {dimension_numbers = #tpu.dot_dimension_numbers<[1], [0], [0], [1], [0, 0, 1, 1], [], []>} : vector<2x64xf32>, vector<64x256xf32>, vector<2x256xf32> -> vector<2x256xf32>
    %80 = arith.addf %78, %79 : vector<2x256xf32>
    %81 = vector.extract_strided_slice %80 {offsets = [0, 0], sizes = [2, 192], strides = [1, 1]} : vector<2x256xf32> to vector<2x192xf32>
    %82 = arith.negf %81 : vector<2x192xf32>
    %83 = math.exp %82 : vector<2x192xf32>
    %cst_15 = arith.constant 1.000000e+00 : f32
    %84 = vector.broadcast %cst_15 : f32 to vector<2x192xf32>
    %85 = arith.addf %84, %83 : vector<2x192xf32>
    %86 = arith.divf %84, %85 : vector<2x192xf32>
    %87 = vector.extract_strided_slice %80 {offsets = [0, 192], sizes = [2, 64], strides = [1, 1]} : vector<2x256xf32> to vector<2x64xf32>
    %88 = math.tanh %87 : vector<2x64xf32>
    %89 = vector.extract_strided_slice %86 {offsets = [0, 0], sizes = [2, 64], strides = [1, 1]} : vector<2x192xf32> to vector<2x64xf32>
    %90 = vector.extract_strided_slice %86 {offsets = [0, 64], sizes = [2, 64], strides = [1, 1]} : vector<2x192xf32> to vector<2x64xf32>
    %91 = vector.extract_strided_slice %86 {offsets = [0, 128], sizes = [2, 64], strides = [1, 1]} : vector<2x192xf32> to vector<2x64xf32>
    %92 = arith.mulf %90, %75 : vector<2x64xf32>
    %93 = arith.mulf %89, %88 : vector<2x64xf32>
    %94 = arith.addf %92, %93 : vector<2x64xf32>
    %95 = math.tanh %94 : vector<2x64xf32>
    %96 = arith.mulf %91, %95 : vector<2x64xf32>
    %97 = vector.extract_strided_slice %5 {offsets = [10, 0], sizes = [2, 256], strides = [1, 1]} : vector<16x256xf32> to vector<2x256xf32>
    %cst_16 = arith.constant dense<0.000000e+00> : vector<2x256xf32>
    %98 = tpu.matmul %96, %6, %cst_16 {dimension_numbers = #tpu.dot_dimension_numbers<[1], [0], [0], [1], [0, 0, 1, 1], [], []>} : vector<2x64xf32>, vector<64x256xf32>, vector<2x256xf32> -> vector<2x256xf32>
    %99 = arith.addf %97, %98 : vector<2x256xf32>
    %100 = vector.extract_strided_slice %99 {offsets = [0, 0], sizes = [2, 192], strides = [1, 1]} : vector<2x256xf32> to vector<2x192xf32>
    %101 = arith.negf %100 : vector<2x192xf32>
    %102 = math.exp %101 : vector<2x192xf32>
    %cst_17 = arith.constant 1.000000e+00 : f32
    %103 = vector.broadcast %cst_17 : f32 to vector<2x192xf32>
    %104 = arith.addf %103, %102 : vector<2x192xf32>
    %105 = arith.divf %103, %104 : vector<2x192xf32>
    %106 = vector.extract_strided_slice %99 {offsets = [0, 192], sizes = [2, 64], strides = [1, 1]} : vector<2x256xf32> to vector<2x64xf32>
    %107 = math.tanh %106 : vector<2x64xf32>
    %108 = vector.extract_strided_slice %105 {offsets = [0, 0], sizes = [2, 64], strides = [1, 1]} : vector<2x192xf32> to vector<2x64xf32>
    %109 = vector.extract_strided_slice %105 {offsets = [0, 64], sizes = [2, 64], strides = [1, 1]} : vector<2x192xf32> to vector<2x64xf32>
    %110 = vector.extract_strided_slice %105 {offsets = [0, 128], sizes = [2, 64], strides = [1, 1]} : vector<2x192xf32> to vector<2x64xf32>
    %111 = arith.mulf %109, %94 : vector<2x64xf32>
    %112 = arith.mulf %108, %107 : vector<2x64xf32>
    %113 = arith.addf %111, %112 : vector<2x64xf32>
    %114 = math.tanh %113 : vector<2x64xf32>
    %115 = arith.mulf %110, %114 : vector<2x64xf32>
    %116 = vector.extract_strided_slice %5 {offsets = [12, 0], sizes = [2, 256], strides = [1, 1]} : vector<16x256xf32> to vector<2x256xf32>
    %cst_18 = arith.constant dense<0.000000e+00> : vector<2x256xf32>
    %117 = tpu.matmul %115, %6, %cst_18 {dimension_numbers = #tpu.dot_dimension_numbers<[1], [0], [0], [1], [0, 0, 1, 1], [], []>} : vector<2x64xf32>, vector<64x256xf32>, vector<2x256xf32> -> vector<2x256xf32>
    %118 = arith.addf %116, %117 : vector<2x256xf32>
    %119 = vector.extract_strided_slice %118 {offsets = [0, 0], sizes = [2, 192], strides = [1, 1]} : vector<2x256xf32> to vector<2x192xf32>
    %120 = arith.negf %119 : vector<2x192xf32>
    %121 = math.exp %120 : vector<2x192xf32>
    %cst_19 = arith.constant 1.000000e+00 : f32
    %122 = vector.broadcast %cst_19 : f32 to vector<2x192xf32>
    %123 = arith.addf %122, %121 : vector<2x192xf32>
    %124 = arith.divf %122, %123 : vector<2x192xf32>
    %125 = vector.extract_strided_slice %118 {offsets = [0, 192], sizes = [2, 64], strides = [1, 1]} : vector<2x256xf32> to vector<2x64xf32>
    %126 = math.tanh %125 : vector<2x64xf32>
    %127 = vector.extract_strided_slice %124 {offsets = [0, 0], sizes = [2, 64], strides = [1, 1]} : vector<2x192xf32> to vector<2x64xf32>
    %128 = vector.extract_strided_slice %124 {offsets = [0, 64], sizes = [2, 64], strides = [1, 1]} : vector<2x192xf32> to vector<2x64xf32>
    %129 = vector.extract_strided_slice %124 {offsets = [0, 128], sizes = [2, 64], strides = [1, 1]} : vector<2x192xf32> to vector<2x64xf32>
    %130 = arith.mulf %128, %113 : vector<2x64xf32>
    %131 = arith.mulf %127, %126 : vector<2x64xf32>
    %132 = arith.addf %130, %131 : vector<2x64xf32>
    %133 = math.tanh %132 : vector<2x64xf32>
    %134 = arith.mulf %129, %133 : vector<2x64xf32>
    %135 = vector.extract_strided_slice %5 {offsets = [14, 0], sizes = [2, 256], strides = [1, 1]} : vector<16x256xf32> to vector<2x256xf32>
    %cst_20 = arith.constant dense<0.000000e+00> : vector<2x256xf32>
    %136 = tpu.matmul %134, %6, %cst_20 {dimension_numbers = #tpu.dot_dimension_numbers<[1], [0], [0], [1], [0, 0, 1, 1], [], []>} : vector<2x64xf32>, vector<64x256xf32>, vector<2x256xf32> -> vector<2x256xf32>
    %137 = arith.addf %135, %136 : vector<2x256xf32>
    %138 = vector.extract_strided_slice %137 {offsets = [0, 0], sizes = [2, 192], strides = [1, 1]} : vector<2x256xf32> to vector<2x192xf32>
    %139 = arith.negf %138 : vector<2x192xf32>
    %140 = math.exp %139 : vector<2x192xf32>
    %cst_21 = arith.constant 1.000000e+00 : f32
    %141 = vector.broadcast %cst_21 : f32 to vector<2x192xf32>
    %142 = arith.addf %141, %140 : vector<2x192xf32>
    %143 = arith.divf %141, %142 : vector<2x192xf32>
    %144 = vector.extract_strided_slice %137 {offsets = [0, 192], sizes = [2, 64], strides = [1, 1]} : vector<2x256xf32> to vector<2x64xf32>
    %145 = math.tanh %144 : vector<2x64xf32>
    %146 = vector.extract_strided_slice %143 {offsets = [0, 0], sizes = [2, 64], strides = [1, 1]} : vector<2x192xf32> to vector<2x64xf32>
    %147 = vector.extract_strided_slice %143 {offsets = [0, 64], sizes = [2, 64], strides = [1, 1]} : vector<2x192xf32> to vector<2x64xf32>
    %148 = vector.extract_strided_slice %143 {offsets = [0, 128], sizes = [2, 64], strides = [1, 1]} : vector<2x192xf32> to vector<2x64xf32>
    %149 = arith.mulf %147, %132 : vector<2x64xf32>
    %150 = arith.mulf %146, %145 : vector<2x64xf32>
    %151 = arith.addf %149, %150 : vector<2x64xf32>
    %152 = math.tanh %151 : vector<2x64xf32>
    %153 = arith.mulf %148, %152 : vector<2x64xf32>
    %154 = tpu.concatenate %20, %153 in 1 : vector<2x64xf32>, vector<2x64xf32> -> vector<2x128xf32>
    %155 = tpu.concatenate %39, %134 in 1 : vector<2x64xf32>, vector<2x64xf32> -> vector<2x128xf32>
    %156 = tpu.concatenate %58, %115 in 1 : vector<2x64xf32>, vector<2x64xf32> -> vector<2x128xf32>
    %157 = tpu.concatenate %77, %96 in 1 : vector<2x64xf32>, vector<2x64xf32> -> vector<2x128xf32>
    %158 = tpu.concatenate %96, %77 in 1 : vector<2x64xf32>, vector<2x64xf32> -> vector<2x128xf32>
    %159 = tpu.concatenate %115, %58 in 1 : vector<2x64xf32>, vector<2x64xf32> -> vector<2x128xf32>
    %160 = tpu.concatenate %134, %39 in 1 : vector<2x64xf32>, vector<2x64xf32> -> vector<2x128xf32>
    %161 = tpu.concatenate %153, %20 in 1 : vector<2x64xf32>, vector<2x64xf32> -> vector<2x128xf32>
    %162 = tpu.concatenate %154, %155, %156, %157, %158, %159, %160, %161 in 0 : vector<2x128xf32>, vector<2x128xf32>, vector<2x128xf32>, vector<2x128xf32>, vector<2x128xf32>, vector<2x128xf32>, vector<2x128xf32>, vector<2x128xf32> -> vector<16x128xf32>
    %c0_22 = arith.constant 0 : index
    %c0_23 = arith.constant 0 : index
    %163 = vector.load %arg5[%c0_22, %c0_23] : memref<128x256xf32, #tpu.memory_space<vmem>>, vector<128x256xf32>
    %cst_24 = arith.constant dense<0.000000e+00> : vector<16x256xf32>
    %164 = tpu.matmul %162, %163, %cst_24 {dimension_numbers = #tpu.dot_dimension_numbers<[1], [0], [0], [1], [0, 0, 1, 1], [], []>} : vector<16x128xf32>, vector<128x256xf32>, vector<16x256xf32> -> vector<16x256xf32>
    %c0_25 = arith.constant 0 : index
    %c0_26 = arith.constant 0 : index
    %165 = vector.load %arg6[%c0_25, %c0_26] : memref<1x256xf32, #tpu.memory_space<vmem>>, vector<1x256xf32>
    %166 = vector.broadcast %165 : vector<1x256xf32> to vector<16x256xf32>
    %167 = arith.addf %164, %166 : vector<16x256xf32>
    %c0_27 = arith.constant 0 : index
    %c0_28 = arith.constant 0 : index
    %168 = vector.load %arg7[%c0_27, %c0_28] : memref<64x256xf32, #tpu.memory_space<vmem>>, vector<64x256xf32>
    %169 = vector.extract_strided_slice %167 {offsets = [0, 0], sizes = [2, 256], strides = [1, 1]} : vector<16x256xf32> to vector<2x256xf32>
    %170 = vector.extract_strided_slice %169 {offsets = [0, 0], sizes = [2, 192], strides = [1, 1]} : vector<2x256xf32> to vector<2x192xf32>
    %171 = arith.negf %170 : vector<2x192xf32>
    %172 = math.exp %171 : vector<2x192xf32>
    %cst_29 = arith.constant 1.000000e+00 : f32
    %173 = vector.broadcast %cst_29 : f32 to vector<2x192xf32>
    %174 = arith.addf %173, %172 : vector<2x192xf32>
    %175 = arith.divf %173, %174 : vector<2x192xf32>
    %176 = vector.extract_strided_slice %169 {offsets = [0, 192], sizes = [2, 64], strides = [1, 1]} : vector<2x256xf32> to vector<2x64xf32>
    %177 = math.tanh %176 : vector<2x64xf32>
    %178 = vector.extract_strided_slice %175 {offsets = [0, 0], sizes = [2, 64], strides = [1, 1]} : vector<2x192xf32> to vector<2x64xf32>
    %179 = vector.extract_strided_slice %175 {offsets = [0, 128], sizes = [2, 64], strides = [1, 1]} : vector<2x192xf32> to vector<2x64xf32>
    %180 = arith.mulf %178, %177 : vector<2x64xf32>
    %181 = math.tanh %180 : vector<2x64xf32>
    %182 = arith.mulf %179, %181 : vector<2x64xf32>
    %183 = vector.extract_strided_slice %167 {offsets = [2, 0], sizes = [2, 256], strides = [1, 1]} : vector<16x256xf32> to vector<2x256xf32>
    %cst_30 = arith.constant dense<0.000000e+00> : vector<2x256xf32>
    %184 = tpu.matmul %182, %168, %cst_30 {dimension_numbers = #tpu.dot_dimension_numbers<[1], [0], [0], [1], [0, 0, 1, 1], [], []>} : vector<2x64xf32>, vector<64x256xf32>, vector<2x256xf32> -> vector<2x256xf32>
    %185 = arith.addf %183, %184 : vector<2x256xf32>
    %186 = vector.extract_strided_slice %185 {offsets = [0, 0], sizes = [2, 192], strides = [1, 1]} : vector<2x256xf32> to vector<2x192xf32>
    %187 = arith.negf %186 : vector<2x192xf32>
    %188 = math.exp %187 : vector<2x192xf32>
    %cst_31 = arith.constant 1.000000e+00 : f32
    %189 = vector.broadcast %cst_31 : f32 to vector<2x192xf32>
    %190 = arith.addf %189, %188 : vector<2x192xf32>
    %191 = arith.divf %189, %190 : vector<2x192xf32>
    %192 = vector.extract_strided_slice %185 {offsets = [0, 192], sizes = [2, 64], strides = [1, 1]} : vector<2x256xf32> to vector<2x64xf32>
    %193 = math.tanh %192 : vector<2x64xf32>
    %194 = vector.extract_strided_slice %191 {offsets = [0, 0], sizes = [2, 64], strides = [1, 1]} : vector<2x192xf32> to vector<2x64xf32>
    %195 = vector.extract_strided_slice %191 {offsets = [0, 64], sizes = [2, 64], strides = [1, 1]} : vector<2x192xf32> to vector<2x64xf32>
    %196 = vector.extract_strided_slice %191 {offsets = [0, 128], sizes = [2, 64], strides = [1, 1]} : vector<2x192xf32> to vector<2x64xf32>
    %197 = arith.mulf %195, %180 : vector<2x64xf32>
    %198 = arith.mulf %194, %193 : vector<2x64xf32>
    %199 = arith.addf %197, %198 : vector<2x64xf32>
    %200 = math.tanh %199 : vector<2x64xf32>
    %201 = arith.mulf %196, %200 : vector<2x64xf32>
    %202 = vector.extract_strided_slice %167 {offsets = [4, 0], sizes = [2, 256], strides = [1, 1]} : vector<16x256xf32> to vector<2x256xf32>
    %cst_32 = arith.constant dense<0.000000e+00> : vector<2x256xf32>
    %203 = tpu.matmul %201, %168, %cst_32 {dimension_numbers = #tpu.dot_dimension_numbers<[1], [0], [0], [1], [0, 0, 1, 1], [], []>} : vector<2x64xf32>, vector<64x256xf32>, vector<2x256xf32> -> vector<2x256xf32>
    %204 = arith.addf %202, %203 : vector<2x256xf32>
    %205 = vector.extract_strided_slice %204 {offsets = [0, 0], sizes = [2, 192], strides = [1, 1]} : vector<2x256xf32> to vector<2x192xf32>
    %206 = arith.negf %205 : vector<2x192xf32>
    %207 = math.exp %206 : vector<2x192xf32>
    %cst_33 = arith.constant 1.000000e+00 : f32
    %208 = vector.broadcast %cst_33 : f32 to vector<2x192xf32>
    %209 = arith.addf %208, %207 : vector<2x192xf32>
    %210 = arith.divf %208, %209 : vector<2x192xf32>
    %211 = vector.extract_strided_slice %204 {offsets = [0, 192], sizes = [2, 64], strides = [1, 1]} : vector<2x256xf32> to vector<2x64xf32>
    %212 = math.tanh %211 : vector<2x64xf32>
    %213 = vector.extract_strided_slice %210 {offsets = [0, 0], sizes = [2, 64], strides = [1, 1]} : vector<2x192xf32> to vector<2x64xf32>
    %214 = vector.extract_strided_slice %210 {offsets = [0, 64], sizes = [2, 64], strides = [1, 1]} : vector<2x192xf32> to vector<2x64xf32>
    %215 = vector.extract_strided_slice %210 {offsets = [0, 128], sizes = [2, 64], strides = [1, 1]} : vector<2x192xf32> to vector<2x64xf32>
    %216 = arith.mulf %214, %199 : vector<2x64xf32>
    %217 = arith.mulf %213, %212 : vector<2x64xf32>
    %218 = arith.addf %216, %217 : vector<2x64xf32>
    %219 = math.tanh %218 : vector<2x64xf32>
    %220 = arith.mulf %215, %219 : vector<2x64xf32>
    %221 = vector.extract_strided_slice %167 {offsets = [6, 0], sizes = [2, 256], strides = [1, 1]} : vector<16x256xf32> to vector<2x256xf32>
    %cst_34 = arith.constant dense<0.000000e+00> : vector<2x256xf32>
    %222 = tpu.matmul %220, %168, %cst_34 {dimension_numbers = #tpu.dot_dimension_numbers<[1], [0], [0], [1], [0, 0, 1, 1], [], []>} : vector<2x64xf32>, vector<64x256xf32>, vector<2x256xf32> -> vector<2x256xf32>
    %223 = arith.addf %221, %222 : vector<2x256xf32>
    %224 = vector.extract_strided_slice %223 {offsets = [0, 0], sizes = [2, 192], strides = [1, 1]} : vector<2x256xf32> to vector<2x192xf32>
    %225 = arith.negf %224 : vector<2x192xf32>
    %226 = math.exp %225 : vector<2x192xf32>
    %cst_35 = arith.constant 1.000000e+00 : f32
    %227 = vector.broadcast %cst_35 : f32 to vector<2x192xf32>
    %228 = arith.addf %227, %226 : vector<2x192xf32>
    %229 = arith.divf %227, %228 : vector<2x192xf32>
    %230 = vector.extract_strided_slice %223 {offsets = [0, 192], sizes = [2, 64], strides = [1, 1]} : vector<2x256xf32> to vector<2x64xf32>
    %231 = math.tanh %230 : vector<2x64xf32>
    %232 = vector.extract_strided_slice %229 {offsets = [0, 0], sizes = [2, 64], strides = [1, 1]} : vector<2x192xf32> to vector<2x64xf32>
    %233 = vector.extract_strided_slice %229 {offsets = [0, 64], sizes = [2, 64], strides = [1, 1]} : vector<2x192xf32> to vector<2x64xf32>
    %234 = vector.extract_strided_slice %229 {offsets = [0, 128], sizes = [2, 64], strides = [1, 1]} : vector<2x192xf32> to vector<2x64xf32>
    %235 = arith.mulf %233, %218 : vector<2x64xf32>
    %236 = arith.mulf %232, %231 : vector<2x64xf32>
    %237 = arith.addf %235, %236 : vector<2x64xf32>
    %238 = math.tanh %237 : vector<2x64xf32>
    %239 = arith.mulf %234, %238 : vector<2x64xf32>
    %240 = vector.extract_strided_slice %167 {offsets = [8, 0], sizes = [2, 256], strides = [1, 1]} : vector<16x256xf32> to vector<2x256xf32>
    %cst_36 = arith.constant dense<0.000000e+00> : vector<2x256xf32>
    %241 = tpu.matmul %239, %168, %cst_36 {dimension_numbers = #tpu.dot_dimension_numbers<[1], [0], [0], [1], [0, 0, 1, 1], [], []>} : vector<2x64xf32>, vector<64x256xf32>, vector<2x256xf32> -> vector<2x256xf32>
    %242 = arith.addf %240, %241 : vector<2x256xf32>
    %243 = vector.extract_strided_slice %242 {offsets = [0, 0], sizes = [2, 192], strides = [1, 1]} : vector<2x256xf32> to vector<2x192xf32>
    %244 = arith.negf %243 : vector<2x192xf32>
    %245 = math.exp %244 : vector<2x192xf32>
    %cst_37 = arith.constant 1.000000e+00 : f32
    %246 = vector.broadcast %cst_37 : f32 to vector<2x192xf32>
    %247 = arith.addf %246, %245 : vector<2x192xf32>
    %248 = arith.divf %246, %247 : vector<2x192xf32>
    %249 = vector.extract_strided_slice %242 {offsets = [0, 192], sizes = [2, 64], strides = [1, 1]} : vector<2x256xf32> to vector<2x64xf32>
    %250 = math.tanh %249 : vector<2x64xf32>
    %251 = vector.extract_strided_slice %248 {offsets = [0, 0], sizes = [2, 64], strides = [1, 1]} : vector<2x192xf32> to vector<2x64xf32>
    %252 = vector.extract_strided_slice %248 {offsets = [0, 64], sizes = [2, 64], strides = [1, 1]} : vector<2x192xf32> to vector<2x64xf32>
    %253 = vector.extract_strided_slice %248 {offsets = [0, 128], sizes = [2, 64], strides = [1, 1]} : vector<2x192xf32> to vector<2x64xf32>
    %254 = arith.mulf %252, %237 : vector<2x64xf32>
    %255 = arith.mulf %251, %250 : vector<2x64xf32>
    %256 = arith.addf %254, %255 : vector<2x64xf32>
    %257 = math.tanh %256 : vector<2x64xf32>
    %258 = arith.mulf %253, %257 : vector<2x64xf32>
    %259 = vector.extract_strided_slice %167 {offsets = [10, 0], sizes = [2, 256], strides = [1, 1]} : vector<16x256xf32> to vector<2x256xf32>
    %cst_38 = arith.constant dense<0.000000e+00> : vector<2x256xf32>
    %260 = tpu.matmul %258, %168, %cst_38 {dimension_numbers = #tpu.dot_dimension_numbers<[1], [0], [0], [1], [0, 0, 1, 1], [], []>} : vector<2x64xf32>, vector<64x256xf32>, vector<2x256xf32> -> vector<2x256xf32>
    %261 = arith.addf %259, %260 : vector<2x256xf32>
    %262 = vector.extract_strided_slice %261 {offsets = [0, 0], sizes = [2, 192], strides = [1, 1]} : vector<2x256xf32> to vector<2x192xf32>
    %263 = arith.negf %262 : vector<2x192xf32>
    %264 = math.exp %263 : vector<2x192xf32>
    %cst_39 = arith.constant 1.000000e+00 : f32
    %265 = vector.broadcast %cst_39 : f32 to vector<2x192xf32>
    %266 = arith.addf %265, %264 : vector<2x192xf32>
    %267 = arith.divf %265, %266 : vector<2x192xf32>
    %268 = vector.extract_strided_slice %261 {offsets = [0, 192], sizes = [2, 64], strides = [1, 1]} : vector<2x256xf32> to vector<2x64xf32>
    %269 = math.tanh %268 : vector<2x64xf32>
    %270 = vector.extract_strided_slice %267 {offsets = [0, 0], sizes = [2, 64], strides = [1, 1]} : vector<2x192xf32> to vector<2x64xf32>
    %271 = vector.extract_strided_slice %267 {offsets = [0, 64], sizes = [2, 64], strides = [1, 1]} : vector<2x192xf32> to vector<2x64xf32>
    %272 = vector.extract_strided_slice %267 {offsets = [0, 128], sizes = [2, 64], strides = [1, 1]} : vector<2x192xf32> to vector<2x64xf32>
    %273 = arith.mulf %271, %256 : vector<2x64xf32>
    %274 = arith.mulf %270, %269 : vector<2x64xf32>
    %275 = arith.addf %273, %274 : vector<2x64xf32>
    %276 = math.tanh %275 : vector<2x64xf32>
    %277 = arith.mulf %272, %276 : vector<2x64xf32>
    %278 = vector.extract_strided_slice %167 {offsets = [12, 0], sizes = [2, 256], strides = [1, 1]} : vector<16x256xf32> to vector<2x256xf32>
    %cst_40 = arith.constant dense<0.000000e+00> : vector<2x256xf32>
    %279 = tpu.matmul %277, %168, %cst_40 {dimension_numbers = #tpu.dot_dimension_numbers<[1], [0], [0], [1], [0, 0, 1, 1], [], []>} : vector<2x64xf32>, vector<64x256xf32>, vector<2x256xf32> -> vector<2x256xf32>
    %280 = arith.addf %278, %279 : vector<2x256xf32>
    %281 = vector.extract_strided_slice %280 {offsets = [0, 0], sizes = [2, 192], strides = [1, 1]} : vector<2x256xf32> to vector<2x192xf32>
    %282 = arith.negf %281 : vector<2x192xf32>
    %283 = math.exp %282 : vector<2x192xf32>
    %cst_41 = arith.constant 1.000000e+00 : f32
    %284 = vector.broadcast %cst_41 : f32 to vector<2x192xf32>
    %285 = arith.addf %284, %283 : vector<2x192xf32>
    %286 = arith.divf %284, %285 : vector<2x192xf32>
    %287 = vector.extract_strided_slice %280 {offsets = [0, 192], sizes = [2, 64], strides = [1, 1]} : vector<2x256xf32> to vector<2x64xf32>
    %288 = math.tanh %287 : vector<2x64xf32>
    %289 = vector.extract_strided_slice %286 {offsets = [0, 0], sizes = [2, 64], strides = [1, 1]} : vector<2x192xf32> to vector<2x64xf32>
    %290 = vector.extract_strided_slice %286 {offsets = [0, 64], sizes = [2, 64], strides = [1, 1]} : vector<2x192xf32> to vector<2x64xf32>
    %291 = vector.extract_strided_slice %286 {offsets = [0, 128], sizes = [2, 64], strides = [1, 1]} : vector<2x192xf32> to vector<2x64xf32>
    %292 = arith.mulf %290, %275 : vector<2x64xf32>
    %293 = arith.mulf %289, %288 : vector<2x64xf32>
    %294 = arith.addf %292, %293 : vector<2x64xf32>
    %295 = math.tanh %294 : vector<2x64xf32>
    %296 = arith.mulf %291, %295 : vector<2x64xf32>
    %297 = vector.extract_strided_slice %167 {offsets = [14, 0], sizes = [2, 256], strides = [1, 1]} : vector<16x256xf32> to vector<2x256xf32>
    %cst_42 = arith.constant dense<0.000000e+00> : vector<2x256xf32>
    %298 = tpu.matmul %296, %168, %cst_42 {dimension_numbers = #tpu.dot_dimension_numbers<[1], [0], [0], [1], [0, 0, 1, 1], [], []>} : vector<2x64xf32>, vector<64x256xf32>, vector<2x256xf32> -> vector<2x256xf32>
    %299 = arith.addf %297, %298 : vector<2x256xf32>
    %300 = vector.extract_strided_slice %299 {offsets = [0, 0], sizes = [2, 192], strides = [1, 1]} : vector<2x256xf32> to vector<2x192xf32>
    %301 = arith.negf %300 : vector<2x192xf32>
    %302 = math.exp %301 : vector<2x192xf32>
    %cst_43 = arith.constant 1.000000e+00 : f32
    %303 = vector.broadcast %cst_43 : f32 to vector<2x192xf32>
    %304 = arith.addf %303, %302 : vector<2x192xf32>
    %305 = arith.divf %303, %304 : vector<2x192xf32>
    %306 = vector.extract_strided_slice %299 {offsets = [0, 192], sizes = [2, 64], strides = [1, 1]} : vector<2x256xf32> to vector<2x64xf32>
    %307 = math.tanh %306 : vector<2x64xf32>
    %308 = vector.extract_strided_slice %305 {offsets = [0, 0], sizes = [2, 64], strides = [1, 1]} : vector<2x192xf32> to vector<2x64xf32>
    %309 = vector.extract_strided_slice %305 {offsets = [0, 64], sizes = [2, 64], strides = [1, 1]} : vector<2x192xf32> to vector<2x64xf32>
    %310 = vector.extract_strided_slice %305 {offsets = [0, 128], sizes = [2, 64], strides = [1, 1]} : vector<2x192xf32> to vector<2x64xf32>
    %311 = arith.mulf %309, %294 : vector<2x64xf32>
    %312 = arith.mulf %308, %307 : vector<2x64xf32>
    %313 = arith.addf %311, %312 : vector<2x64xf32>
    %314 = math.tanh %313 : vector<2x64xf32>
    %315 = arith.mulf %310, %314 : vector<2x64xf32>
    %316 = tpu.concatenate %182, %315 in 1 : vector<2x64xf32>, vector<2x64xf32> -> vector<2x128xf32>
    %317 = tpu.concatenate %201, %296 in 1 : vector<2x64xf32>, vector<2x64xf32> -> vector<2x128xf32>
    %318 = tpu.concatenate %220, %277 in 1 : vector<2x64xf32>, vector<2x64xf32> -> vector<2x128xf32>
    %319 = tpu.concatenate %239, %258 in 1 : vector<2x64xf32>, vector<2x64xf32> -> vector<2x128xf32>
    %320 = tpu.concatenate %258, %239 in 1 : vector<2x64xf32>, vector<2x64xf32> -> vector<2x128xf32>
    %321 = tpu.concatenate %277, %220 in 1 : vector<2x64xf32>, vector<2x64xf32> -> vector<2x128xf32>
    %322 = tpu.concatenate %296, %201 in 1 : vector<2x64xf32>, vector<2x64xf32> -> vector<2x128xf32>
    %323 = tpu.concatenate %315, %182 in 1 : vector<2x64xf32>, vector<2x64xf32> -> vector<2x128xf32>
    %324 = tpu.concatenate %316, %317, %318, %319, %320, %321, %322, %323 in 0 : vector<2x128xf32>, vector<2x128xf32>, vector<2x128xf32>, vector<2x128xf32>, vector<2x128xf32>, vector<2x128xf32>, vector<2x128xf32>, vector<2x128xf32> -> vector<16x128xf32>
    %c0_44 = arith.constant 0 : index
    %c0_45 = arith.constant 0 : index
    %325 = vector.load %arg10[%c0_44, %c0_45] : memref<128x64xf32, #tpu.memory_space<vmem>>, vector<128x64xf32>
    %cst_46 = arith.constant dense<0.000000e+00> : vector<16x64xf32>
    %326 = tpu.matmul %324, %325, %cst_46 {dimension_numbers = #tpu.dot_dimension_numbers<[1], [0], [0], [1], [0, 0, 1, 1], [], []>} : vector<16x128xf32>, vector<128x64xf32>, vector<16x64xf32> -> vector<16x64xf32>
    %c0_47 = arith.constant 0 : index
    %c0_48 = arith.constant 0 : index
    %327 = vector.load %arg11[%c0_47, %c0_48] : memref<1x64xf32, #tpu.memory_space<vmem>>, vector<1x64xf32>
    %328 = vector.broadcast %327 : vector<1x64xf32> to vector<16x64xf32>
    %329 = arith.addf %326, %328 : vector<16x64xf32>
    %c0_49 = arith.constant 0 : index
    %c0_50 = arith.constant 0 : index
    %330 = vector.load %arg12[%c0_49, %c0_50] : memref<128x64xf32, #tpu.memory_space<vmem>>, vector<128x64xf32>
    %cst_51 = arith.constant dense<0.000000e+00> : vector<16x64xf32>
    %331 = tpu.matmul %324, %330, %cst_51 {dimension_numbers = #tpu.dot_dimension_numbers<[1], [0], [0], [1], [0, 0, 1, 1], [], []>} : vector<16x128xf32>, vector<128x64xf32>, vector<16x64xf32> -> vector<16x64xf32>
    %c0_52 = arith.constant 0 : index
    %c0_53 = arith.constant 0 : index
    %332 = vector.load %arg13[%c0_52, %c0_53] : memref<1x64xf32, #tpu.memory_space<vmem>>, vector<1x64xf32>
    %333 = vector.broadcast %332 : vector<1x64xf32> to vector<16x64xf32>
    %334 = arith.addf %331, %333 : vector<16x64xf32>
    %c0_54 = arith.constant 0 : index
    %c0_55 = arith.constant 0 : index
    %335 = vector.load %arg14[%c0_54, %c0_55] : memref<128x64xf32, #tpu.memory_space<vmem>>, vector<128x64xf32>
    %cst_56 = arith.constant dense<0.000000e+00> : vector<16x64xf32>
    %336 = tpu.matmul %324, %335, %cst_56 {dimension_numbers = #tpu.dot_dimension_numbers<[1], [0], [0], [1], [0, 0, 1, 1], [], []>} : vector<16x128xf32>, vector<128x64xf32>, vector<16x64xf32> -> vector<16x64xf32>
    %c0_57 = arith.constant 0 : index
    %c0_58 = arith.constant 0 : index
    %337 = vector.load %arg15[%c0_57, %c0_58] : memref<1x64xf32, #tpu.memory_space<vmem>>, vector<1x64xf32>
    %338 = vector.broadcast %337 : vector<1x64xf32> to vector<16x64xf32>
    %339 = arith.addf %336, %338 : vector<16x64xf32>
    %c0_59 = arith.constant 0 : index
    %c0_60 = arith.constant 0 : index
    %340 = vector.load %arg8[%c0_59, %c0_60] : memref<16x16xf32, #tpu.memory_space<vmem>>, vector<16x16xf32>
    %341 = vector.extract_strided_slice %329 {offsets = [0, 0], sizes = [16, 8], strides = [1, 1]} : vector<16x64xf32> to vector<16x8xf32>
    %342 = vector.extract_strided_slice %334 {offsets = [0, 0], sizes = [16, 8], strides = [1, 1]} : vector<16x64xf32> to vector<16x8xf32>
    %343 = vector.extract_strided_slice %339 {offsets = [0, 0], sizes = [16, 8], strides = [1, 1]} : vector<16x64xf32> to vector<16x8xf32>
    "tpu.trace_start"() <{level = 10 : i32, message = "qd,kd->qk"}> : () -> ()
    %cst_61 = arith.constant dense<0.000000e+00> : vector<16x16xf32>
    %344 = tpu.matmul %341, %342, %cst_61 {dimension_numbers = #tpu.dot_dimension_numbers<[1], [1], [0], [0], [0, 0, 1, 0], [], []>} : vector<16x8xf32>, vector<16x8xf32>, vector<16x16xf32> -> vector<16x16xf32>
    "tpu.trace_stop"() : () -> ()
    %cst_62 = arith.constant 0.353553385 : f32
    %345 = vector.broadcast %cst_62 : f32 to vector<16x16xf32>
    %346 = arith.mulf %344, %345 : vector<16x16xf32>
    %347 = arith.addf %346, %340 : vector<16x16xf32>
    %cst_63 = arith.constant dense<0xFF800000> : vector<16xf32>
    %348 = vector.multi_reduction <maximumf>, %347, %cst_63 [1] : vector<16x16xf32> to vector<16xf32>
    %349 = vector.shape_cast %348 : vector<16xf32> to vector<16x1xf32>
    %350 = vector.broadcast %349 : vector<16x1xf32> to vector<16x16xf32>
    %351 = arith.subf %347, %350 : vector<16x16xf32>
    %352 = math.exp %351 : vector<16x16xf32>
    %cst_64 = arith.constant dense<0.000000e+00> : vector<16xf32>
    %353 = vector.multi_reduction <add>, %352, %cst_64 [1] : vector<16x16xf32> to vector<16xf32>
    %354 = vector.shape_cast %353 : vector<16xf32> to vector<16x1xf32>
    %355 = vector.broadcast %354 : vector<16x1xf32> to vector<16x16xf32>
    %356 = arith.divf %352, %355 : vector<16x16xf32>
    %cst_65 = arith.constant dense<0.000000e+00> : vector<16x8xf32>
    %357 = tpu.matmul %356, %343, %cst_65 {dimension_numbers = #tpu.dot_dimension_numbers<[1], [0], [0], [1], [0, 0, 1, 1], [], []>} : vector<16x16xf32>, vector<16x8xf32>, vector<16x8xf32> -> vector<16x8xf32>
    %358 = vector.extract_strided_slice %329 {offsets = [0, 8], sizes = [16, 8], strides = [1, 1]} : vector<16x64xf32> to vector<16x8xf32>
    %359 = vector.extract_strided_slice %334 {offsets = [0, 8], sizes = [16, 8], strides = [1, 1]} : vector<16x64xf32> to vector<16x8xf32>
    %360 = vector.extract_strided_slice %339 {offsets = [0, 8], sizes = [16, 8], strides = [1, 1]} : vector<16x64xf32> to vector<16x8xf32>
    "tpu.trace_start"() <{level = 10 : i32, message = "qd,kd->qk"}> : () -> ()
    %cst_66 = arith.constant dense<0.000000e+00> : vector<16x16xf32>
    %361 = tpu.matmul %358, %359, %cst_66 {dimension_numbers = #tpu.dot_dimension_numbers<[1], [1], [0], [0], [0, 0, 1, 0], [], []>} : vector<16x8xf32>, vector<16x8xf32>, vector<16x16xf32> -> vector<16x16xf32>
    "tpu.trace_stop"() : () -> ()
    %cst_67 = arith.constant 0.353553385 : f32
    %362 = vector.broadcast %cst_67 : f32 to vector<16x16xf32>
    %363 = arith.mulf %361, %362 : vector<16x16xf32>
    %364 = arith.addf %363, %340 : vector<16x16xf32>
    %cst_68 = arith.constant dense<0xFF800000> : vector<16xf32>
    %365 = vector.multi_reduction <maximumf>, %364, %cst_68 [1] : vector<16x16xf32> to vector<16xf32>
    %366 = vector.shape_cast %365 : vector<16xf32> to vector<16x1xf32>
    %367 = vector.broadcast %366 : vector<16x1xf32> to vector<16x16xf32>
    %368 = arith.subf %364, %367 : vector<16x16xf32>
    %369 = math.exp %368 : vector<16x16xf32>
    %cst_69 = arith.constant dense<0.000000e+00> : vector<16xf32>
    %370 = vector.multi_reduction <add>, %369, %cst_69 [1] : vector<16x16xf32> to vector<16xf32>
    %371 = vector.shape_cast %370 : vector<16xf32> to vector<16x1xf32>
    %372 = vector.broadcast %371 : vector<16x1xf32> to vector<16x16xf32>
    %373 = arith.divf %369, %372 : vector<16x16xf32>
    %cst_70 = arith.constant dense<0.000000e+00> : vector<16x8xf32>
    %374 = tpu.matmul %373, %360, %cst_70 {dimension_numbers = #tpu.dot_dimension_numbers<[1], [0], [0], [1], [0, 0, 1, 1], [], []>} : vector<16x16xf32>, vector<16x8xf32>, vector<16x8xf32> -> vector<16x8xf32>
    %375 = vector.extract_strided_slice %329 {offsets = [0, 16], sizes = [16, 8], strides = [1, 1]} : vector<16x64xf32> to vector<16x8xf32>
    %376 = vector.extract_strided_slice %334 {offsets = [0, 16], sizes = [16, 8], strides = [1, 1]} : vector<16x64xf32> to vector<16x8xf32>
    %377 = vector.extract_strided_slice %339 {offsets = [0, 16], sizes = [16, 8], strides = [1, 1]} : vector<16x64xf32> to vector<16x8xf32>
    "tpu.trace_start"() <{level = 10 : i32, message = "qd,kd->qk"}> : () -> ()
    %cst_71 = arith.constant dense<0.000000e+00> : vector<16x16xf32>
    %378 = tpu.matmul %375, %376, %cst_71 {dimension_numbers = #tpu.dot_dimension_numbers<[1], [1], [0], [0], [0, 0, 1, 0], [], []>} : vector<16x8xf32>, vector<16x8xf32>, vector<16x16xf32> -> vector<16x16xf32>
    "tpu.trace_stop"() : () -> ()
    %cst_72 = arith.constant 0.353553385 : f32
    %379 = vector.broadcast %cst_72 : f32 to vector<16x16xf32>
    %380 = arith.mulf %378, %379 : vector<16x16xf32>
    %381 = arith.addf %380, %340 : vector<16x16xf32>
    %cst_73 = arith.constant dense<0xFF800000> : vector<16xf32>
    %382 = vector.multi_reduction <maximumf>, %381, %cst_73 [1] : vector<16x16xf32> to vector<16xf32>
    %383 = vector.shape_cast %382 : vector<16xf32> to vector<16x1xf32>
    %384 = vector.broadcast %383 : vector<16x1xf32> to vector<16x16xf32>
    %385 = arith.subf %381, %384 : vector<16x16xf32>
    %386 = math.exp %385 : vector<16x16xf32>
    %cst_74 = arith.constant dense<0.000000e+00> : vector<16xf32>
    %387 = vector.multi_reduction <add>, %386, %cst_74 [1] : vector<16x16xf32> to vector<16xf32>
    %388 = vector.shape_cast %387 : vector<16xf32> to vector<16x1xf32>
    %389 = vector.broadcast %388 : vector<16x1xf32> to vector<16x16xf32>
    %390 = arith.divf %386, %389 : vector<16x16xf32>
    %cst_75 = arith.constant dense<0.000000e+00> : vector<16x8xf32>
    %391 = tpu.matmul %390, %377, %cst_75 {dimension_numbers = #tpu.dot_dimension_numbers<[1], [0], [0], [1], [0, 0, 1, 1], [], []>} : vector<16x16xf32>, vector<16x8xf32>, vector<16x8xf32> -> vector<16x8xf32>
    %392 = vector.extract_strided_slice %329 {offsets = [0, 24], sizes = [16, 8], strides = [1, 1]} : vector<16x64xf32> to vector<16x8xf32>
    %393 = vector.extract_strided_slice %334 {offsets = [0, 24], sizes = [16, 8], strides = [1, 1]} : vector<16x64xf32> to vector<16x8xf32>
    %394 = vector.extract_strided_slice %339 {offsets = [0, 24], sizes = [16, 8], strides = [1, 1]} : vector<16x64xf32> to vector<16x8xf32>
    "tpu.trace_start"() <{level = 10 : i32, message = "qd,kd->qk"}> : () -> ()
    %cst_76 = arith.constant dense<0.000000e+00> : vector<16x16xf32>
    %395 = tpu.matmul %392, %393, %cst_76 {dimension_numbers = #tpu.dot_dimension_numbers<[1], [1], [0], [0], [0, 0, 1, 0], [], []>} : vector<16x8xf32>, vector<16x8xf32>, vector<16x16xf32> -> vector<16x16xf32>
    "tpu.trace_stop"() : () -> ()
    %cst_77 = arith.constant 0.353553385 : f32
    %396 = vector.broadcast %cst_77 : f32 to vector<16x16xf32>
    %397 = arith.mulf %395, %396 : vector<16x16xf32>
    %398 = arith.addf %397, %340 : vector<16x16xf32>
    %cst_78 = arith.constant dense<0xFF800000> : vector<16xf32>
    %399 = vector.multi_reduction <maximumf>, %398, %cst_78 [1] : vector<16x16xf32> to vector<16xf32>
    %400 = vector.shape_cast %399 : vector<16xf32> to vector<16x1xf32>
    %401 = vector.broadcast %400 : vector<16x1xf32> to vector<16x16xf32>
    %402 = arith.subf %398, %401 : vector<16x16xf32>
    %403 = math.exp %402 : vector<16x16xf32>
    %cst_79 = arith.constant dense<0.000000e+00> : vector<16xf32>
    %404 = vector.multi_reduction <add>, %403, %cst_79 [1] : vector<16x16xf32> to vector<16xf32>
    %405 = vector.shape_cast %404 : vector<16xf32> to vector<16x1xf32>
    %406 = vector.broadcast %405 : vector<16x1xf32> to vector<16x16xf32>
    %407 = arith.divf %403, %406 : vector<16x16xf32>
    %cst_80 = arith.constant dense<0.000000e+00> : vector<16x8xf32>
    %408 = tpu.matmul %407, %394, %cst_80 {dimension_numbers = #tpu.dot_dimension_numbers<[1], [0], [0], [1], [0, 0, 1, 1], [], []>} : vector<16x16xf32>, vector<16x8xf32>, vector<16x8xf32> -> vector<16x8xf32>
    %409 = vector.extract_strided_slice %329 {offsets = [0, 32], sizes = [16, 8], strides = [1, 1]} : vector<16x64xf32> to vector<16x8xf32>
    %410 = vector.extract_strided_slice %334 {offsets = [0, 32], sizes = [16, 8], strides = [1, 1]} : vector<16x64xf32> to vector<16x8xf32>
    %411 = vector.extract_strided_slice %339 {offsets = [0, 32], sizes = [16, 8], strides = [1, 1]} : vector<16x64xf32> to vector<16x8xf32>
    "tpu.trace_start"() <{level = 10 : i32, message = "qd,kd->qk"}> : () -> ()
    %cst_81 = arith.constant dense<0.000000e+00> : vector<16x16xf32>
    %412 = tpu.matmul %409, %410, %cst_81 {dimension_numbers = #tpu.dot_dimension_numbers<[1], [1], [0], [0], [0, 0, 1, 0], [], []>} : vector<16x8xf32>, vector<16x8xf32>, vector<16x16xf32> -> vector<16x16xf32>
    "tpu.trace_stop"() : () -> ()
    %cst_82 = arith.constant 0.353553385 : f32
    %413 = vector.broadcast %cst_82 : f32 to vector<16x16xf32>
    %414 = arith.mulf %412, %413 : vector<16x16xf32>
    %415 = arith.addf %414, %340 : vector<16x16xf32>
    %cst_83 = arith.constant dense<0xFF800000> : vector<16xf32>
    %416 = vector.multi_reduction <maximumf>, %415, %cst_83 [1] : vector<16x16xf32> to vector<16xf32>
    %417 = vector.shape_cast %416 : vector<16xf32> to vector<16x1xf32>
    %418 = vector.broadcast %417 : vector<16x1xf32> to vector<16x16xf32>
    %419 = arith.subf %415, %418 : vector<16x16xf32>
    %420 = math.exp %419 : vector<16x16xf32>
    %cst_84 = arith.constant dense<0.000000e+00> : vector<16xf32>
    %421 = vector.multi_reduction <add>, %420, %cst_84 [1] : vector<16x16xf32> to vector<16xf32>
    %422 = vector.shape_cast %421 : vector<16xf32> to vector<16x1xf32>
    %423 = vector.broadcast %422 : vector<16x1xf32> to vector<16x16xf32>
    %424 = arith.divf %420, %423 : vector<16x16xf32>
    %cst_85 = arith.constant dense<0.000000e+00> : vector<16x8xf32>
    %425 = tpu.matmul %424, %411, %cst_85 {dimension_numbers = #tpu.dot_dimension_numbers<[1], [0], [0], [1], [0, 0, 1, 1], [], []>} : vector<16x16xf32>, vector<16x8xf32>, vector<16x8xf32> -> vector<16x8xf32>
    %426 = vector.extract_strided_slice %329 {offsets = [0, 40], sizes = [16, 8], strides = [1, 1]} : vector<16x64xf32> to vector<16x8xf32>
    %427 = vector.extract_strided_slice %334 {offsets = [0, 40], sizes = [16, 8], strides = [1, 1]} : vector<16x64xf32> to vector<16x8xf32>
    %428 = vector.extract_strided_slice %339 {offsets = [0, 40], sizes = [16, 8], strides = [1, 1]} : vector<16x64xf32> to vector<16x8xf32>
    "tpu.trace_start"() <{level = 10 : i32, message = "qd,kd->qk"}> : () -> ()
    %cst_86 = arith.constant dense<0.000000e+00> : vector<16x16xf32>
    %429 = tpu.matmul %426, %427, %cst_86 {dimension_numbers = #tpu.dot_dimension_numbers<[1], [1], [0], [0], [0, 0, 1, 0], [], []>} : vector<16x8xf32>, vector<16x8xf32>, vector<16x16xf32> -> vector<16x16xf32>
    "tpu.trace_stop"() : () -> ()
    %cst_87 = arith.constant 0.353553385 : f32
    %430 = vector.broadcast %cst_87 : f32 to vector<16x16xf32>
    %431 = arith.mulf %429, %430 : vector<16x16xf32>
    %432 = arith.addf %431, %340 : vector<16x16xf32>
    %cst_88 = arith.constant dense<0xFF800000> : vector<16xf32>
    %433 = vector.multi_reduction <maximumf>, %432, %cst_88 [1] : vector<16x16xf32> to vector<16xf32>
    %434 = vector.shape_cast %433 : vector<16xf32> to vector<16x1xf32>
    %435 = vector.broadcast %434 : vector<16x1xf32> to vector<16x16xf32>
    %436 = arith.subf %432, %435 : vector<16x16xf32>
    %437 = math.exp %436 : vector<16x16xf32>
    %cst_89 = arith.constant dense<0.000000e+00> : vector<16xf32>
    %438 = vector.multi_reduction <add>, %437, %cst_89 [1] : vector<16x16xf32> to vector<16xf32>
    %439 = vector.shape_cast %438 : vector<16xf32> to vector<16x1xf32>
    %440 = vector.broadcast %439 : vector<16x1xf32> to vector<16x16xf32>
    %441 = arith.divf %437, %440 : vector<16x16xf32>
    %cst_90 = arith.constant dense<0.000000e+00> : vector<16x8xf32>
    %442 = tpu.matmul %441, %428, %cst_90 {dimension_numbers = #tpu.dot_dimension_numbers<[1], [0], [0], [1], [0, 0, 1, 1], [], []>} : vector<16x16xf32>, vector<16x8xf32>, vector<16x8xf32> -> vector<16x8xf32>
    %443 = vector.extract_strided_slice %329 {offsets = [0, 48], sizes = [16, 8], strides = [1, 1]} : vector<16x64xf32> to vector<16x8xf32>
    %444 = vector.extract_strided_slice %334 {offsets = [0, 48], sizes = [16, 8], strides = [1, 1]} : vector<16x64xf32> to vector<16x8xf32>
    %445 = vector.extract_strided_slice %339 {offsets = [0, 48], sizes = [16, 8], strides = [1, 1]} : vector<16x64xf32> to vector<16x8xf32>
    "tpu.trace_start"() <{level = 10 : i32, message = "qd,kd->qk"}> : () -> ()
    %cst_91 = arith.constant dense<0.000000e+00> : vector<16x16xf32>
    %446 = tpu.matmul %443, %444, %cst_91 {dimension_numbers = #tpu.dot_dimension_numbers<[1], [1], [0], [0], [0, 0, 1, 0], [], []>} : vector<16x8xf32>, vector<16x8xf32>, vector<16x16xf32> -> vector<16x16xf32>
    "tpu.trace_stop"() : () -> ()
    %cst_92 = arith.constant 0.353553385 : f32
    %447 = vector.broadcast %cst_92 : f32 to vector<16x16xf32>
    %448 = arith.mulf %446, %447 : vector<16x16xf32>
    %449 = arith.addf %448, %340 : vector<16x16xf32>
    %cst_93 = arith.constant dense<0xFF800000> : vector<16xf32>
    %450 = vector.multi_reduction <maximumf>, %449, %cst_93 [1] : vector<16x16xf32> to vector<16xf32>
    %451 = vector.shape_cast %450 : vector<16xf32> to vector<16x1xf32>
    %452 = vector.broadcast %451 : vector<16x1xf32> to vector<16x16xf32>
    %453 = arith.subf %449, %452 : vector<16x16xf32>
    %454 = math.exp %453 : vector<16x16xf32>
    %cst_94 = arith.constant dense<0.000000e+00> : vector<16xf32>
    %455 = vector.multi_reduction <add>, %454, %cst_94 [1] : vector<16x16xf32> to vector<16xf32>
    %456 = vector.shape_cast %455 : vector<16xf32> to vector<16x1xf32>
    %457 = vector.broadcast %456 : vector<16x1xf32> to vector<16x16xf32>
    %458 = arith.divf %454, %457 : vector<16x16xf32>
    %cst_95 = arith.constant dense<0.000000e+00> : vector<16x8xf32>
    %459 = tpu.matmul %458, %445, %cst_95 {dimension_numbers = #tpu.dot_dimension_numbers<[1], [0], [0], [1], [0, 0, 1, 1], [], []>} : vector<16x16xf32>, vector<16x8xf32>, vector<16x8xf32> -> vector<16x8xf32>
    %460 = vector.extract_strided_slice %329 {offsets = [0, 56], sizes = [16, 8], strides = [1, 1]} : vector<16x64xf32> to vector<16x8xf32>
    %461 = vector.extract_strided_slice %334 {offsets = [0, 56], sizes = [16, 8], strides = [1, 1]} : vector<16x64xf32> to vector<16x8xf32>
    %462 = vector.extract_strided_slice %339 {offsets = [0, 56], sizes = [16, 8], strides = [1, 1]} : vector<16x64xf32> to vector<16x8xf32>
    "tpu.trace_start"() <{level = 10 : i32, message = "qd,kd->qk"}> : () -> ()
    %cst_96 = arith.constant dense<0.000000e+00> : vector<16x16xf32>
    %463 = tpu.matmul %460, %461, %cst_96 {dimension_numbers = #tpu.dot_dimension_numbers<[1], [1], [0], [0], [0, 0, 1, 0], [], []>} : vector<16x8xf32>, vector<16x8xf32>, vector<16x16xf32> -> vector<16x16xf32>
    "tpu.trace_stop"() : () -> ()
    %cst_97 = arith.constant 0.353553385 : f32
    %464 = vector.broadcast %cst_97 : f32 to vector<16x16xf32>
    %465 = arith.mulf %463, %464 : vector<16x16xf32>
    %466 = arith.addf %465, %340 : vector<16x16xf32>
    %cst_98 = arith.constant dense<0xFF800000> : vector<16xf32>
    %467 = vector.multi_reduction <maximumf>, %466, %cst_98 [1] : vector<16x16xf32> to vector<16xf32>
    %468 = vector.shape_cast %467 : vector<16xf32> to vector<16x1xf32>
    %469 = vector.broadcast %468 : vector<16x1xf32> to vector<16x16xf32>
    %470 = arith.subf %466, %469 : vector<16x16xf32>
    %471 = math.exp %470 : vector<16x16xf32>
    %cst_99 = arith.constant dense<0.000000e+00> : vector<16xf32>
    %472 = vector.multi_reduction <add>, %471, %cst_99 [1] : vector<16x16xf32> to vector<16xf32>
    %473 = vector.shape_cast %472 : vector<16xf32> to vector<16x1xf32>
    %474 = vector.broadcast %473 : vector<16x1xf32> to vector<16x16xf32>
    %475 = arith.divf %471, %474 : vector<16x16xf32>
    %cst_100 = arith.constant dense<0.000000e+00> : vector<16x8xf32>
    %476 = tpu.matmul %475, %462, %cst_100 {dimension_numbers = #tpu.dot_dimension_numbers<[1], [0], [0], [1], [0, 0, 1, 1], [], []>} : vector<16x16xf32>, vector<16x8xf32>, vector<16x8xf32> -> vector<16x8xf32>
    %477 = tpu.concatenate %357, %374, %391, %408, %425, %442, %459, %476 in 1 : vector<16x8xf32>, vector<16x8xf32>, vector<16x8xf32>, vector<16x8xf32>, vector<16x8xf32>, vector<16x8xf32>, vector<16x8xf32>, vector<16x8xf32> -> vector<16x64xf32>
    %c0_101 = arith.constant 0 : index
    %c0_102 = arith.constant 0 : index
    %478 = vector.load %arg9[%c0_101, %c0_102] : memref<2x16xf32, #tpu.memory_space<vmem>>, vector<2x16xf32>
    %cst_103 = arith.constant dense<0.000000e+00> : vector<2x64xf32>
    %479 = tpu.matmul %478, %477, %cst_103 {dimension_numbers = #tpu.dot_dimension_numbers<[1], [0], [0], [1], [0, 0, 1, 1], [], []>} : vector<2x16xf32>, vector<16x64xf32>, vector<2x64xf32> -> vector<2x64xf32>
    %c0_104 = arith.constant 0 : index
    %c0_105 = arith.constant 0 : index
    %480 = vector.load %arg16[%c0_104, %c0_105] : memref<64x64xf32, #tpu.memory_space<vmem>>, vector<64x64xf32>
    %cst_106 = arith.constant dense<0.000000e+00> : vector<2x64xf32>
    %481 = tpu.matmul %479, %480, %cst_106 {dimension_numbers = #tpu.dot_dimension_numbers<[1], [0], [0], [1], [0, 0, 1, 1], [], []>} : vector<2x64xf32>, vector<64x64xf32>, vector<2x64xf32> -> vector<2x64xf32>
    %c0_107 = arith.constant 0 : index
    %c0_108 = arith.constant 0 : index
    %482 = vector.load %arg17[%c0_107, %c0_108] : memref<1x64xf32, #tpu.memory_space<vmem>>, vector<1x64xf32>
    %483 = vector.broadcast %482 : vector<1x64xf32> to vector<2x64xf32>
    %484 = arith.addf %481, %483 : vector<2x64xf32>
    %c0_109 = arith.constant 0 : index
    %c0_110 = arith.constant 0 : index
    %485 = vector.load %arg18[%c0_109, %c0_110] : memref<64x32xf32, #tpu.memory_space<vmem>>, vector<64x32xf32>
    %cst_111 = arith.constant dense<0.000000e+00> : vector<2x32xf32>
    %486 = tpu.matmul %484, %485, %cst_111 {dimension_numbers = #tpu.dot_dimension_numbers<[1], [0], [0], [1], [0, 0, 1, 1], [], []>} : vector<2x64xf32>, vector<64x32xf32>, vector<2x32xf32> -> vector<2x32xf32>
    %c0_112 = arith.constant 0 : index
    %c0_113 = arith.constant 0 : index
    %487 = vector.load %arg19[%c0_112, %c0_113] : memref<1x32xf32, #tpu.memory_space<vmem>>, vector<1x32xf32>
    %488 = vector.broadcast %487 : vector<1x32xf32> to vector<2x32xf32>
    %489 = arith.addf %486, %488 : vector<2x32xf32>
    %cst_114 = arith.constant 0.000000e+00 : f32
    %490 = vector.broadcast %cst_114 : f32 to vector<2x32xf32>
    %491 = arith.maximumf %489, %490 : vector<2x32xf32>
    %c0_115 = arith.constant 0 : index
    %c0_116 = arith.constant 0 : index
    %492 = vector.load %arg20[%c0_115, %c0_116] : memref<32x32xf32, #tpu.memory_space<vmem>>, vector<32x32xf32>
    %cst_117 = arith.constant dense<0.000000e+00> : vector<2x32xf32>
    %493 = tpu.matmul %491, %492, %cst_117 {dimension_numbers = #tpu.dot_dimension_numbers<[1], [0], [0], [1], [0, 0, 1, 1], [], []>} : vector<2x32xf32>, vector<32x32xf32>, vector<2x32xf32> -> vector<2x32xf32>
    %c0_118 = arith.constant 0 : index
    %c0_119 = arith.constant 0 : index
    %494 = vector.load %arg21[%c0_118, %c0_119] : memref<1x32xf32, #tpu.memory_space<vmem>>, vector<1x32xf32>
    %495 = vector.broadcast %494 : vector<1x32xf32> to vector<2x32xf32>
    %496 = arith.addf %493, %495 : vector<2x32xf32>
    %cst_120 = arith.constant 0.000000e+00 : f32
    %497 = vector.broadcast %cst_120 : f32 to vector<2x32xf32>
    %498 = arith.maximumf %496, %497 : vector<2x32xf32>
    %c0_121 = arith.constant 0 : index
    %c0_122 = arith.constant 0 : index
    %499 = vector.load %arg22[%c0_121, %c0_122] : memref<32x1xf32, #tpu.memory_space<vmem>>, vector<32x1xf32>
    %cst_123 = arith.constant dense<0.000000e+00> : vector<2x1xf32>
    %500 = tpu.matmul %498, %499, %cst_123 {dimension_numbers = #tpu.dot_dimension_numbers<[1], [0], [0], [1], [0, 0, 1, 1], [], []>} : vector<2x32xf32>, vector<32x1xf32>, vector<2x1xf32> -> vector<2x1xf32>
    %c0_124 = arith.constant 0 : index
    %c0_125 = arith.constant 0 : index
    %501 = vector.load %arg23[%c0_124, %c0_125] : memref<1x1xf32, #tpu.memory_space<vmem>>, vector<1x1xf32>
    %502 = vector.broadcast %501 : vector<1x1xf32> to vector<2x1xf32>
    %503 = arith.addf %500, %502 : vector<2x1xf32>
    %c0_126 = arith.constant 0 : index
    %c0_127 = arith.constant 0 : index
    %504 = vector.load %arg24[%c0_126, %c0_127] : memref<2x1xf32, #tpu.memory_space<vmem>>, vector<2x1xf32>
    tpu.vector_store %arg24[%c0_126, %c0_127], %503 {strides = array<i32>} : memref<2x1xf32, #tpu.memory_space<vmem>>, vector<2x1xf32>,
    return
  }
  func.func @transform_0(%arg0: i32) -> (i32, i32) {
    %c0_i32 = arith.constant 0 : i32
    %c0_i32_0 = arith.constant 0 : i32
    %c0_i32_1 = arith.constant 0 : i32
    return %c0_i32, %c0_i32_0 : i32, i32
  }
  func.func @transform_1(%arg0: i32) -> (i32, i32) {
    %c0_i32 = arith.constant 0 : i32
    %c0_i32_0 = arith.constant 0 : i32
    %c0_i32_1 = arith.constant 0 : i32
    return %c0_i32, %c0_i32_0 : i32, i32
  }
  func.func @transform_2(%arg0: i32) -> (i32, i32) {
    %c0_i32 = arith.constant 0 : i32
    %c0_i32_0 = arith.constant 0 : i32
    %c0_i32_1 = arith.constant 0 : i32
    return %c0_i32, %c0_i32_0 : i32, i32
  }
  func.func @transform_3(%arg0: i32) -> (i32, i32) {
    %c0_i32 = arith.constant 0 : i32
    %c0_i32_0 = arith.constant 0 : i32
    %c0_i32_1 = arith.constant 0 : i32
    return %c0_i32, %c0_i32_0 : i32, i32
  }
  func.func @transform_4(%arg0: i32) -> (i32, i32) {
    %c0_i32 = arith.constant 0 : i32
    %c0_i32_0 = arith.constant 0 : i32
    %c0_i32_1 = arith.constant 0 : i32
    return %c0_i32, %c0_i32_0 : i32, i32
  }
  func.func @transform_5(%arg0: i32) -> (i32, i32) {
    %c0_i32 = arith.constant 0 : i32
    %c0_i32_0 = arith.constant 0 : i32
    %c0_i32_1 = arith.constant 0 : i32
    return %c0_i32, %c0_i32_0 : i32, i32
  }
  func.func @transform_6(%arg0: i32) -> (i32, i32) {
    %c0_i32 = arith.constant 0 : i32
    %c0_i32_0 = arith.constant 0 : i32
    %c0_i32_1 = arith.constant 0 : i32
    return %c0_i32, %c0_i32_0 : i32, i32
  }
  func.func @transform_7(%arg0: i32) -> (i32, i32) {
    %c0_i32 = arith.constant 0 : i32
    %c0_i32_0 = arith.constant 0 : i32
    %c0_i32_1 = arith.constant 0 : i32
    return %c0_i32, %c0_i32_0 : i32, i32
  }
  func.func @transform_8(%arg0: i32) -> (i32, i32) {
    %c0_i32 = arith.constant 0 : i32
    %c0_i32_0 = arith.constant 0 : i32
    %c0_i32_1 = arith.constant 0 : i32
    return %c0_i32, %c0_i32_0 : i32, i32
  }
  func.func @transform_9(%arg0: i32) -> (i32, i32) {
    %c0_i32 = arith.constant 0 : i32
    %c0_i32_0 = arith.constant 0 : i32
    %c0_i32_1 = arith.constant 0 : i32
    return %c0_i32, %c0_i32_0 : i32, i32
  }
  func.func @transform_10(%arg0: i32) -> (i32, i32) {
    %c0_i32 = arith.constant 0 : i32
    %c0_i32_0 = arith.constant 0 : i32
    %c0_i32_1 = arith.constant 0 : i32
    return %c0_i32, %c0_i32_0 : i32, i32
  }
  func.func @transform_11(%arg0: i32) -> (i32, i32) {
    %c0_i32 = arith.constant 0 : i32
    %c0_i32_0 = arith.constant 0 : i32
    %c0_i32_1 = arith.constant 0 : i32
    return %c0_i32, %c0_i32_0 : i32, i32
  }
  func.func @transform_12(%arg0: i32) -> (i32, i32) {
    %c0_i32 = arith.constant 0 : i32
    %c0_i32_0 = arith.constant 0 : i32
    %c0_i32_1 = arith.constant 0 : i32
    return %c0_i32, %c0_i32_0 : i32, i32
  }
  func.func @transform_13(%arg0: i32) -> (i32, i32) {
    %c0_i32 = arith.constant 0 : i32
    %c0_i32_0 = arith.constant 0 : i32
    %c0_i32_1 = arith.constant 0 : i32
    return %c0_i32, %c0_i32_0 : i32, i32
  }
  func.func @transform_14(%arg0: i32) -> (i32, i32) {
    %c0_i32 = arith.constant 0 : i32
    %c0_i32_0 = arith.constant 0 : i32
    %c0_i32_1 = arith.constant 0 : i32
    return %c0_i32, %c0_i32_0 : i32, i32
  }
  func.func @transform_15(%arg0: i32) -> (i32, i32) {
    %c0_i32 = arith.constant 0 : i32
    %c0_i32_0 = arith.constant 0 : i32
    %c0_i32_1 = arith.constant 0 : i32
    return %c0_i32, %c0_i32_0 : i32, i32
  }
  func.func @transform_16(%arg0: i32) -> (i32, i32) {
    %c0_i32 = arith.constant 0 : i32
    %c0_i32_0 = arith.constant 0 : i32
    %c0_i32_1 = arith.constant 0 : i32
    return %c0_i32, %c0_i32_0 : i32, i32
  }
  func.func @transform_17(%arg0: i32) -> (i32, i32) {
    %c0_i32 = arith.constant 0 : i32
    %c0_i32_0 = arith.constant 0 : i32
    %c0_i32_1 = arith.constant 0 : i32
    return %c0_i32, %c0_i32_0 : i32, i32
  }
  func.func @transform_18(%arg0: i32) -> (i32, i32) {
    %c0_i32 = arith.constant 0 : i32
    %c0_i32_0 = arith.constant 0 : i32
    %c0_i32_1 = arith.constant 0 : i32
    return %c0_i32, %c0_i32_0 : i32, i32
  }
  func.func @transform_19(%arg0: i32) -> (i32, i32) {
    %c0_i32 = arith.constant 0 : i32
    %c0_i32_0 = arith.constant 0 : i32
    %c0_i32_1 = arith.constant 0 : i32
    return %c0_i32, %c0_i32_0 : i32, i32
  }
  func.func @transform_20(%arg0: i32) -> (i32, i32) {
    %c0_i32 = arith.constant 0 : i32
    %c0_i32_0 = arith.constant 0 : i32
    %c0_i32_1 = arith.constant 0 : i32
    return %c0_i32, %c0_i32_0 : i32, i32
  }
  func.func @transform_21(%arg0: i32) -> (i32, i32) {
    %c0_i32 = arith.constant 0 : i32
    %c0_i32_0 = arith.constant 0 : i32
    %c0_i32_1 = arith.constant 0 : i32
    return %c0_i32, %c0_i32_0 : i32, i32
  }
  func.func @transform_22(%arg0: i32) -> (i32, i32) {
    %c0_i32 = arith.constant 0 : i32
    %c0_i32_0 = arith.constant 0 : i32
    %c0_i32_1 = arith.constant 0 : i32
    return %c0_i32, %c0_i32_0 : i32, i32
  }
  func.func @transform_23(%arg0: i32) -> (i32, i32) {
    %c0_i32 = arith.constant 0 : i32
    %c0_i32_0 = arith.constant 0 : i32
    %c0_i32_1 = arith.constant 0 : i32
    return %c0_i32, %c0_i32_0 : i32, i32
  }
}

</mosaic_0001>

<llo_original>
// kernel: forward.1
$region0: #{forward.1}
  #allocation0 [shape = 'u32[]', space=smem, size = 0x4, offset = 0x4, fixed_abs, tag = 'smem constant byte address 0x4 - core index']
  #allocation1 [shape = 'u32[144,128]{1,0:T(1,128)}', space=vmem, size = 0x12000, scoped, tag = 'internal scratch']
  #allocation2 [shape = 'f32[1,1]{1,0:T(1,128)S(1)}', space=vmem, size = 0x200, scoped, tag = 'scoped memory for forward.1']
  %s0 = inlined_call_operand.vmem [shape: f32[16,32], index: 0, kind: input, shape index: {}]
  %s1 = inlined_call_operand.vmem [shape: f32[32,256], index: 1, kind: input, shape index: {}]
  %s2 = inlined_call_operand.vmem [shape: f32[1,256], index: 2, kind: input, shape index: {}]
  %s3 = inlined_call_operand.vmem [shape: f32[64,256], index: 3, kind: input, shape index: {}]
  %s4 = inlined_call_operand.vmem [shape: f32[128,256], index: 4, kind: input, shape index: {}]
  %s5 = inlined_call_operand.vmem [shape: f32[1,256], index: 5, kind: input, shape index: {}]
  %s6 = inlined_call_operand.vmem [shape: f32[64,256], index: 6, kind: input, shape index: {}]
  %s7 = inlined_call_operand.vmem [shape: f32[16,16], index: 7, kind: input, shape index: {}]
  %s8 = inlined_call_operand.vmem [shape: f32[2,16], index: 8, kind: input, shape index: {}]
  %s9 = inlined_call_operand.vmem [shape: f32[128,64], index: 9, kind: input, shape index: {}]
  %s10 = inlined_call_operand.vmem [shape: f32[1,64], index: 10, kind: input, shape index: {}]
  %s11 = inlined_call_operand.vmem [shape: f32[128,64], index: 11, kind: input, shape index: {}]
  %s12 = inlined_call_operand.vmem [shape: f32[1,64], index: 12, kind: input, shape index: {}]
  %s13 = inlined_call_operand.vmem [shape: f32[128,64], index: 13, kind: input, shape index: {}]
  %s14 = inlined_call_operand.vmem [shape: f32[1,64], index: 14, kind: input, shape index: {}]
  %s15 = inlined_call_operand.vmem [shape: f32[64,64], index: 15, kind: input, shape index: {}]
  %s16 = inlined_call_operand.vmem [shape: f32[1,64], index: 16, kind: input, shape index: {}]
  %s17 = inlined_call_operand.vmem [shape: f32[64,32], index: 17, kind: input, shape index: {}]
  %s18 = inlined_call_operand.vmem [shape: f32[1,32], index: 18, kind: input, shape index: {}]
  %s19 = inlined_call_operand.hbm [shape: f32[32,32], index: 19, kind: input, shape index: {}]
  %s20 = inlined_call_operand.vmem [shape: f32[1,32], index: 20, kind: input, shape index: {}]
  %s21 = inlined_call_operand.vmem [shape: f32[32,1], index: 21, kind: input, shape index: {}]
  %s22 = inlined_call_operand.<no memory space> [shape: f32[1,1], index: 22, kind: input, shape index: {}]
  %s23 = inlined_call_operand.vmem [shape: f32[2,1], index: 23, kind: output, shape index: {}]
  %s24 = sld [smem:[#allocation0]]
  $region106: #{forward.1} parent=0
    _
  %s26 = ssub.s32 1, %s24
  %s27 = scalar_select 0, %s26, %s24
  %v28 = vstv %s22
  %29 = vst [vmem:[#allocation2] sm:$0x1] %v28
  $region1: #{forward.1} parent=0
    #allocation3 [shape = 'u8[16384]{0}', space=vmem, size = 0x4000, scoped, tag = 'input window, operand 19, single buffered']
    #allocation4 [shape = 's32[1]{0}', space=sflag, size = 0x4, scoped, tag = 'scoped memory for forward.1']
    %30 = vsyncpa [#allocation4], 0
    // Predicated region
    $region2: #{forward.1} parent=1 // pred_check
      _
    $region3: #{forward.1} parent=1 // pred_check_branch
      %32 = sbr.rel (0) target = $region5
    $region4: #{forward.1} parent=1 // pred_region
      _
    $region5: #{forward.1} parent=1 // pred_fallthru
      _
    // Predicated region
    $region6: #{forward.1} parent=1 // pred_check
      _
    $region7: #{forward.1} parent=1 // pred_check_branch
      %34 = sbr.rel (0) target = $region9
    $region8: #{forward.1} parent=1 // pred_region
      _
    $region9: #{forward.1} parent=1 // pred_fallthru
      _
    // Predicated region
    $region10: #{forward.1} parent=1 // pred_check
      _
    $region11: #{forward.1} parent=1 // pred_check_branch
      %36 = sbr.rel (0) target = $region13
    $region12: #{forward.1} parent=1 // pred_region
      _
    $region13: #{forward.1} parent=1 // pred_fallthru
      _
    // Predicated region
    $region14: #{forward.1} parent=1 // pred_check
      _
    $region15: #{forward.1} parent=1 // pred_check_branch
      %38 = sbr.rel (0) target = $region17
    $region16: #{forward.1} parent=1 // pred_region
      _
    $region17: #{forward.1} parent=1 // pred_fallthru
      _
    // Predicated region
    $region18: #{forward.1} parent=1 // pred_check
      _
    $region19: #{forward.1} parent=1 // pred_check_branch
      %40 = sbr.rel (0) target = $region21
    $region20: #{forward.1} parent=1 // pred_region
      _
    $region21: #{forward.1} parent=1 // pred_fallthru
      _
    // Predicated region
    $region22: #{forward.1} parent=1 // pred_check
      _
    $region23: #{forward.1} parent=1 // pred_check_branch
      %42 = sbr.rel (0) target = $region25
    $region24: #{forward.1} parent=1 // pred_region
      _
    $region25: #{forward.1} parent=1 // pred_fallthru
      _
    // Predicated region
    $region26: #{forward.1} parent=1 // pred_check
      _
    $region27: #{forward.1} parent=1 // pred_check_branch
      %44 = sbr.rel (0) target = $region29
    $region28: #{forward.1} parent=1 // pred_region
      _
    $region29: #{forward.1} parent=1 // pred_fallthru
      _
    // Predicated region
    $region30: #{forward.1} parent=1 // pred_check
      _
    $region31: #{forward.1} parent=1 // pred_check_branch
      %46 = sbr.rel (0) target = $region33
    $region32: #{forward.1} parent=1 // pred_region
      _
    $region33: #{forward.1} parent=1 // pred_fallthru
      _
    // Predicated region
    $region34: #{forward.1} parent=1 // pred_check
      _
    $region35: #{forward.1} parent=1 // pred_check_branch
      %48 = sbr.rel (0) target = $region37
    $region36: #{forward.1} parent=1 // pred_region
      _
    $region37: #{forward.1} parent=1 // pred_fallthru
      _
    // Predicated region
    $region38: #{forward.1} parent=1 // pred_check
      _
    $region39: #{forward.1} parent=1 // pred_check_branch
      %50 = sbr.rel (0) target = $region41
    $region40: #{forward.1} parent=1 // pred_region
      _
    $region41: #{forward.1} parent=1 // pred_fallthru
      _
    // Predicated region
    $region42: #{forward.1} parent=1 // pred_check
      _
    $region43: #{forward.1} parent=1 // pred_check_branch
      %52 = sbr.rel (0) target = $region45
    $region44: #{forward.1} parent=1 // pred_region
      _
    $region45: #{forward.1} parent=1 // pred_fallthru
      _
    // Predicated region
    $region46: #{forward.1} parent=1 // pred_check
      _
    $region47: #{forward.1} parent=1 // pred_check_branch
      %54 = sbr.rel (0) target = $region49
    $region48: #{forward.1} parent=1 // pred_region
      _
    $region49: #{forward.1} parent=1 // pred_fallthru
      _
    // Predicated region
    $region50: #{forward.1} parent=1 // pred_check
      _
    $region51: #{forward.1} parent=1 // pred_check_branch
      %56 = sbr.rel (0) target = $region53
    $region52: #{forward.1} parent=1 // pred_region
      _
    $region53: #{forward.1} parent=1 // pred_fallthru
      _
    // Predicated region
    $region54: #{forward.1} parent=1 // pred_check
      _
    $region55: #{forward.1} parent=1 // pred_check_branch
      %58 = sbr.rel (0) target = $region57
    $region56: #{forward.1} parent=1 // pred_region
      _
    $region57: #{forward.1} parent=1 // pred_fallthru
      _
    // Predicated region
    $region58: #{forward.1} parent=1 // pred_check
      _
    $region59: #{forward.1} parent=1 // pred_check_branch
      %60 = sbr.rel (0) target = $region61
    $region60: #{forward.1} parent=1 // pred_region
      _
    $region61: #{forward.1} parent=1 // pred_fallthru
      _
    // Predicated region
    $region62: #{forward.1} parent=1 // pred_check
      _
    $region63: #{forward.1} parent=1 // pred_check_branch
      %62 = sbr.rel (0) target = $region65
    $region64: #{forward.1} parent=1 // pred_region
      _
    $region65: #{forward.1} parent=1 // pred_fallthru
      _
    // Predicated region
    $region66: #{forward.1} parent=1 // pred_check
      _
    $region67: #{forward.1} parent=1 // pred_check_branch
      %64 = sbr.rel (0) target = $region69
    $region68: #{forward.1} parent=1 // pred_region
      _
    $region69: #{forward.1} parent=1 // pred_fallthru
      _
    // Predicated region
    $region70: #{forward.1} parent=1 // pred_check
      _
    $region71: #{forward.1} parent=1 // pred_check_branch
      %66 = sbr.rel (0) target = $region73
    $region72: #{forward.1} parent=1 // pred_region
      _
    $region73: #{forward.1} parent=1 // pred_fallthru
      _
    // Predicated region
    $region74: #{forward.1} parent=1 // pred_check
      _
    $region75: #{forward.1} parent=1 // pred_check_branch
      %68 = sbr.rel (0) target = $region77
    $region76: #{forward.1} parent=1 // pred_region
      _
    $region77: #{forward.1} parent=1 // pred_fallthru
      _
    // Predicated region
    $region78: #{forward.1} parent=1 // pred_check
      _
    $region79: #{forward.1} parent=1 // pred_check_branch
      %70 = sbr.rel (0) target = $region81
    $region80: #{forward.1} parent=1 // pred_region
      %s72 = ssub.s32 512, 512
      %73 = vsyncadd [#allocation4], %s72
      %s74 = sshll.u32 [#allocation3], 4
      %s75 = int_to_ptr.vmem [resolvable:$true] %s74
      %80 = dma.hbm_to_vmem [thread:$0]  %s19, 512, %s75, [#allocation4], 128, 128, 8
    $region81: #{forward.1} parent=1 // pred_fallthru
      _
    // Predicated region
    $region82: #{forward.1} parent=1 // pred_check
      _
    $region83: #{forward.1} parent=1 // pred_check_branch
      %82 = sbr.rel (0) target = $region85
    $region84: #{forward.1} parent=1 // pred_region
      _
    $region85: #{forward.1} parent=1 // pred_fallthru
      _
    // Predicated region
    $region86: #{forward.1} parent=1 // pred_check
      _
    $region87: #{forward.1} parent=1 // pred_check_branch
      %84 = sbr.rel (0) target = $region89
    $region88: #{forward.1} parent=1 // pred_region
      _
    $region89: #{forward.1} parent=1 // pred_fallthru
      _
    // Predicated region
    $region90: #{forward.1} parent=1 // pred_check
      _
    $region91: #{forward.1} parent=1 // pred_check_branch
      %86 = sbr.rel (0) target = $region93
    $region92: #{forward.1} parent=1 // pred_region
      _
    $region93: #{forward.1} parent=1 // pred_fallthru
      _
    // Predicated region
    $region94: #{forward.1} parent=1 // pred_check
      _
    $region95: #{forward.1} parent=1 // pred_check_branch
      %88 = sbr.rel (0) target = $region97
    $region96: #{forward.1} parent=1 // pred_region
      %89 = dma.done [#allocation4], 512
    $region97: #{forward.1} parent=1 // pred_fallthru
      _
    %v90 = vld [vmem:[%s0] sm:$0xff]
    %v91 = vld [vmem:[%s0 + $0x8] sm:$0xff]
    %v92 = vld [vmem:[%s1] sm:$0xff]
    %v93 = vld [vmem:[%s1 + $0x8] sm:$0xff]
    %v94 = vld [vmem:[%s1 + $0x10] sm:$0xff]
    %v95 = vld [vmem:[%s1 + $0x18] sm:$0xff]
    %v96 = vld [vmem:[%s1 + $0x20] sm:$0xff]
    %v97 = vld [vmem:[%s1 + $0x28] sm:$0xff]
    %v98 = vld [vmem:[%s1 + $0x30] sm:$0xff]
    %v99 = vld [vmem:[%s1 + $0x38] sm:$0xff]
    %v100 = vld [vmem:[%s2] sm:$0x3]
    %v102 = vlaneseq
    %v103 = vshrl.u32 %v102, 7
    %v104 = vsub.s32 0, %v103
    %v105 = vrot.slane %v100, %v104
    %v106 = vlaneseq
    %v107 = vshrl.u32 %v106, 7
    %v108 = vsub.s32 1, %v107
    %v109 = vrot.slane %v100, %v108
    %vm112 = vcmask 261120
    %v114 = vsel %vm112, %v90, 0
    %v117 = vsel %vm112, %v91, 0
    %119 = vmatprep.subr.mxu0 0.0
    %120 = vmatpush1.msra.mxu0 0.0
    %121 = vmatprep.subr.mxu0 0.0
    %122 = vmatpush1.msra.mxu0 0.0
    %123 = vmatprep.subr.mxu0 0.0
    %124 = vmatpush1.msra.mxu0 0.0
    %125 = vmatprep.subr.mxu0 0.0
    %126 = vmatpush1.msra.mxu0 0.0
    %127 = vmatprep.subr.mxu0 0.0
    %128 = vmatpush1.msra.mxu0 0.0
    %129 = vmatprep.subr.mxu0 0.0
    %130 = vmatpush1.msra.mxu0 0.0
    %131 = vmatprep.subr.mxu0 0.0
    %132 = vmatpush1.msra.mxu0 0.0
    %133 = vmatprep.subr.mxu0 0.0
    %134 = vmatpush1.msra.mxu0 0.0
    %135 = vmatprep.subr.mxu0 0.0
    %136 = vmatpush1.msra.mxu0 0.0
    %137 = vmatprep.subr.mxu0 0.0
    %138 = vmatpush1.msra.mxu0 0.0
    %139 = vmatprep.subr.mxu0 0.0
    %140 = vmatpush1.msra.mxu0 0.0
    %141 = vmatprep.subr.mxu0 0.0
    %142 = vmatpush1.msra.mxu0 0.0
    %143 = vmatprep.subr.mxu0 %v99
    %144 = vmatpush1.msra.mxu0 %v98
    %145 = vmatprep.subr.mxu0 %v97
    %146 = vmatpush1.msra.mxu0 %v96
    %147 = vmatprep.subr.mxu0 %v95
    %148 = vmatpush1.msra.mxu0 %v94
    %149 = vmatprep.subr.mxu0 %v93
    %150 = vmatpush1.msra.mxu0 %v92
    %151 = vmatprep.subr.mxu0 0.0
    %152 = vmatpush2.msra.mxu0 0.0
    %153 = vmatprep.subr.mxu0 0.0
    %154 = vmatpush2.msra.mxu0 0.0
    %155 = vmatprep.subr.mxu0 0.0
    %156 = vmatpush2.msra.mxu0 0.0
    %157 = vmatprep.subr.mxu0 0.0
    %158 = vmatpush2.msra.mxu0 0.0
    %159 = vmatprep.subr.mxu0 0.0
    %160 = vmatpush2.msra.mxu0 0.0
    %161 = vmatprep.subr.mxu0 0.0
    %162 = vmatpush2.msra.mxu0 0.0
    %163 = vmatprep.subr.mxu0 0.0
    %164 = vmatpush2.msra.mxu0 0.0
    %165 = vmatprep.subr.mxu0 0.0
    %166 = vmatpush2.msra.mxu0 0.0
    %167 = vmatprep.subr.mxu0 0.0
    %168 = vmatpush2.msra.mxu0 0.0
    %169 = vmatprep.subr.mxu0 0.0
    %170 = vmatpush2.msra.mxu0 0.0
    %171 = vmatprep.subr.mxu0 0.0
    %172 = vmatpush2.msra.mxu0 0.0
    %173 = vmatprep.subr.mxu0 0.0
    %174 = vmatpush2.msra.mxu0 0.0
    %175 = vmatprep.subr.mxu0 0.0
    %176 = vmatpush2.msra.mxu0 0.0
    %177 = vmatprep.subr.mxu0 0.0
    %178 = vmatpush2.msra.mxu0 0.0
    %179 = vmatprep.subr.mxu0 0.0
    %180 = vmatpush2.msra.mxu0 0.0
    %181 = vmatprep.subr.mxu0 0.0
    %182 = vmatpush2.msra.mxu0 0.0
    %183 = vmatprep.mubr.f32.mxu0 0.0
    %184 = vmatmul.mubr.f32.gmra.mxu0 %v114
    %v185 = vpop.f32.mrf.mxu0
    %v186 = vadd.f32 %v105, %v185
    %v187 = vpop.f32.mrf.mxu0
    %v188 = vadd.f32 %v109, %v187
    %189 = vmatprep.mubr.f32.mxu0 0.0
    %190 = vmatmul.mubr.f32.gmra.mxu0 %v117
    %v191 = vpop.f32.mrf.mxu0
    %v192 = vadd.f32 %v105, %v191
    %v193 = vpop.f32.mrf.mxu0
    %v194 = vadd.f32 %v109, %v193
    %195 = vdwg.mxu0
    %v196 = vld [vmem:[%s3] sm:$0xff]
    %v197 = vld [vmem:[%s3 + $0x8] sm:$0xff]
    %v198 = vld [vmem:[%s3 + $0x10] sm:$0xff]
    %v199 = vld [vmem:[%s3 + $0x18] sm:$0xff]
    %v200 = vld [vmem:[%s3 + $0x20] sm:$0xff]
    %v201 = vld [vmem:[%s3 + $0x28] sm:$0xff]
    %v202 = vld [vmem:[%s3 + $0x30] sm:$0xff]
    %v203 = vld [vmem:[%s3 + $0x38] sm:$0xff]
    %v204 = vld [vmem:[%s3 + $0x40] sm:$0xff]
    %v205 = vld [vmem:[%s3 + $0x48] sm:$0xff]
    %v206 = vld [vmem:[%s3 + $0x50] sm:$0xff]
    %v207 = vld [vmem:[%s3 + $0x58] sm:$0xff]
    %v208 = vld [vmem:[%s3 + $0x60] sm:$0xff]
    %v209 = vld [vmem:[%s3 + $0x68] sm:$0xff]
    %v210 = vld [vmem:[%s3 + $0x70] sm:$0xff]
    %v211 = vld [vmem:[%s3 + $0x78] sm:$0xff]
    %v212 = vxor.u32 %v186, 2147483648
    %v213 = vxor.u32 %v188, 2147483648
    %v214 = vmul.f32 %v212, 1.442695
    %v215 = vpow.pop %v214
    %v216 = vmul.f32 %v213, 1.442695
    %v217 = vpow.pop %v216
    %v218 = vadd.f32 %v215, 1.0
    %v219 = vadd.f32 %v217, 1.0
    %v220 = vrcp.pop %v218
    %v221 = vmul.f32 1.0, %v220
    %v222 = vrcp.pop %v219
    %v223 = vmul.f32 1.0, %v222
    %v224 = vtanh.pop %v188
    %226 = vrot.lane.b32.xlu0 %v224, 64
    %v227 = vpop.permute.xlu0 %226
    %v229 = vmul.f32 %v221, %v227
    %v230 = vtanh.pop %v229
    %v231 = vmul.f32 %v223, %v230
    %vm232 = vcmask 523264
    %v234 = vsel %vm232, %v231, 0
    %236 = vmatprep.subr.mxu0 0.0
    %237 = vmatpush1.msra.mxu0 0.0
    %238 = vmatprep.subr.mxu0 0.0
    %239 = vmatpush1.msra.mxu0 0.0
    %240 = vmatprep.subr.mxu0 0.0
    %241 = vmatpush1.msra.mxu0 0.0
    %242 = vmatprep.subr.mxu0 0.0
    %243 = vmatpush1.msra.mxu0 0.0
    %244 = vmatprep.subr.mxu0 0.0
    %245 = vmatpush1.msra.mxu0 0.0
    %246 = vmatprep.subr.mxu0 0.0
    %247 = vmatpush1.msra.mxu0 0.0
    %248 = vmatprep.subr.mxu0 0.0
    %249 = vmatpush1.msra.mxu0 0.0
    %250 = vmatprep.subr.mxu0 0.0
    %251 = vmatpush1.msra.mxu0 0.0
    %252 = vmatprep.subr.mxu0 %v211
    %253 = vmatpush1.msra.mxu0 %v210
    %254 = vmatprep.subr.mxu0 %v209
    %255 = vmatpush1.msra.mxu0 %v208
    %256 = vmatprep.subr.mxu0 %v207
    %257 = vmatpush1.msra.mxu0 %v206
    %258 = vmatprep.subr.mxu0 %v205
    %259 = vmatpush1.msra.mxu0 %v204
    %260 = vmatprep.subr.mxu0 %v203
    %261 = vmatpush1.msra.mxu0 %v202
    %262 = vmatprep.subr.mxu0 %v201
    %263 = vmatpush1.msra.mxu0 %v200
    %264 = vmatprep.subr.mxu0 %v199
    %265 = vmatpush1.msra.mxu0 %v198
    %266 = vmatprep.subr.mxu0 %v197
    %267 = vmatpush1.msra.mxu0 %v196
    %268 = vmatprep.subr.mxu0 0.0
    %269 = vmatpush2.msra.mxu0 0.0
    %270 = vmatprep.subr.mxu0 0.0
    %271 = vmatpush2.msra.mxu0 0.0
    %272 = vmatprep.subr.mxu0 0.0
    %273 = vmatpush2.msra.mxu0 0.0
    %274 = vmatprep.subr.mxu0 0.0
    %275 = vmatpush2.msra.mxu0 0.0
    %276 = vmatprep.subr.mxu0 0.0
    %277 = vmatpush2.msra.mxu0 0.0
    %278 = vmatprep.subr.mxu0 0.0
    %279 = vmatpush2.msra.mxu0 0.0
    %280 = vmatprep.subr.mxu0 0.0
    %281 = vmatpush2.msra.mxu0 0.0
    %282 = vmatprep.subr.mxu0 0.0
    %283 = vmatpush2.msra.mxu0 0.0
    %284 = vmatprep.subr.mxu0 0.0
    %285 = vmatpush2.msra.mxu0 0.0
    %286 = vmatprep.subr.mxu0 0.0
    %287 = vmatpush2.msra.mxu0 0.0
    %288 = vmatprep.subr.mxu0 0.0
    %289 = vmatpush2.msra.mxu0 0.0
    %290 = vmatprep.subr.mxu0 0.0
    %291 = vmatpush2.msra.mxu0 0.0
    %292 = vmatprep.subr.mxu0 0.0
    %293 = vmatpush2.msra.mxu0 0.0
    %294 = vmatprep.subr.mxu0 0.0
    %295 = vmatpush2.msra.mxu0 0.0
    %296 = vmatprep.subr.mxu0 0.0
    %297 = vmatpush2.msra.mxu0 0.0
    %298 = vmatprep.subr.mxu0 0.0
    %299 = vmatpush2.msra.mxu0 0.0
    %300 = vmatprep.mubr.f32.mxu0 0.0
    %301 = vmatmul.mubr.f32.gmra.mxu0 %v234
    %v302 = vpop.f32.mrf.mxu0
    %v303 = vadd.f32 0.0, %v302
    %v304 = vpop.f32.mrf.mxu0
    %v305 = vadd.f32 0.0, %v304
    %306 = vdwg.mxu0
    %v309 = vrot.slane %v303, 6
    %v310 = vrot.slane %v305, 6
    %v313 = vadd.f32 %v186, %v309
    %v314 = vadd.f32 %v188, %v310
    %v315 = vxor.u32 %v313, 2147483648
    %v316 = vxor.u32 %v314, 2147483648
    %v317 = vmul.f32 %v315, 1.442695
    %v318 = vpow.pop %v317
    %v319 = vmul.f32 %v316, 1.442695
    %v320 = vpow.pop %v319
    %v321 = vadd.f32 %v318, 1.0
    %v322 = vadd.f32 %v320, 1.0
    %v323 = vrcp.pop %v321
    %v324 = vmul.f32 1.0, %v323
    %v325 = vrcp.pop %v322
    %v326 = vmul.f32 1.0, %v325
    %v327 = vtanh.pop %v314
    %v329 = vrot.slane %v229, 6
    %330 = vrot.lane.b32.xlu0 %v329, 64
    %v331 = vpop.permute.xlu0 %330
    %v333 = vmul.f32 %v324, %v331
    %335 = vrot.lane.b32.xlu0 %v327, 64
    %v336 = vpop.permute.xlu0 %335
    %v338 = vmul.f32 %v324, %v336
    %340 = vrot.lane.b32.xlu0 %v338, 64
    %v341 = vpop.permute.xlu0 %340
    %v343 = vadd.f32 %v333, %v341
    %v344 = vtanh.pop %v343
    %346 = vrot.lane.b32.xlu0 %v344, 64
    %v347 = vpop.permute.xlu0 %346
    %v349 = vmul.f32 %v326, %v347
    %v351 = vrot.slane %v349, 2
    %v352 = vsel %vm232, %v351, 0
    %354 = vmatprep.subr.mxu0 0.0
    %355 = vmatpush1.msra.mxu0 0.0
    %356 = vmatprep.subr.mxu0 0.0
    %357 = vmatpush1.msra.mxu0 0.0
    %358 = vmatprep.subr.mxu0 0.0
    %359 = vmatpush1.msra.mxu0 0.0
    %360 = vmatprep.subr.mxu0 0.0
    %361 = vmatpush1.msra.mxu0 0.0
    %362 = vmatprep.subr.mxu0 0.0
    %363 = vmatpush1.msra.mxu0 0.0
    %364 = vmatprep.subr.mxu0 0.0
    %365 = vmatpush1.msra.mxu0 0.0
    %366 = vmatprep.subr.mxu0 0.0
    %367 = vmatpush1.msra.mxu0 0.0
    %368 = vmatprep.subr.mxu0 0.0
    %369 = vmatpush1.msra.mxu0 0.0
    %370 = vmatprep.subr.mxu0 %v211
    %371 = vmatpush1.msra.mxu0 %v210
    %372 = vmatprep.subr.mxu0 %v209
    %373 = vmatpush1.msra.mxu0 %v208
    %374 = vmatprep.subr.mxu0 %v207
    %375 = vmatpush1.msra.mxu0 %v206
    %376 = vmatprep.subr.mxu0 %v205
    %377 = vmatpush1.msra.mxu0 %v204
    %378 = vmatprep.subr.mxu0 %v203
    %379 = vmatpush1.msra.mxu0 %v202
    %380 = vmatprep.subr.mxu0 %v201
    %381 = vmatpush1.msra.mxu0 %v200
    %382 = vmatprep.subr.mxu0 %v199
    %383 = vmatpush1.msra.mxu0 %v198
    %384 = vmatprep.subr.mxu0 %v197
    %385 = vmatpush1.msra.mxu0 %v196
    %386 = vmatprep.subr.mxu0 0.0
    %387 = vmatpush2.msra.mxu0 0.0
    %388 = vmatprep.subr.mxu0 0.0
    %389 = vmatpush2.msra.mxu0 0.0
    %390 = vmatprep.subr.mxu0 0.0
    %391 = vmatpush2.msra.mxu0 0.0
    %392 = vmatprep.subr.mxu0 0.0
    %393 = vmatpush2.msra.mxu0 0.0
    %394 = vmatprep.subr.mxu0 0.0
    %395 = vmatpush2.msra.mxu0 0.0
    %396 = vmatprep.subr.mxu0 0.0
    %397 = vmatpush2.msra.mxu0 0.0
    %398 = vmatprep.subr.mxu0 0.0
    %399 = vmatpush2.msra.mxu0 0.0
    %400 = vmatprep.subr.mxu0 0.0
    %401 = vmatpush2.msra.mxu0 0.0
    %402 = vmatprep.subr.mxu0 0.0
    %403 = vmatpush2.msra.mxu0 0.0
    %404 = vmatprep.subr.mxu0 0.0
    %405 = vmatpush2.msra.mxu0 0.0
    %406 = vmatprep.subr.mxu0 0.0
    %407 = vmatpush2.msra.mxu0 0.0
    %408 = vmatprep.subr.mxu0 0.0
    %409 = vmatpush2.msra.mxu0 0.0
    %410 = vmatprep.subr.mxu0 0.0
    %411 = vmatpush2.msra.mxu0 0.0
    %412 = vmatprep.subr.mxu0 0.0
    %413 = vmatpush2.msra.mxu0 0.0
    %414 = vmatprep.subr.mxu0 0.0
    %415 = vmatpush2.msra.mxu0 0.0
    %416 = vmatprep.subr.mxu0 0.0
    %417 = vmatpush2.msra.mxu0 0.0
    %418 = vmatprep.mubr.f32.mxu0 0.0
    %419 = vmatmul.mubr.f32.gmra.mxu0 %v352
    %v420 = vpop.f32.mrf.mxu0
    %v421 = vadd.f32 0.0, %v420
    %v422 = vpop.f32.mrf.mxu0
    %v423 = vadd.f32 0.0, %v422
    %424 = vdwg.mxu0
    %v427 = vrot.slane %v421, 4
    %v428 = vrot.slane %v423, 4
    %v431 = vadd.f32 %v186, %v427
    %v432 = vadd.f32 %v188, %v428
    %v433 = vxor.u32 %v431, 2147483648
    %v434 = vxor.u32 %v432, 2147483648
    %v435 = vmul.f32 %v433, 1.442695
    %v436 = vpow.pop %v435
    %v437 = vmul.f32 %v434, 1.442695
    %v438 = vpow.pop %v437
    %v439 = vadd.f32 %v436, 1.0
    %v440 = vadd.f32 %v438, 1.0
    %v441 = vrcp.pop %v439
    %v442 = vmul.f32 1.0, %v441
    %v443 = vrcp.pop %v440
    %v444 = vmul.f32 1.0, %v443
    %v445 = vtanh.pop %v432
    %v447 = vrot.slane %v343, 6
    %v449 = vmul.f32 %v442, %v447
    %451 = vrot.lane.b32.xlu0 %v445, 64
    %v452 = vpop.permute.xlu0 %451
    %v454 = vmul.f32 %v442, %v452
    %456 = vrot.lane.b32.xlu0 %v454, 64
    %v457 = vpop.permute.xlu0 %456
    %v459 = vadd.f32 %v449, %v457
    %v460 = vtanh.pop %v459
    %462 = vrot.lane.b32.xlu0 %v460, 64
    %v463 = vpop.permute.xlu0 %462
    %v465 = vmul.f32 %v444, %v463
    %v467 = vrot.slane %v465, 4
    %v468 = vsel %vm232, %v467, 0
    %470 = vmatprep.subr.mxu0 0.0
    %471 = vmatpush1.msra.mxu0 0.0
    %472 = vmatprep.subr.mxu0 0.0
    %473 = vmatpush1.msra.mxu0 0.0
    %474 = vmatprep.subr.mxu0 0.0
    %475 = vmatpush1.msra.mxu0 0.0
    %476 = vmatprep.subr.mxu0 0.0
    %477 = vmatpush1.msra.mxu0 0.0
    %478 = vmatprep.subr.mxu0 0.0
    %479 = vmatpush1.msra.mxu0 0.0
    %480 = vmatprep.subr.mxu0 0.0
    %481 = vmatpush1.msra.mxu0 0.0
    %482 = vmatprep.subr.mxu0 0.0
    %483 = vmatpush1.msra.mxu0 0.0
    %484 = vmatprep.subr.mxu0 0.0
    %485 = vmatpush1.msra.mxu0 0.0
    %486 = vmatprep.subr.mxu0 %v211
    %487 = vmatpush1.msra.mxu0 %v210
    %488 = vmatprep.subr.mxu0 %v209
    %489 = vmatpush1.msra.mxu0 %v208
    %490 = vmatprep.subr.mxu0 %v207
    %491 = vmatpush1.msra.mxu0 %v206
    %492 = vmatprep.subr.mxu0 %v205
    %493 = vmatpush1.msra.mxu0 %v204
    %494 = vmatprep.subr.mxu0 %v203
    %495 = vmatpush1.msra.mxu0 %v202
    %496 = vmatprep.subr.mxu0 %v201
    %497 = vmatpush1.msra.mxu0 %v200
    %498 = vmatprep.subr.mxu0 %v199
    %499 = vmatpush1.msra.mxu0 %v198
    %500 = vmatprep.subr.mxu0 %v197
    %501 = vmatpush1.msra.mxu0 %v196
    %502 = vmatprep.subr.mxu0 0.0
    %503 = vmatpush2.msra.mxu0 0.0
    %504 = vmatprep.subr.mxu0 0.0
    %505 = vmatpush2.msra.mxu0 0.0
    %506 = vmatprep.subr.mxu0 0.0
    %507 = vmatpush2.msra.mxu0 0.0
    %508 = vmatprep.subr.mxu0 0.0
    %509 = vmatpush2.msra.mxu0 0.0
    %510 = vmatprep.subr.mxu0 0.0
    %511 = vmatpush2.msra.mxu0 0.0
    %512 = vmatprep.subr.mxu0 0.0
    %513 = vmatpush2.msra.mxu0 0.0
    %514 = vmatprep.subr.mxu0 0.0
    %515 = vmatpush2.msra.mxu0 0.0
    %516 = vmatprep.subr.mxu0 0.0
    %517 = vmatpush2.msra.mxu0 0.0
    %518 = vmatprep.subr.mxu0 0.0
    %519 = vmatpush2.msra.mxu0 0.0
    %520 = vmatprep.subr.mxu0 0.0
    %521 = vmatpush2.msra.mxu0 0.0
    %522 = vmatprep.subr.mxu0 0.0
    %523 = vmatpush2.msra.mxu0 0.0
    %524 = vmatprep.subr.mxu0 0.0
    %525 = vmatpush2.msra.mxu0 0.0
    %526 = vmatprep.subr.mxu0 0.0
    %527 = vmatpush2.msra.mxu0 0.0
    %528 = vmatprep.subr.mxu0 0.0
    %529 = vmatpush2.msra.mxu0 0.0
    %530 = vmatprep.subr.mxu0 0.0
    %531 = vmatpush2.msra.mxu0 0.0
    %532 = vmatprep.subr.mxu0 0.0
    %533 = vmatpush2.msra.mxu0 0.0
    %534 = vmatprep.mubr.f32.mxu0 0.0
    %535 = vmatmul.mubr.f32.gmra.mxu0 %v468
    %v536 = vpop.f32.mrf.mxu0
    %v537 = vadd.f32 0.0, %v536
    %v538 = vpop.f32.mrf.mxu0
    %v539 = vadd.f32 0.0, %v538
    %540 = vdwg.mxu0
    %v543 = vrot.slane %v537, 2
    %v544 = vrot.slane %v539, 2
    %v547 = vadd.f32 %v186, %v543
    %v548 = vadd.f32 %v188, %v544
    %v549 = vxor.u32 %v547, 2147483648
    %v550 = vxor.u32 %v548, 2147483648
    %v551 = vmul.f32 %v549, 1.442695
    %v552 = vpow.pop %v551
    %v553 = vmul.f32 %v550, 1.442695
    %v554 = vpow.pop %v553
    %v555 = vadd.f32 %v552, 1.0
    %v556 = vadd.f32 %v554, 1.0
    %v557 = vrcp.pop %v555
    %v558 = vmul.f32 1.0, %v557
    %v559 = vrcp.pop %v556
    %v560 = vmul.f32 1.0, %v559
    %v561 = vtanh.pop %v548
    %v563 = vrot.slane %v459, 6
    %v565 = vmul.f32 %v558, %v563
    %567 = vrot.lane.b32.xlu0 %v561, 64
    %v568 = vpop.permute.xlu0 %567
    %v570 = vmul.f32 %v558, %v568
    %572 = vrot.lane.b32.xlu0 %v570, 64
    %v573 = vpop.permute.xlu0 %572
    %v575 = vadd.f32 %v565, %v573
    %v576 = vtanh.pop %v575
    %578 = vrot.lane.b32.xlu0 %v576, 64
    %v579 = vpop.permute.xlu0 %578
    %v581 = vmul.f32 %v560, %v579
    %v583 = vrot.slane %v581, 6
    %v584 = vsel %vm232, %v583, 0
    %586 = vmatprep.subr.mxu0 0.0
    %587 = vmatpush1.msra.mxu0 0.0
    %588 = vmatprep.subr.mxu0 0.0
    %589 = vmatpush1.msra.mxu0 0.0
    %590 = vmatprep.subr.mxu0 0.0
    %591 = vmatpush1.msra.mxu0 0.0
    %592 = vmatprep.subr.mxu0 0.0
    %593 = vmatpush1.msra.mxu0 0.0
    %594 = vmatprep.subr.mxu0 0.0
    %595 = vmatpush1.msra.mxu0 0.0
    %596 = vmatprep.subr.mxu0 0.0
    %597 = vmatpush1.msra.mxu0 0.0
    %598 = vmatprep.subr.mxu0 0.0
    %599 = vmatpush1.msra.mxu0 0.0
    %600 = vmatprep.subr.mxu0 0.0
    %601 = vmatpush1.msra.mxu0 0.0
    %602 = vmatprep.subr.mxu0 %v211
    %603 = vmatpush1.msra.mxu0 %v210
    %604 = vmatprep.subr.mxu0 %v209
    %605 = vmatpush1.msra.mxu0 %v208
    %606 = vmatprep.subr.mxu0 %v207
    %607 = vmatpush1.msra.mxu0 %v206
    %608 = vmatprep.subr.mxu0 %v205
    %609 = vmatpush1.msra.mxu0 %v204
    %610 = vmatprep.subr.mxu0 %v203
    %611 = vmatpush1.msra.mxu0 %v202
    %612 = vmatprep.subr.mxu0 %v201
    %613 = vmatpush1.msra.mxu0 %v200
    %614 = vmatprep.subr.mxu0 %v199
    %615 = vmatpush1.msra.mxu0 %v198
    %616 = vmatprep.subr.mxu0 %v197
    %617 = vmatpush1.msra.mxu0 %v196
    %618 = vmatprep.subr.mxu0 0.0
    %619 = vmatpush2.msra.mxu0 0.0
    %620 = vmatprep.subr.mxu0 0.0
    %621 = vmatpush2.msra.mxu0 0.0
    %622 = vmatprep.subr.mxu0 0.0
    %623 = vmatpush2.msra.mxu0 0.0
    %624 = vmatprep.subr.mxu0 0.0
    %625 = vmatpush2.msra.mxu0 0.0
    %626 = vmatprep.subr.mxu0 0.0
    %627 = vmatpush2.msra.mxu0 0.0
    %628 = vmatprep.subr.mxu0 0.0
    %629 = vmatpush2.msra.mxu0 0.0
    %630 = vmatprep.subr.mxu0 0.0
    %631 = vmatpush2.msra.mxu0 0.0
    %632 = vmatprep.subr.mxu0 0.0
    %633 = vmatpush2.msra.mxu0 0.0
    %634 = vmatprep.subr.mxu0 0.0
    %635 = vmatpush2.msra.mxu0 0.0
    %636 = vmatprep.subr.mxu0 0.0
    %637 = vmatpush2.msra.mxu0 0.0
    %638 = vmatprep.subr.mxu0 0.0
    %639 = vmatpush2.msra.mxu0 0.0
    %640 = vmatprep.subr.mxu0 0.0
    %641 = vmatpush2.msra.mxu0 0.0
    %642 = vmatprep.subr.mxu0 0.0
    %643 = vmatpush2.msra.mxu0 0.0
    %644 = vmatprep.subr.mxu0 0.0
    %645 = vmatpush2.msra.mxu0 0.0
    %646 = vmatprep.subr.mxu0 0.0
    %647 = vmatpush2.msra.mxu0 0.0
    %648 = vmatprep.subr.mxu0 0.0
    %649 = vmatpush2.msra.mxu0 0.0
    %650 = vmatprep.mubr.f32.mxu0 0.0
    %651 = vmatmul.mubr.f32.gmra.mxu0 %v584
    %v652 = vpop.f32.mrf.mxu0
    %v653 = vadd.f32 0.0, %v652
    %v654 = vpop.f32.mrf.mxu0
    %v655 = vadd.f32 0.0, %v654
    %656 = vdwg.mxu0
    %v657 = vadd.f32 %v192, %v653
    %v658 = vadd.f32 %v194, %v655
    %v659 = vxor.u32 %v657, 2147483648
    %v660 = vxor.u32 %v658, 2147483648
    %v661 = vmul.f32 %v659, 1.442695
    %v662 = vpow.pop %v661
    %v663 = vmul.f32 %v660, 1.442695
    %v664 = vpow.pop %v663
    %v665 = vadd.f32 %v662, 1.0
    %v666 = vadd.f32 %v664, 1.0
    %v667 = vrcp.pop %v665
    %v668 = vmul.f32 1.0, %v667
    %v669 = vrcp.pop %v666
    %v670 = vmul.f32 1.0, %v669
    %v671 = vtanh.pop %v658
    %v673 = vrot.slane %v575, 6
    %v675 = vmul.f32 %v668, %v673
    %677 = vrot.lane.b32.xlu0 %v671, 64
    %v678 = vpop.permute.xlu0 %677
    %v680 = vmul.f32 %v668, %v678
    %682 = vrot.lane.b32.xlu0 %v680, 64
    %v683 = vpop.permute.xlu0 %682
    %v685 = vadd.f32 %v675, %v683
    %v686 = vtanh.pop %v685
    %688 = vrot.lane.b32.xlu0 %v686, 64
    %v689 = vpop.permute.xlu0 %688
    %v691 = vmul.f32 %v670, %v689
    %v693 = vsel %vm232, %v691, 0
    %695 = vmatprep.subr.mxu0 0.0
    %696 = vmatpush1.msra.mxu0 0.0
    %697 = vmatprep.subr.mxu0 0.0
    %698 = vmatpush1.msra.mxu0 0.0
    %699 = vmatprep.subr.mxu0 0.0
    %700 = vmatpush1.msra.mxu0 0.0
    %701 = vmatprep.subr.mxu0 0.0
    %702 = vmatpush1.msra.mxu0 0.0
    %703 = vmatprep.subr.mxu0 0.0
    %704 = vmatpush1.msra.mxu0 0.0
    %705 = vmatprep.subr.mxu0 0.0
    %706 = vmatpush1.msra.mxu0 0.0
    %707 = vmatprep.subr.mxu0 0.0
    %708 = vmatpush1.msra.mxu0 0.0
    %709 = vmatprep.subr.mxu0 0.0
    %710 = vmatpush1.msra.mxu0 0.0
    %711 = vmatprep.subr.mxu0 %v211
    %712 = vmatpush1.msra.mxu0 %v210
    %713 = vmatprep.subr.mxu0 %v209
    %714 = vmatpush1.msra.mxu0 %v208
    %715 = vmatprep.subr.mxu0 %v207
    %716 = vmatpush1.msra.mxu0 %v206
    %717 = vmatprep.subr.mxu0 %v205
    %718 = vmatpush1.msra.mxu0 %v204
    %719 = vmatprep.subr.mxu0 %v203
    %720 = vmatpush1.msra.mxu0 %v202
    %721 = vmatprep.subr.mxu0 %v201
    %722 = vmatpush1.msra.mxu0 %v200
    %723 = vmatprep.subr.mxu0 %v199
    %724 = vmatpush1.msra.mxu0 %v198
    %725 = vmatprep.subr.mxu0 %v197
    %726 = vmatpush1.msra.mxu0 %v196
    %727 = vmatprep.subr.mxu0 0.0
    %728 = vmatpush2.msra.mxu0 0.0
    %729 = vmatprep.subr.mxu0 0.0
    %730 = vmatpush2.msra.mxu0 0.0
    %731 = vmatprep.subr.mxu0 0.0
    %732 = vmatpush2.msra.mxu0 0.0
    %733 = vmatprep.subr.mxu0 0.0
    %734 = vmatpush2.msra.mxu0 0.0
    %735 = vmatprep.subr.mxu0 0.0
    %736 = vmatpush2.msra.mxu0 0.0
    %737 = vmatprep.subr.mxu0 0.0
    %738 = vmatpush2.msra.mxu0 0.0
    %739 = vmatprep.subr.mxu0 0.0
    %740 = vmatpush2.msra.mxu0 0.0
    %741 = vmatprep.subr.mxu0 0.0
    %742 = vmatpush2.msra.mxu0 0.0
    %743 = vmatprep.subr.mxu0 0.0
    %744 = vmatpush2.msra.mxu0 0.0
    %745 = vmatprep.subr.mxu0 0.0
    %746 = vmatpush2.msra.mxu0 0.0
    %747 = vmatprep.subr.mxu0 0.0
    %748 = vmatpush2.msra.mxu0 0.0
    %749 = vmatprep.subr.mxu0 0.0
    %750 = vmatpush2.msra.mxu0 0.0
    %751 = vmatprep.subr.mxu0 0.0
    %752 = vmatpush2.msra.mxu0 0.0
    %753 = vmatprep.subr.mxu0 0.0
    %754 = vmatpush2.msra.mxu0 0.0
    %755 = vmatprep.subr.mxu0 0.0
    %756 = vmatpush2.msra.mxu0 0.0
    %757 = vmatprep.subr.mxu0 0.0
    %758 = vmatpush2.msra.mxu0 0.0
    %759 = vmatprep.mubr.f32.mxu0 0.0
    %760 = vmatmul.mubr.f32.gmra.mxu0 %v693
    %v761 = vpop.f32.mrf.mxu0
    %v762 = vadd.f32 0.0, %v761
    %v763 = vpop.f32.mrf.mxu0
    %v764 = vadd.f32 0.0, %v763
    %765 = vdwg.mxu0
    %v768 = vrot.slane %v762, 6
    %v769 = vrot.slane %v764, 6
    %v772 = vadd.f32 %v192, %v768
    %v773 = vadd.f32 %v194, %v769
    %v774 = vxor.u32 %v772, 2147483648
    %v775 = vxor.u32 %v773, 2147483648
    %v776 = vmul.f32 %v774, 1.442695
    %v777 = vpow.pop %v776
    %v778 = vmul.f32 %v775, 1.442695
    %v779 = vpow.pop %v778
    %v780 = vadd.f32 %v777, 1.0
    %v781 = vadd.f32 %v779, 1.0
    %v782 = vrcp.pop %v780
    %v783 = vmul.f32 1.0, %v782
    %v784 = vrcp.pop %v781
    %v785 = vmul.f32 1.0, %v784
    %v786 = vtanh.pop %v773
    %v788 = vrot.slane %v685, 6
    %v790 = vmul.f32 %v783, %v788
    %792 = vrot.lane.b32.xlu0 %v786, 64
    %v793 = vpop.permute.xlu0 %792
    %v795 = vmul.f32 %v783, %v793
    %797 = vrot.lane.b32.xlu0 %v795, 64
    %v798 = vpop.permute.xlu0 %797
    %v800 = vadd.f32 %v790, %v798
    %v801 = vtanh.pop %v800
    %803 = vrot.lane.b32.xlu0 %v801, 64
    %v804 = vpop.permute.xlu0 %803
    %v806 = vmul.f32 %v785, %v804
    %v808 = vrot.slane %v806, 2
    %v809 = vsel %vm232, %v808, 0
    %811 = vmatprep.subr.mxu0 0.0
    %812 = vmatpush1.msra.mxu0 0.0
    %813 = vmatprep.subr.mxu0 0.0
    %814 = vmatpush1.msra.mxu0 0.0
    %815 = vmatprep.subr.mxu0 0.0
    %816 = vmatpush1.msra.mxu0 0.0
    %817 = vmatprep.subr.mxu0 0.0
    %818 = vmatpush1.msra.mxu0 0.0
    %819 = vmatprep.subr.mxu0 0.0
    %820 = vmatpush1.msra.mxu0 0.0
    %821 = vmatprep.subr.mxu0 0.0
    %822 = vmatpush1.msra.mxu0 0.0
    %823 = vmatprep.subr.mxu0 0.0
    %824 = vmatpush1.msra.mxu0 0.0
    %825 = vmatprep.subr.mxu0 0.0
    %826 = vmatpush1.msra.mxu0 0.0
    %827 = vmatprep.subr.mxu0 %v211
    %828 = vmatpush1.msra.mxu0 %v210
    %829 = vmatprep.subr.mxu0 %v209
    %830 = vmatpush1.msra.mxu0 %v208
    %831 = vmatprep.subr.mxu0 %v207
    %832 = vmatpush1.msra.mxu0 %v206
    %833 = vmatprep.subr.mxu0 %v205
    %834 = vmatpush1.msra.mxu0 %v204
    %835 = vmatprep.subr.mxu0 %v203
    %836 = vmatpush1.msra.mxu0 %v202
    %837 = vmatprep.subr.mxu0 %v201
    %838 = vmatpush1.msra.mxu0 %v200
    %839 = vmatprep.subr.mxu0 %v199
    %840 = vmatpush1.msra.mxu0 %v198
    %841 = vmatprep.subr.mxu0 %v197
    %842 = vmatpush1.msra.mxu0 %v196
    %843 = vmatprep.subr.mxu0 0.0
    %844 = vmatpush2.msra.mxu0 0.0
    %845 = vmatprep.subr.mxu0 0.0
    %846 = vmatpush2.msra.mxu0 0.0
    %847 = vmatprep.subr.mxu0 0.0
    %848 = vmatpush2.msra.mxu0 0.0
    %849 = vmatprep.subr.mxu0 0.0
    %850 = vmatpush2.msra.mxu0 0.0
    %851 = vmatprep.subr.mxu0 0.0
    %852 = vmatpush2.msra.mxu0 0.0
    %853 = vmatprep.subr.mxu0 0.0
    %854 = vmatpush2.msra.mxu0 0.0
    %855 = vmatprep.subr.mxu0 0.0
    %856 = vmatpush2.msra.mxu0 0.0
    %857 = vmatprep.subr.mxu0 0.0
    %858 = vmatpush2.msra.mxu0 0.0
    %859 = vmatprep.subr.mxu0 0.0
    %860 = vmatpush2.msra.mxu0 0.0
    %861 = vmatprep.subr.mxu0 0.0
    %862 = vmatpush2.msra.mxu0 0.0
    %863 = vmatprep.subr.mxu0 0.0
    %864 = vmatpush2.msra.mxu0 0.0
    %865 = vmatprep.subr.mxu0 0.0
    %866 = vmatpush2.msra.mxu0 0.0
    %867 = vmatprep.subr.mxu0 0.0
    %868 = vmatpush2.msra.mxu0 0.0
    %869 = vmatprep.subr.mxu0 0.0
    %870 = vmatpush2.msra.mxu0 0.0
    %871 = vmatprep.subr.mxu0 0.0
    %872 = vmatpush2.msra.mxu0 0.0
    %873 = vmatprep.subr.mxu0 0.0
    %874 = vmatpush2.msra.mxu0 0.0
    %875 = vmatprep.mubr.f32.mxu0 0.0
    %876 = vmatmul.mubr.f32.gmra.mxu0 %v809
    %v877 = vpop.f32.mrf.mxu0
    %v878 = vadd.f32 0.0, %v877
    %v879 = vpop.f32.mrf.mxu0
    %v880 = vadd.f32 0.0, %v879
    %881 = vdwg.mxu0
    %v884 = vrot.slane %v878, 4
    %v885 = vrot.slane %v880, 4
    %v888 = vadd.f32 %v192, %v884
    %v889 = vadd.f32 %v194, %v885
    %v890 = vxor.u32 %v888, 2147483648
    %v891 = vxor.u32 %v889, 2147483648
    %v892 = vmul.f32 %v890, 1.442695
    %v893 = vpow.pop %v892
    %v894 = vmul.f32 %v891, 1.442695
    %v895 = vpow.pop %v894
    %v896 = vadd.f32 %v893, 1.0
    %v897 = vadd.f32 %v895, 1.0
    %v898 = vrcp.pop %v896
    %v899 = vmul.f32 1.0, %v898
    %v900 = vrcp.pop %v897
    %v901 = vmul.f32 1.0, %v900
    %v902 = vtanh.pop %v889
    %v904 = vrot.slane %v800, 6
    %v906 = vmul.f32 %v899, %v904
    %908 = vrot.lane.b32.xlu0 %v902, 64
    %v909 = vpop.permute.xlu0 %908
    %v911 = vmul.f32 %v899, %v909
    %913 = vrot.lane.b32.xlu0 %v911, 64
    %v914 = vpop.permute.xlu0 %913
    %v916 = vadd.f32 %v906, %v914
    %v917 = vtanh.pop %v916
    %919 = vrot.lane.b32.xlu0 %v917, 64
    %v920 = vpop.permute.xlu0 %919
    %v922 = vmul.f32 %v901, %v920
    %v924 = vrot.slane %v922, 4
    %v925 = vsel %vm232, %v924, 0
    %927 = vmatprep.subr.mxu0 0.0
    %928 = vmatpush1.msra.mxu0 0.0
    %929 = vmatprep.subr.mxu0 0.0
    %930 = vmatpush1.msra.mxu0 0.0
    %931 = vmatprep.subr.mxu0 0.0
    %932 = vmatpush1.msra.mxu0 0.0
    %933 = vmatprep.subr.mxu0 0.0
    %934 = vmatpush1.msra.mxu0 0.0
    %935 = vmatprep.subr.mxu0 0.0
    %936 = vmatpush1.msra.mxu0 0.0
    %937 = vmatprep.subr.mxu0 0.0
    %938 = vmatpush1.msra.mxu0 0.0
    %939 = vmatprep.subr.mxu0 0.0
    %940 = vmatpush1.msra.mxu0 0.0
    %941 = vmatprep.subr.mxu0 0.0
    %942 = vmatpush1.msra.mxu0 0.0
    %943 = vmatprep.subr.mxu0 %v211
    %944 = vmatpush1.msra.mxu0 %v210
    %945 = vmatprep.subr.mxu0 %v209
    %946 = vmatpush1.msra.mxu0 %v208
    %947 = vmatprep.subr.mxu0 %v207
    %948 = vmatpush1.msra.mxu0 %v206
    %949 = vmatprep.subr.mxu0 %v205
    %950 = vmatpush1.msra.mxu0 %v204
    %951 = vmatprep.subr.mxu0 %v203
    %952 = vmatpush1.msra.mxu0 %v202
    %953 = vmatprep.subr.mxu0 %v201
    %954 = vmatpush1.msra.mxu0 %v200
    %955 = vmatprep.subr.mxu0 %v199
    %956 = vmatpush1.msra.mxu0 %v198
    %957 = vmatprep.subr.mxu0 %v197
    %958 = vmatpush1.msra.mxu0 %v196
    %959 = vmatprep.subr.mxu0 0.0
    %960 = vmatpush2.msra.mxu0 0.0
    %961 = vmatprep.subr.mxu0 0.0
    %962 = vmatpush2.msra.mxu0 0.0
    %963 = vmatprep.subr.mxu0 0.0
    %964 = vmatpush2.msra.mxu0 0.0
    %965 = vmatprep.subr.mxu0 0.0
    %966 = vmatpush2.msra.mxu0 0.0
    %967 = vmatprep.subr.mxu0 0.0
    %968 = vmatpush2.msra.mxu0 0.0
    %969 = vmatprep.subr.mxu0 0.0
    %970 = vmatpush2.msra.mxu0 0.0
    %971 = vmatprep.subr.mxu0 0.0
    %972 = vmatpush2.msra.mxu0 0.0
    %973 = vmatprep.subr.mxu0 0.0
    %974 = vmatpush2.msra.mxu0 0.0
    %975 = vmatprep.subr.mxu0 0.0
    %976 = vmatpush2.msra.mxu0 0.0
    %977 = vmatprep.subr.mxu0 0.0
    %978 = vmatpush2.msra.mxu0 0.0
    %979 = vmatprep.subr.mxu0 0.0
    %980 = vmatpush2.msra.mxu0 0.0
    %981 = vmatprep.subr.mxu0 0.0
    %982 = vmatpush2.msra.mxu0 0.0
    %983 = vmatprep.subr.mxu0 0.0
    %984 = vmatpush2.msra.mxu0 0.0
    %985 = vmatprep.subr.mxu0 0.0
    %986 = vmatpush2.msra.mxu0 0.0
    %987 = vmatprep.subr.mxu0 0.0
    %988 = vmatpush2.msra.mxu0 0.0
    %989 = vmatprep.subr.mxu0 0.0
    %990 = vmatpush2.msra.mxu0 0.0
    %991 = vmatprep.mubr.f32.mxu0 0.0
    %992 = vmatmul.mubr.f32.gmra.mxu0 %v925
    %v993 = vpop.f32.mrf.mxu0
    %v994 = vadd.f32 0.0, %v993
    %v995 = vpop.f32.mrf.mxu0
    %v996 = vadd.f32 0.0, %v995
    %997 = vdwg.mxu0
    %v1000 = vrot.slane %v994, 2
    %v1001 = vrot.slane %v996, 2
    %v1004 = vadd.f32 %v192, %v1000
    %v1005 = vadd.f32 %v194, %v1001
    %v1006 = vxor.u32 %v1004, 2147483648
    %v1007 = vxor.u32 %v1005, 2147483648
    %v1008 = vmul.f32 %v1006, 1.442695
    %v1009 = vpow.pop %v1008
    %v1010 = vmul.f32 %v1007, 1.442695
    %v1011 = vpow.pop %v1010
    %v1012 = vadd.f32 %v1009, 1.0
    %v1013 = vadd.f32 %v1011, 1.0
    %v1014 = vrcp.pop %v1012
    %v1015 = vmul.f32 1.0, %v1014
    %v1016 = vrcp.pop %v1013
    %v1017 = vmul.f32 1.0, %v1016
    %v1018 = vtanh.pop %v1005
    %v1020 = vrot.slane %v916, 6
    %v1022 = vmul.f32 %v1015, %v1020
    %1024 = vrot.lane.b32.xlu0 %v1018, 64
    %v1025 = vpop.permute.xlu0 %1024
    %v1027 = vmul.f32 %v1015, %v1025
    %1029 = vrot.lane.b32.xlu0 %v1027, 64
    %v1030 = vpop.permute.xlu0 %1029
    %v1032 = vadd.f32 %v1022, %v1030
    %v1033 = vtanh.pop %v1032
    %1035 = vrot.lane.b32.xlu0 %v1033, 64
    %v1036 = vpop.permute.xlu0 %1035
    %v1038 = vmul.f32 %v1017, %v1036
    %v1040 = vrot.slane %v1038, 6
    %1041 = vrot.lane.b32.xlu0 %v1040, 64
    %v1042 = vpop.permute.xlu0 %1041
    %v1044 = vsel %vm232, %v231, %v1042
    %v1045 = vrot.slane %v922, 2
    %1046 = vrot.lane.b32.xlu0 %v1045, 64
    %v1047 = vpop.permute.xlu0 %1046
    %v1049 = vsel %vm232, %v349, %v1047
    %v1050 = vrot.slane %v806, 6
    %1051 = vrot.lane.b32.xlu0 %v1050, 64
    %v1052 = vpop.permute.xlu0 %1051
    %v1054 = vsel %vm232, %v465, %v1052
    %v1055 = vrot.slane %v691, 2
    %1056 = vrot.lane.b32.xlu0 %v1055, 64
    %v1057 = vpop.permute.xlu0 %1056
    %v1059 = vsel %vm232, %v581, %v1057
    %1060 = vrot.lane.b32.xlu0 %v583, 64
    %v1061 = vpop.permute.xlu0 %1060
    %v1063 = vsel %vm232, %v691, %v1061
    %v1064 = vrot.slane %v465, 2
    %1065 = vrot.lane.b32.xlu0 %v1064, 64
    %v1066 = vpop.permute.xlu0 %1065
    %v1068 = vsel %vm232, %v806, %v1066
    %v1069 = vrot.slane %v349, 6
    %1070 = vrot.lane.b32.xlu0 %v1069, 64
    %v1071 = vpop.permute.xlu0 %1070
    %v1073 = vsel %vm232, %v922, %v1071
    %v1074 = vrot.slane %v231, 2
    %1075 = vrot.lane.b32.xlu0 %v1074, 64
    %v1076 = vpop.permute.xlu0 %1075
    %v1078 = vsel %vm232, %v1038, %v1076
    %vm1079 = vcmask 1041408
    %v1080 = vsel %vm1079, %v1044, %v1049
    %vm1081 = vcmask 1043456
    %v1082 = vsel %vm1081, %v1080, %v1054
    %vm1083 = vcmask 1045504
    %v1084 = vsel %vm1083, %v1082, %v1059
    %v1085 = vsel %vm1079, %v1063, %v1068
    %v1086 = vsel %vm1081, %v1085, %v1073
    %v1087 = vsel %vm1083, %v1086, %v1078
    %v1088 = vld [vmem:[%s4] sm:$0xff]
    %v1089 = vld [vmem:[%s4 + $0x8] sm:$0xff]
    %v1090 = vld [vmem:[%s4 + $0x10] sm:$0xff]
    %v1091 = vld [vmem:[%s4 + $0x18] sm:$0xff]
    %v1092 = vld [vmem:[%s4 + $0x20] sm:$0xff]
    %v1093 = vld [vmem:[%s4 + $0x28] sm:$0xff]
    %v1094 = vld [vmem:[%s4 + $0x30] sm:$0xff]
    %v1095 = vld [vmem:[%s4 + $0x38] sm:$0xff]
    %v1096 = vld [vmem:[%s4 + $0x40] sm:$0xff]
    %v1097 = vld [vmem:[%s4 + $0x48] sm:$0xff]
    %v1098 = vld [vmem:[%s4 + $0x50] sm:$0xff]
    %v1099 = vld [vmem:[%s4 + $0x58] sm:$0xff]
    %v1100 = vld [vmem:[%s4 + $0x60] sm:$0xff]
    %v1101 = vld [vmem:[%s4 + $0x68] sm:$0xff]
    %v1102 = vld [vmem:[%s4 + $0x70] sm:$0xff]
    %v1103 = vld [vmem:[%s4 + $0x78] sm:$0xff]
    %v1104 = vld [vmem:[%s4 + $0x80] sm:$0xff]
    %v1105 = vld [vmem:[%s4 + $0x88] sm:$0xff]
    %v1106 = vld [vmem:[%s4 + $0x90] sm:$0xff]
    %v1107 = vld [vmem:[%s4 + $0x98] sm:$0xff]
    %v1108 = vld [vmem:[%s4 + $0xa0] sm:$0xff]
    %v1109 = vld [vmem:[%s4 + $0xa8] sm:$0xff]
    %v1110 = vld [vmem:[%s4 + $0xb0] sm:$0xff]
    %v1111 = vld [vmem:[%s4 + $0xb8] sm:$0xff]
    %v1112 = vld [vmem:[%s4 + $0xc0] sm:$0xff]
    %v1113 = vld [vmem:[%s4 + $0xc8] sm:$0xff]
    %v1114 = vld [vmem:[%s4 + $0xd0] sm:$0xff]
    %v1115 = vld [vmem:[%s4 + $0xd8] sm:$0xff]
    %v1116 = vld [vmem:[%s4 + $0xe0] sm:$0xff]
    %v1117 = vld [vmem:[%s4 + $0xe8] sm:$0xff]
    %v1118 = vld [vmem:[%s4 + $0xf0] sm:$0xff]
    %v1119 = vld [vmem:[%s4 + $0xf8] sm:$0xff]
    %v1120 = vld [vmem:[%s5] sm:$0x3]
    %v1122 = vlaneseq
    %v1123 = vshrl.u32 %v1122, 7
    %v1124 = vsub.s32 0, %v1123
    %v1125 = vrot.slane %v1120, %v1124
    %v1126 = vlaneseq
    %v1127 = vshrl.u32 %v1126, 7
    %v1128 = vsub.s32 1, %v1127
    %v1129 = vrot.slane %v1120, %v1128
    %1132 = vmatprep.subr.mxu0 %v1119
    %1133 = vmatpush1.msra.mxu0 %v1118
    %1134 = vmatprep.subr.mxu0 %v1117
    %1135 = vmatpush1.msra.mxu0 %v1116
    %1136 = vmatprep.subr.mxu0 %v1115
    %1137 = vmatpush1.msra.mxu0 %v1114
    %1138 = vmatprep.subr.mxu0 %v1113
    %1139 = vmatpush1.msra.mxu0 %v1112
    %1140 = vmatprep.subr.mxu0 %v1111
    %1141 = vmatpush1.msra.mxu0 %v1110
    %1142 = vmatprep.subr.mxu0 %v1109
    %1143 = vmatpush1.msra.mxu0 %v1108
    %1144 = vmatprep.subr.mxu0 %v1107
    %1145 = vmatpush1.msra.mxu0 %v1106
    %1146 = vmatprep.subr.mxu0 %v1105
    %1147 = vmatpush1.msra.mxu0 %v1104
    %1148 = vmatprep.subr.mxu0 %v1103
    %1149 = vmatpush1.msra.mxu0 %v1102
    %1150 = vmatprep.subr.mxu0 %v1101
    %1151 = vmatpush1.msra.mxu0 %v1100
    %1152 = vmatprep.subr.mxu0 %v1099
    %1153 = vmatpush1.msra.mxu0 %v1098
    %1154 = vmatprep.subr.mxu0 %v1097
    %1155 = vmatpush1.msra.mxu0 %v1096
    %1156 = vmatprep.subr.mxu0 %v1095
    %1157 = vmatpush1.msra.mxu0 %v1094
    %1158 = vmatprep.subr.mxu0 %v1093
    %1159 = vmatpush1.msra.mxu0 %v1092
    %1160 = vmatprep.subr.mxu0 %v1091
    %1161 = vmatpush1.msra.mxu0 %v1090
    %1162 = vmatprep.subr.mxu0 %v1089
    %1163 = vmatpush1.msra.mxu0 %v1088
    %1164 = vmatprep.subr.mxu0 0.0
    %1165 = vmatpush2.msra.mxu0 0.0
    %1166 = vmatprep.subr.mxu0 0.0
    %1167 = vmatpush2.msra.mxu0 0.0
    %1168 = vmatprep.subr.mxu0 0.0
    %1169 = vmatpush2.msra.mxu0 0.0
    %1170 = vmatprep.subr.mxu0 0.0
    %1171 = vmatpush2.msra.mxu0 0.0
    %1172 = vmatprep.subr.mxu0 0.0
    %1173 = vmatpush2.msra.mxu0 0.0
    %1174 = vmatprep.subr.mxu0 0.0
    %1175 = vmatpush2.msra.mxu0 0.0
    %1176 = vmatprep.subr.mxu0 0.0
    %1177 = vmatpush2.msra.mxu0 0.0
    %1178 = vmatprep.subr.mxu0 0.0
    %1179 = vmatpush2.msra.mxu0 0.0
    %1180 = vmatprep.subr.mxu0 0.0
    %1181 = vmatpush2.msra.mxu0 0.0
    %1182 = vmatprep.subr.mxu0 0.0
    %1183 = vmatpush2.msra.mxu0 0.0
    %1184 = vmatprep.subr.mxu0 0.0
    %1185 = vmatpush2.msra.mxu0 0.0
    %1186 = vmatprep.subr.mxu0 0.0
    %1187 = vmatpush2.msra.mxu0 0.0
    %1188 = vmatprep.subr.mxu0 0.0
    %1189 = vmatpush2.msra.mxu0 0.0
    %1190 = vmatprep.subr.mxu0 0.0
    %1191 = vmatpush2.msra.mxu0 0.0
    %1192 = vmatprep.subr.mxu0 0.0
    %1193 = vmatpush2.msra.mxu0 0.0
    %1194 = vmatprep.subr.mxu0 0.0
    %1195 = vmatpush2.msra.mxu0 0.0
    %1196 = vmatprep.mubr.f32.mxu0 0.0
    %1197 = vmatmul.mubr.f32.gmra.mxu0 %v1084
    %v1198 = vpop.f32.mrf.mxu0
    %v1199 = vadd.f32 %v1125, %v1198
    %v1200 = vpop.f32.mrf.mxu0
    %v1201 = vadd.f32 %v1129, %v1200
    %1202 = vmatprep.mubr.f32.mxu0 0.0
    %1203 = vmatmul.mubr.f32.gmra.mxu0 %v1087
    %v1204 = vpop.f32.mrf.mxu0
    %v1205 = vadd.f32 %v1125, %v1204
    %v1206 = vpop.f32.mrf.mxu0
    %v1207 = vadd.f32 %v1129, %v1206
    %1208 = vdwg.mxu0
    %v1209 = vld [vmem:[%s6] sm:$0xff]
    %v1210 = vld [vmem:[%s6 + $0x8] sm:$0xff]
    %v1211 = vld [vmem:[%s6 + $0x10] sm:$0xff]
    %v1212 = vld [vmem:[%s6 + $0x18] sm:$0xff]
    %v1213 = vld [vmem:[%s6 + $0x20] sm:$0xff]
    %v1214 = vld [vmem:[%s6 + $0x28] sm:$0xff]
    %v1215 = vld [vmem:[%s6 + $0x30] sm:$0xff]
    %v1216 = vld [vmem:[%s6 + $0x38] sm:$0xff]
    %v1217 = vld [vmem:[%s6 + $0x40] sm:$0xff]
    %v1218 = vld [vmem:[%s6 + $0x48] sm:$0xff]
    %v1219 = vld [vmem:[%s6 + $0x50] sm:$0xff]
    %v1220 = vld [vmem:[%s6 + $0x58] sm:$0xff]
    %v1221 = vld [vmem:[%s6 + $0x60] sm:$0xff]
    %v1222 = vld [vmem:[%s6 + $0x68] sm:$0xff]
    %v1223 = vld [vmem:[%s6 + $0x70] sm:$0xff]
    %v1224 = vld [vmem:[%s6 + $0x78] sm:$0xff]
    %v1225 = vxor.u32 %v1199, 2147483648
    %v1226 = vxor.u32 %v1201, 2147483648
    %v1227 = vmul.f32 %v1225, 1.442695
    %v1228 = vpow.pop %v1227
    %v1229 = vmul.f32 %v1226, 1.442695
    %v1230 = vpow.pop %v1229
    %v1231 = vadd.f32 %v1228, 1.0
    %v1232 = vadd.f32 %v1230, 1.0
    %v1233 = vrcp.pop %v1231
    %v1234 = vmul.f32 1.0, %v1233
    %v1235 = vrcp.pop %v1232
    %v1236 = vmul.f32 1.0, %v1235
    %v1237 = vtanh.pop %v1201
    %1239 = vrot.lane.b32.xlu0 %v1237, 64
    %v1240 = vpop.permute.xlu0 %1239
    %v1242 = vmul.f32 %v1234, %v1240
    %v1243 = vtanh.pop %v1242
    %v1244 = vmul.f32 %v1236, %v1243
    %v1246 = vsel %vm232, %v1244, 0
    %1248 = vmatprep.subr.mxu0 0.0
    %1249 = vmatpush1.msra.mxu0 0.0
    %1250 = vmatprep.subr.mxu0 0.0
    %1251 = vmatpush1.msra.mxu0 0.0
    %1252 = vmatprep.subr.mxu0 0.0
    %1253 = vmatpush1.msra.mxu0 0.0
    %1254 = vmatprep.subr.mxu0 0.0
    %1255 = vmatpush1.msra.mxu0 0.0
    %1256 = vmatprep.subr.mxu0 0.0
    %1257 = vmatpush1.msra.mxu0 0.0
    %1258 = vmatprep.subr.mxu0 0.0
    %1259 = vmatpush1.msra.mxu0 0.0
    %1260 = vmatprep.subr.mxu0 0.0
    %1261 = vmatpush1.msra.mxu0 0.0
    %1262 = vmatprep.subr.mxu0 0.0
    %1263 = vmatpush1.msra.mxu0 0.0
    %1264 = vmatprep.subr.mxu0 %v1224
    %1265 = vmatpush1.msra.mxu0 %v1223
    %1266 = vmatprep.subr.mxu0 %v1222
    %1267 = vmatpush1.msra.mxu0 %v1221
    %1268 = vmatprep.subr.mxu0 %v1220
    %1269 = vmatpush1.msra.mxu0 %v1219
    %1270 = vmatprep.subr.mxu0 %v1218
    %1271 = vmatpush1.msra.mxu0 %v1217
    %1272 = vmatprep.subr.mxu0 %v1216
    %1273 = vmatpush1.msra.mxu0 %v1215
    %1274 = vmatprep.subr.mxu0 %v1214
    %1275 = vmatpush1.msra.mxu0 %v1213
    %1276 = vmatprep.subr.mxu0 %v1212
    %1277 = vmatpush1.msra.mxu0 %v1211
    %1278 = vmatprep.subr.mxu0 %v1210
    %1279 = vmatpush1.msra.mxu0 %v1209
    %1280 = vmatprep.subr.mxu0 0.0
    %1281 = vmatpush2.msra.mxu0 0.0
    %1282 = vmatprep.subr.mxu0 0.0
    %1283 = vmatpush2.msra.mxu0 0.0
    %1284 = vmatprep.subr.mxu0 0.0
    %1285 = vmatpush2.msra.mxu0 0.0
    %1286 = vmatprep.subr.mxu0 0.0
    %1287 = vmatpush2.msra.mxu0 0.0
    %1288 = vmatprep.subr.mxu0 0.0
    %1289 = vmatpush2.msra.mxu0 0.0
    %1290 = vmatprep.subr.mxu0 0.0
    %1291 = vmatpush2.msra.mxu0 0.0
    %1292 = vmatprep.subr.mxu0 0.0
    %1293 = vmatpush2.msra.mxu0 0.0
    %1294 = vmatprep.subr.mxu0 0.0
    %1295 = vmatpush2.msra.mxu0 0.0
    %1296 = vmatprep.subr.mxu0 0.0
    %1297 = vmatpush2.msra.mxu0 0.0
    %1298 = vmatprep.subr.mxu0 0.0
    %1299 = vmatpush2.msra.mxu0 0.0
    %1300 = vmatprep.subr.mxu0 0.0
    %1301 = vmatpush2.msra.mxu0 0.0
    %1302 = vmatprep.subr.mxu0 0.0
    %1303 = vmatpush2.msra.mxu0 0.0
    %1304 = vmatprep.subr.mxu0 0.0
    %1305 = vmatpush2.msra.mxu0 0.0
    %1306 = vmatprep.subr.mxu0 0.0
    %1307 = vmatpush2.msra.mxu0 0.0
    %1308 = vmatprep.subr.mxu0 0.0
    %1309 = vmatpush2.msra.mxu0 0.0
    %1310 = vmatprep.subr.mxu0 0.0
    %1311 = vmatpush2.msra.mxu0 0.0
    %1312 = vmatprep.mubr.f32.mxu0 0.0
    %1313 = vmatmul.mubr.f32.gmra.mxu0 %v1246
    %v1314 = vpop.f32.mrf.mxu0
    %v1315 = vadd.f32 0.0, %v1314
    %v1316 = vpop.f32.mrf.mxu0
    %v1317 = vadd.f32 0.0, %v1316
    %1318 = vdwg.mxu0
    %v1321 = vrot.slane %v1315, 6
    %v1322 = vrot.slane %v1317, 6
    %v1325 = vadd.f32 %v1199, %v1321
    %v1326 = vadd.f32 %v1201, %v1322
    %v1327 = vxor.u32 %v1325, 2147483648
    %v1328 = vxor.u32 %v1326, 2147483648
    %v1329 = vmul.f32 %v1327, 1.442695
    %v1330 = vpow.pop %v1329
    %v1331 = vmul.f32 %v1328, 1.442695
    %v1332 = vpow.pop %v1331
    %v1333 = vadd.f32 %v1330, 1.0
    %v1334 = vadd.f32 %v1332, 1.0
    %v1335 = vrcp.pop %v1333
    %v1336 = vmul.f32 1.0, %v1335
    %v1337 = vrcp.pop %v1334
    %v1338 = vmul.f32 1.0, %v1337
    %v1339 = vtanh.pop %v1326
    %v1341 = vrot.slane %v1242, 6
    %1342 = vrot.lane.b32.xlu0 %v1341, 64
    %v1343 = vpop.permute.xlu0 %1342
    %v1345 = vmul.f32 %v1336, %v1343
    %1347 = vrot.lane.b32.xlu0 %v1339, 64
    %v1348 = vpop.permute.xlu0 %1347
    %v1350 = vmul.f32 %v1336, %v1348
    %1352 = vrot.lane.b32.xlu0 %v1350, 64
    %v1353 = vpop.permute.xlu0 %1352
    %v1355 = vadd.f32 %v1345, %v1353
    %v1356 = vtanh.pop %v1355
    %1358 = vrot.lane.b32.xlu0 %v1356, 64
    %v1359 = vpop.permute.xlu0 %1358
    %v1361 = vmul.f32 %v1338, %v1359
    %v1363 = vrot.slane %v1361, 2
    %v1364 = vsel %vm232, %v1363, 0
    %1366 = vmatprep.subr.mxu0 0.0
    %1367 = vmatpush1.msra.mxu0 0.0
    %1368 = vmatprep.subr.mxu0 0.0
    %1369 = vmatpush1.msra.mxu0 0.0
    %1370 = vmatprep.subr.mxu0 0.0
    %1371 = vmatpush1.msra.mxu0 0.0
    %1372 = vmatprep.subr.mxu0 0.0
    %1373 = vmatpush1.msra.mxu0 0.0
    %1374 = vmatprep.subr.mxu0 0.0
    %1375 = vmatpush1.msra.mxu0 0.0
    %1376 = vmatprep.subr.mxu0 0.0
    %1377 = vmatpush1.msra.mxu0 0.0
    %1378 = vmatprep.subr.mxu0 0.0
    %1379 = vmatpush1.msra.mxu0 0.0
    %1380 = vmatprep.subr.mxu0 0.0
    %1381 = vmatpush1.msra.mxu0 0.0
    %1382 = vmatprep.subr.mxu0 %v1224
    %1383 = vmatpush1.msra.mxu0 %v1223
    %1384 = vmatprep.subr.mxu0 %v1222
    %1385 = vmatpush1.msra.mxu0 %v1221
    %1386 = vmatprep.subr.mxu0 %v1220
    %1387 = vmatpush1.msra.mxu0 %v1219
    %1388 = vmatprep.subr.mxu0 %v1218
    %1389 = vmatpush1.msra.mxu0 %v1217
    %1390 = vmatprep.subr.mxu0 %v1216
    %1391 = vmatpush1.msra.mxu0 %v1215
    %1392 = vmatprep.subr.mxu0 %v1214
    %1393 = vmatpush1.msra.mxu0 %v1213
    %1394 = vmatprep.subr.mxu0 %v1212
    %1395 = vmatpush1.msra.mxu0 %v1211
    %1396 = vmatprep.subr.mxu0 %v1210
    %1397 = vmatpush1.msra.mxu0 %v1209
    %1398 = vmatprep.subr.mxu0 0.0
    %1399 = vmatpush2.msra.mxu0 0.0
    %1400 = vmatprep.subr.mxu0 0.0
    %1401 = vmatpush2.msra.mxu0 0.0
    %1402 = vmatprep.subr.mxu0 0.0
    %1403 = vmatpush2.msra.mxu0 0.0
    %1404 = vmatprep.subr.mxu0 0.0
    %1405 = vmatpush2.msra.mxu0 0.0
    %1406 = vmatprep.subr.mxu0 0.0
    %1407 = vmatpush2.msra.mxu0 0.0
    %1408 = vmatprep.subr.mxu0 0.0
    %1409 = vmatpush2.msra.mxu0 0.0
    %1410 = vmatprep.subr.mxu0 0.0
    %1411 = vmatpush2.msra.mxu0 0.0
    %1412 = vmatprep.subr.mxu0 0.0
    %1413 = vmatpush2.msra.mxu0 0.0
    %1414 = vmatprep.subr.mxu0 0.0
    %1415 = vmatpush2.msra.mxu0 0.0
    %1416 = vmatprep.subr.mxu0 0.0
    %1417 = vmatpush2.msra.mxu0 0.0
    %1418 = vmatprep.subr.mxu0 0.0
    %1419 = vmatpush2.msra.mxu0 0.0
    %1420 = vmatprep.subr.mxu0 0.0
    %1421 = vmatpush2.msra.mxu0 0.0
    %1422 = vmatprep.subr.mxu0 0.0
    %1423 = vmatpush2.msra.mxu0 0.0
    %1424 = vmatprep.subr.mxu0 0.0
    %1425 = vmatpush2.msra.mxu0 0.0
    %1426 = vmatprep.subr.mxu0 0.0
    %1427 = vmatpush2.msra.mxu0 0.0
    %1428 = vmatprep.subr.mxu0 0.0
    %1429 = vmatpush2.msra.mxu0 0.0
    %1430 = vmatprep.mubr.f32.mxu0 0.0
    %1431 = vmatmul.mubr.f32.gmra.mxu0 %v1364
    %v1432 = vpop.f32.mrf.mxu0
    %v1433 = vadd.f32 0.0, %v1432
    %v1434 = vpop.f32.mrf.mxu0
    %v1435 = vadd.f32 0.0, %v1434
    %1436 = vdwg.mxu0
    %v1439 = vrot.slane %v1433, 4
    %v1440 = vrot.slane %v1435, 4
    %v1443 = vadd.f32 %v1199, %v1439
    %v1444 = vadd.f32 %v1201, %v1440
    %v1445 = vxor.u32 %v1443, 2147483648
    %v1446 = vxor.u32 %v1444, 2147483648
    %v1447 = vmul.f32 %v1445, 1.442695
    %v1448 = vpow.pop %v1447
    %v1449 = vmul.f32 %v1446, 1.442695
    %v1450 = vpow.pop %v1449
    %v1451 = vadd.f32 %v1448, 1.0
    %v1452 = vadd.f32 %v1450, 1.0
    %v1453 = vrcp.pop %v1451
    %v1454 = vmul.f32 1.0, %v1453
    %v1455 = vrcp.pop %v1452
    %v1456 = vmul.f32 1.0, %v1455
    %v1457 = vtanh.pop %v1444
    %v1459 = vrot.slane %v1355, 6
    %v1461 = vmul.f32 %v1454, %v1459
    %1463 = vrot.lane.b32.xlu0 %v1457, 64
    %v1464 = vpop.permute.xlu0 %1463
    %v1466 = vmul.f32 %v1454, %v1464
    %1468 = vrot.lane.b32.xlu0 %v1466, 64
    %v1469 = vpop.permute.xlu0 %1468
    %v1471 = vadd.f32 %v1461, %v1469
    %v1472 = vtanh.pop %v1471
    %1474 = vrot.lane.b32.xlu0 %v1472, 64
    %v1475 = vpop.permute.xlu0 %1474
    %v1477 = vmul.f32 %v1456, %v1475
    %v1479 = vrot.slane %v1477, 4
    %v1480 = vsel %vm232, %v1479, 0
    %1482 = vmatprep.subr.mxu0 0.0
    %1483 = vmatpush1.msra.mxu0 0.0
    %1484 = vmatprep.subr.mxu0 0.0
    %1485 = vmatpush1.msra.mxu0 0.0
    %1486 = vmatprep.subr.mxu0 0.0
    %1487 = vmatpush1.msra.mxu0 0.0
    %1488 = vmatprep.subr.mxu0 0.0
    %1489 = vmatpush1.msra.mxu0 0.0
    %1490 = vmatprep.subr.mxu0 0.0
    %1491 = vmatpush1.msra.mxu0 0.0
    %1492 = vmatprep.subr.mxu0 0.0
    %1493 = vmatpush1.msra.mxu0 0.0
    %1494 = vmatprep.subr.mxu0 0.0
    %1495 = vmatpush1.msra.mxu0 0.0
    %1496 = vmatprep.subr.mxu0 0.0
    %1497 = vmatpush1.msra.mxu0 0.0
    %1498 = vmatprep.subr.mxu0 %v1224
    %1499 = vmatpush1.msra.mxu0 %v1223
    %1500 = vmatprep.subr.mxu0 %v1222
    %1501 = vmatpush1.msra.mxu0 %v1221
    %1502 = vmatprep.subr.mxu0 %v1220
    %1503 = vmatpush1.msra.mxu0 %v1219
    %1504 = vmatprep.subr.mxu0 %v1218
    %1505 = vmatpush1.msra.mxu0 %v1217
    %1506 = vmatprep.subr.mxu0 %v1216
    %1507 = vmatpush1.msra.mxu0 %v1215
    %1508 = vmatprep.subr.mxu0 %v1214
    %1509 = vmatpush1.msra.mxu0 %v1213
    %1510 = vmatprep.subr.mxu0 %v1212
    %1511 = vmatpush1.msra.mxu0 %v1211
    %1512 = vmatprep.subr.mxu0 %v1210
    %1513 = vmatpush1.msra.mxu0 %v1209
    %1514 = vmatprep.subr.mxu0 0.0
    %1515 = vmatpush2.msra.mxu0 0.0
    %1516 = vmatprep.subr.mxu0 0.0
    %1517 = vmatpush2.msra.mxu0 0.0
    %1518 = vmatprep.subr.mxu0 0.0
    %1519 = vmatpush2.msra.mxu0 0.0
    %1520 = vmatprep.subr.mxu0 0.0
    %1521 = vmatpush2.msra.mxu0 0.0
    %1522 = vmatprep.subr.mxu0 0.0
    %1523 = vmatpush2.msra.mxu0 0.0
    %1524 = vmatprep.subr.mxu0 0.0
    %1525 = vmatpush2.msra.mxu0 0.0
    %1526 = vmatprep.subr.mxu0 0.0
    %1527 = vmatpush2.msra.mxu0 0.0
    %1528 = vmatprep.subr.mxu0 0.0
    %1529 = vmatpush2.msra.mxu0 0.0
    %1530 = vmatprep.subr.mxu0 0.0
    %1531 = vmatpush2.msra.mxu0 0.0
    %1532 = vmatprep.subr.mxu0 0.0
    %1533 = vmatpush2.msra.mxu0 0.0
    %1534 = vmatprep.subr.mxu0 0.0
    %1535 = vmatpush2.msra.mxu0 0.0
    %1536 = vmatprep.subr.mxu0 0.0
    %1537 = vmatpush2.msra.mxu0 0.0
    %1538 = vmatprep.subr.mxu0 0.0
    %1539 = vmatpush2.msra.mxu0 0.0
    %1540 = vmatprep.subr.mxu0 0.0
    %1541 = vmatpush2.msra.mxu0 0.0
    %1542 = vmatprep.subr.mxu0 0.0
    %1543 = vmatpush2.msra.mxu0 0.0
    %1544 = vmatprep.subr.mxu0 0.0
    %1545 = vmatpush2.msra.mxu0 0.0
    %1546 = vmatprep.mubr.f32.mxu0 0.0
    %1547 = vmatmul.mubr.f32.gmra.mxu0 %v1480
    %v1548 = vpop.f32.mrf.mxu0
    %v1549 = vadd.f32 0.0, %v1548
    %v1550 = vpop.f32.mrf.mxu0
    %v1551 = vadd.f32 0.0, %v1550
    %1552 = vdwg.mxu0
    %v1555 = vrot.slane %v1549, 2
    %v1556 = vrot.slane %v1551, 2
    %v1559 = vadd.f32 %v1199, %v1555
    %v1560 = vadd.f32 %v1201, %v1556
    %v1561 = vxor.u32 %v1559, 2147483648
    %v1562 = vxor.u32 %v1560, 2147483648
    %v1563 = vmul.f32 %v1561, 1.442695
    %v1564 = vpow.pop %v1563
    %v1565 = vmul.f32 %v1562, 1.442695
    %v1566 = vpow.pop %v1565
    %v1567 = vadd.f32 %v1564, 1.0
    %v1568 = vadd.f32 %v1566, 1.0
    %v1569 = vrcp.pop %v1567
    %v1570 = vmul.f32 1.0, %v1569
    %v1571 = vrcp.pop %v1568
    %v1572 = vmul.f32 1.0, %v1571
    %v1573 = vtanh.pop %v1560
    %v1575 = vrot.slane %v1471, 6
    %v1577 = vmul.f32 %v1570, %v1575
    %1579 = vrot.lane.b32.xlu0 %v1573, 64
    %v1580 = vpop.permute.xlu0 %1579
    %v1582 = vmul.f32 %v1570, %v1580
    %1584 = vrot.lane.b32.xlu0 %v1582, 64
    %v1585 = vpop.permute.xlu0 %1584
    %v1587 = vadd.f32 %v1577, %v1585
    %v1588 = vtanh.pop %v1587
    %1590 = vrot.lane.b32.xlu0 %v1588, 64
    %v1591 = vpop.permute.xlu0 %1590
    %v1593 = vmul.f32 %v1572, %v1591
    %v1595 = vrot.slane %v1593, 6
    %v1596 = vsel %vm232, %v1595, 0
    %1598 = vmatprep.subr.mxu0 0.0
    %1599 = vmatpush1.msra.mxu0 0.0
    %1600 = vmatprep.subr.mxu0 0.0
    %1601 = vmatpush1.msra.mxu0 0.0
    %1602 = vmatprep.subr.mxu0 0.0
    %1603 = vmatpush1.msra.mxu0 0.0
    %1604 = vmatprep.subr.mxu0 0.0
    %1605 = vmatpush1.msra.mxu0 0.0
    %1606 = vmatprep.subr.mxu0 0.0
    %1607 = vmatpush1.msra.mxu0 0.0
    %1608 = vmatprep.subr.mxu0 0.0
    %1609 = vmatpush1.msra.mxu0 0.0
    %1610 = vmatprep.subr.mxu0 0.0
    %1611 = vmatpush1.msra.mxu0 0.0
    %1612 = vmatprep.subr.mxu0 0.0
    %1613 = vmatpush1.msra.mxu0 0.0
    %1614 = vmatprep.subr.mxu0 %v1224
    %1615 = vmatpush1.msra.mxu0 %v1223
    %1616 = vmatprep.subr.mxu0 %v1222
    %1617 = vmatpush1.msra.mxu0 %v1221
    %1618 = vmatprep.subr.mxu0 %v1220
    %1619 = vmatpush1.msra.mxu0 %v1219
    %1620 = vmatprep.subr.mxu0 %v1218
    %1621 = vmatpush1.msra.mxu0 %v1217
    %1622 = vmatprep.subr.mxu0 %v1216
    %1623 = vmatpush1.msra.mxu0 %v1215
    %1624 = vmatprep.subr.mxu0 %v1214
    %1625 = vmatpush1.msra.mxu0 %v1213
    %1626 = vmatprep.subr.mxu0 %v1212
    %1627 = vmatpush1.msra.mxu0 %v1211
    %1628 = vmatprep.subr.mxu0 %v1210
    %1629 = vmatpush1.msra.mxu0 %v1209
    %1630 = vmatprep.subr.mxu0 0.0
    %1631 = vmatpush2.msra.mxu0 0.0
    %1632 = vmatprep.subr.mxu0 0.0
    %1633 = vmatpush2.msra.mxu0 0.0
    %1634 = vmatprep.subr.mxu0 0.0
    %1635 = vmatpush2.msra.mxu0 0.0
    %1636 = vmatprep.subr.mxu0 0.0
    %1637 = vmatpush2.msra.mxu0 0.0
    %1638 = vmatprep.subr.mxu0 0.0
    %1639 = vmatpush2.msra.mxu0 0.0
    %1640 = vmatprep.subr.mxu0 0.0
    %1641 = vmatpush2.msra.mxu0 0.0
    %1642 = vmatprep.subr.mxu0 0.0
    %1643 = vmatpush2.msra.mxu0 0.0
    %1644 = vmatprep.subr.mxu0 0.0
    %1645 = vmatpush2.msra.mxu0 0.0
    %1646 = vmatprep.subr.mxu0 0.0
    %1647 = vmatpush2.msra.mxu0 0.0
    %1648 = vmatprep.subr.mxu0 0.0
    %1649 = vmatpush2.msra.mxu0 0.0
    %1650 = vmatprep.subr.mxu0 0.0
    %1651 = vmatpush2.msra.mxu0 0.0
    %1652 = vmatprep.subr.mxu0 0.0
    %1653 = vmatpush2.msra.mxu0 0.0
    %1654 = vmatprep.subr.mxu0 0.0
    %1655 = vmatpush2.msra.mxu0 0.0
    %1656 = vmatprep.subr.mxu0 0.0
    %1657 = vmatpush2.msra.mxu0 0.0
    %1658 = vmatprep.subr.mxu0 0.0
    %1659 = vmatpush2.msra.mxu0 0.0
    %1660 = vmatprep.subr.mxu0 0.0
    %1661 = vmatpush2.msra.mxu0 0.0
    %1662 = vmatprep.mubr.f32.mxu0 0.0
    %1663 = vmatmul.mubr.f32.gmra.mxu0 %v1596
    %v1664 = vpop.f32.mrf.mxu0
    %v1665 = vadd.f32 0.0, %v1664
    %v1666 = vpop.f32.mrf.mxu0
    %v1667 = vadd.f32 0.0, %v1666
    %1668 = vdwg.mxu0
    %v1669 = vadd.f32 %v1205, %v1665
    %v1670 = vadd.f32 %v1207, %v1667
    %v1671 = vxor.u32 %v1669, 2147483648
    %v1672 = vxor.u32 %v1670, 2147483648
    %v1673 = vmul.f32 %v1671, 1.442695
    %v1674 = vpow.pop %v1673
    %v1675 = vmul.f32 %v1672, 1.442695
    %v1676 = vpow.pop %v1675
    %v1677 = vadd.f32 %v1674, 1.0
    %v1678 = vadd.f32 %v1676, 1.0
    %v1679 = vrcp.pop %v1677
    %v1680 = vmul.f32 1.0, %v1679
    %v1681 = vrcp.pop %v1678
    %v1682 = vmul.f32 1.0, %v1681
    %v1683 = vtanh.pop %v1670
    %v1685 = vrot.slane %v1587, 6
    %v1687 = vmul.f32 %v1680, %v1685
    %1689 = vrot.lane.b32.xlu0 %v1683, 64
    %v1690 = vpop.permute.xlu0 %1689
    %v1692 = vmul.f32 %v1680, %v1690
    %1694 = vrot.lane.b32.xlu0 %v1692, 64
    %v1695 = vpop.permute.xlu0 %1694
    %v1697 = vadd.f32 %v1687, %v1695
    %v1698 = vtanh.pop %v1697
    %1700 = vrot.lane.b32.xlu0 %v1698, 64
    %v1701 = vpop.permute.xlu0 %1700
    %v1703 = vmul.f32 %v1682, %v1701
    %v1705 = vsel %vm232, %v1703, 0
    %1707 = vmatprep.subr.mxu0 0.0
    %1708 = vmatpush1.msra.mxu0 0.0
    %1709 = vmatprep.subr.mxu0 0.0
    %1710 = vmatpush1.msra.mxu0 0.0
    %1711 = vmatprep.subr.mxu0 0.0
    %1712 = vmatpush1.msra.mxu0 0.0
    %1713 = vmatprep.subr.mxu0 0.0
    %1714 = vmatpush1.msra.mxu0 0.0
    %1715 = vmatprep.subr.mxu0 0.0
    %1716 = vmatpush1.msra.mxu0 0.0
    %1717 = vmatprep.subr.mxu0 0.0
    %1718 = vmatpush1.msra.mxu0 0.0
    %1719 = vmatprep.subr.mxu0 0.0
    %1720 = vmatpush1.msra.mxu0 0.0
    %1721 = vmatprep.subr.mxu0 0.0
    %1722 = vmatpush1.msra.mxu0 0.0
    %1723 = vmatprep.subr.mxu0 %v1224
    %1724 = vmatpush1.msra.mxu0 %v1223
    %1725 = vmatprep.subr.mxu0 %v1222
    %1726 = vmatpush1.msra.mxu0 %v1221
    %1727 = vmatprep.subr.mxu0 %v1220
    %1728 = vmatpush1.msra.mxu0 %v1219
    %1729 = vmatprep.subr.mxu0 %v1218
    %1730 = vmatpush1.msra.mxu0 %v1217
    %1731 = vmatprep.subr.mxu0 %v1216
    %1732 = vmatpush1.msra.mxu0 %v1215
    %1733 = vmatprep.subr.mxu0 %v1214
    %1734 = vmatpush1.msra.mxu0 %v1213
    %1735 = vmatprep.subr.mxu0 %v1212
    %1736 = vmatpush1.msra.mxu0 %v1211
    %1737 = vmatprep.subr.mxu0 %v1210
    %1738 = vmatpush1.msra.mxu0 %v1209
    %1739 = vmatprep.subr.mxu0 0.0
    %1740 = vmatpush2.msra.mxu0 0.0
    %1741 = vmatprep.subr.mxu0 0.0
    %1742 = vmatpush2.msra.mxu0 0.0
    %1743 = vmatprep.subr.mxu0 0.0
    %1744 = vmatpush2.msra.mxu0 0.0
    %1745 = vmatprep.subr.mxu0 0.0
    %1746 = vmatpush2.msra.mxu0 0.0
    %1747 = vmatprep.subr.mxu0 0.0
    %1748 = vmatpush2.msra.mxu0 0.0
    %1749 = vmatprep.subr.mxu0 0.0
    %1750 = vmatpush2.msra.mxu0 0.0
    %1751 = vmatprep.subr.mxu0 0.0
    %1752 = vmatpush2.msra.mxu0 0.0
    %1753 = vmatprep.subr.mxu0 0.0
    %1754 = vmatpush2.msra.mxu0 0.0
    %1755 = vmatprep.subr.mxu0 0.0
    %1756 = vmatpush2.msra.mxu0 0.0
    %1757 = vmatprep.subr.mxu0 0.0
    %1758 = vmatpush2.msra.mxu0 0.0
    %1759 = vmatprep.subr.mxu0 0.0
    %1760 = vmatpush2.msra.mxu0 0.0
    %1761 = vmatprep.subr.mxu0 0.0
    %1762 = vmatpush2.msra.mxu0 0.0
    %1763 = vmatprep.subr.mxu0 0.0
    %1764 = vmatpush2.msra.mxu0 0.0
    %1765 = vmatprep.subr.mxu0 0.0
    %1766 = vmatpush2.msra.mxu0 0.0
    %1767 = vmatprep.subr.mxu0 0.0
    %1768 = vmatpush2.msra.mxu0 0.0
    %1769 = vmatprep.subr.mxu0 0.0
    %1770 = vmatpush2.msra.mxu0 0.0
    %1771 = vmatprep.mubr.f32.mxu0 0.0
    %1772 = vmatmul.mubr.f32.gmra.mxu0 %v1705
    %v1773 = vpop.f32.mrf.mxu0
    %v1774 = vadd.f32 0.0, %v1773
    %v1775 = vpop.f32.mrf.mxu0
    %v1776 = vadd.f32 0.0, %v1775
    %1777 = vdwg.mxu0
    %v1780 = vrot.slane %v1774, 6
    %v1781 = vrot.slane %v1776, 6
    %v1784 = vadd.f32 %v1205, %v1780
    %v1785 = vadd.f32 %v1207, %v1781
    %v1786 = vxor.u32 %v1784, 2147483648
    %v1787 = vxor.u32 %v1785, 2147483648
    %v1788 = vmul.f32 %v1786, 1.442695
    %v1789 = vpow.pop %v1788
    %v1790 = vmul.f32 %v1787, 1.442695
    %v1791 = vpow.pop %v1790
    %v1792 = vadd.f32 %v1789, 1.0
    %v1793 = vadd.f32 %v1791, 1.0
    %v1794 = vrcp.pop %v1792
    %v1795 = vmul.f32 1.0, %v1794
    %v1796 = vrcp.pop %v1793
    %v1797 = vmul.f32 1.0, %v1796
    %v1798 = vtanh.pop %v1785
    %v1800 = vrot.slane %v1697, 6
    %v1802 = vmul.f32 %v1795, %v1800
    %1804 = vrot.lane.b32.xlu0 %v1798, 64
    %v1805 = vpop.permute.xlu0 %1804
    %v1807 = vmul.f32 %v1795, %v1805
    %1809 = vrot.lane.b32.xlu0 %v1807, 64
    %v1810 = vpop.permute.xlu0 %1809
    %v1812 = vadd.f32 %v1802, %v1810
    %v1813 = vtanh.pop %v1812
    %1815 = vrot.lane.b32.xlu0 %v1813, 64
    %v1816 = vpop.permute.xlu0 %1815
    %v1818 = vmul.f32 %v1797, %v1816
    %v1820 = vrot.slane %v1818, 2
    %v1821 = vsel %vm232, %v1820, 0
    %1823 = vmatprep.subr.mxu0 0.0
    %1824 = vmatpush1.msra.mxu0 0.0
    %1825 = vmatprep.subr.mxu0 0.0
    %1826 = vmatpush1.msra.mxu0 0.0
    %1827 = vmatprep.subr.mxu0 0.0
    %1828 = vmatpush1.msra.mxu0 0.0
    %1829 = vmatprep.subr.mxu0 0.0
    %1830 = vmatpush1.msra.mxu0 0.0
    %1831 = vmatprep.subr.mxu0 0.0
    %1832 = vmatpush1.msra.mxu0 0.0
    %1833 = vmatprep.subr.mxu0 0.0
    %1834 = vmatpush1.msra.mxu0 0.0
    %1835 = vmatprep.subr.mxu0 0.0
    %1836 = vmatpush1.msra.mxu0 0.0
    %1837 = vmatprep.subr.mxu0 0.0
    %1838 = vmatpush1.msra.mxu0 0.0
    %1839 = vmatprep.subr.mxu0 %v1224
    %1840 = vmatpush1.msra.mxu0 %v1223
    %1841 = vmatprep.subr.mxu0 %v1222
    %1842 = vmatpush1.msra.mxu0 %v1221
    %1843 = vmatprep.subr.mxu0 %v1220
    %1844 = vmatpush1.msra.mxu0 %v1219
    %1845 = vmatprep.subr.mxu0 %v1218
    %1846 = vmatpush1.msra.mxu0 %v1217
    %1847 = vmatprep.subr.mxu0 %v1216
    %1848 = vmatpush1.msra.mxu0 %v1215
    %1849 = vmatprep.subr.mxu0 %v1214
    %1850 = vmatpush1.msra.mxu0 %v1213
    %1851 = vmatprep.subr.mxu0 %v1212
    %1852 = vmatpush1.msra.mxu0 %v1211
    %1853 = vmatprep.subr.mxu0 %v1210
    %1854 = vmatpush1.msra.mxu0 %v1209
    %1855 = vmatprep.subr.mxu0 0.0
    %1856 = vmatpush2.msra.mxu0 0.0
    %1857 = vmatprep.subr.mxu0 0.0
    %1858 = vmatpush2.msra.mxu0 0.0
    %1859 = vmatprep.subr.mxu0 0.0
    %1860 = vmatpush2.msra.mxu0 0.0
    %1861 = vmatprep.subr.mxu0 0.0
    %1862 = vmatpush2.msra.mxu0 0.0
    %1863 = vmatprep.subr.mxu0 0.0
    %1864 = vmatpush2.msra.mxu0 0.0
    %1865 = vmatprep.subr.mxu0 0.0
    %1866 = vmatpush2.msra.mxu0 0.0
    %1867 = vmatprep.subr.mxu0 0.0
    %1868 = vmatpush2.msra.mxu0 0.0
    %1869 = vmatprep.subr.mxu0 0.0
    %1870 = vmatpush2.msra.mxu0 0.0
    %1871 = vmatprep.subr.mxu0 0.0
    %1872 = vmatpush2.msra.mxu0 0.0
    %1873 = vmatprep.subr.mxu0 0.0
    %1874 = vmatpush2.msra.mxu0 0.0
    %1875 = vmatprep.subr.mxu0 0.0
    %1876 = vmatpush2.msra.mxu0 0.0
    %1877 = vmatprep.subr.mxu0 0.0
    %1878 = vmatpush2.msra.mxu0 0.0
    %1879 = vmatprep.subr.mxu0 0.0
    %1880 = vmatpush2.msra.mxu0 0.0
    %1881 = vmatprep.subr.mxu0 0.0
    %1882 = vmatpush2.msra.mxu0 0.0
    %1883 = vmatprep.subr.mxu0 0.0
    %1884 = vmatpush2.msra.mxu0 0.0
    %1885 = vmatprep.subr.mxu0 0.0
    %1886 = vmatpush2.msra.mxu0 0.0
    %1887 = vmatprep.mubr.f32.mxu0 0.0
    %1888 = vmatmul.mubr.f32.gmra.mxu0 %v1821
    %v1889 = vpop.f32.mrf.mxu0
    %v1890 = vadd.f32 0.0, %v1889
    %v1891 = vpop.f32.mrf.mxu0
    %v1892 = vadd.f32 0.0, %v1891
    %1893 = vdwg.mxu0
    %v1896 = vrot.slane %v1890, 4
    %v1897 = vrot.slane %v1892, 4
    %v1900 = vadd.f32 %v1205, %v1896
    %v1901 = vadd.f32 %v1207, %v1897
    %v1902 = vxor.u32 %v1900, 2147483648
    %v1903 = vxor.u32 %v1901, 2147483648
    %v1904 = vmul.f32 %v1902, 1.442695
    %v1905 = vpow.pop %v1904
    %v1906 = vmul.f32 %v1903, 1.442695
    %v1907 = vpow.pop %v1906
    %v1908 = vadd.f32 %v1905, 1.0
    %v1909 = vadd.f32 %v1907, 1.0
    %v1910 = vrcp.pop %v1908
    %v1911 = vmul.f32 1.0, %v1910
    %v1912 = vrcp.pop %v1909
    %v1913 = vmul.f32 1.0, %v1912
    %v1914 = vtanh.pop %v1901
    %v1916 = vrot.slane %v1812, 6
    %v1918 = vmul.f32 %v1911, %v1916
    %1920 = vrot.lane.b32.xlu0 %v1914, 64
    %v1921 = vpop.permute.xlu0 %1920
    %v1923 = vmul.f32 %v1911, %v1921
    %1925 = vrot.lane.b32.xlu0 %v1923, 64
    %v1926 = vpop.permute.xlu0 %1925
    %v1928 = vadd.f32 %v1918, %v1926
    %v1929 = vtanh.pop %v1928
    %1931 = vrot.lane.b32.xlu0 %v1929, 64
    %v1932 = vpop.permute.xlu0 %1931
    %v1934 = vmul.f32 %v1913, %v1932
    %v1936 = vrot.slane %v1934, 4
    %v1937 = vsel %vm232, %v1936, 0
    %1939 = vmatprep.subr.mxu0 0.0
    %1940 = vmatpush1.msra.mxu0 0.0
    %1941 = vmatprep.subr.mxu0 0.0
    %1942 = vmatpush1.msra.mxu0 0.0
    %1943 = vmatprep.subr.mxu0 0.0
    %1944 = vmatpush1.msra.mxu0 0.0
    %1945 = vmatprep.subr.mxu0 0.0
    %1946 = vmatpush1.msra.mxu0 0.0
    %1947 = vmatprep.subr.mxu0 0.0
    %1948 = vmatpush1.msra.mxu0 0.0
    %1949 = vmatprep.subr.mxu0 0.0
    %1950 = vmatpush1.msra.mxu0 0.0
    %1951 = vmatprep.subr.mxu0 0.0
    %1952 = vmatpush1.msra.mxu0 0.0
    %1953 = vmatprep.subr.mxu0 0.0
    %1954 = vmatpush1.msra.mxu0 0.0
    %1955 = vmatprep.subr.mxu0 %v1224
    %1956 = vmatpush1.msra.mxu0 %v1223
    %1957 = vmatprep.subr.mxu0 %v1222
    %1958 = vmatpush1.msra.mxu0 %v1221
    %1959 = vmatprep.subr.mxu0 %v1220
    %1960 = vmatpush1.msra.mxu0 %v1219
    %1961 = vmatprep.subr.mxu0 %v1218
    %1962 = vmatpush1.msra.mxu0 %v1217
    %1963 = vmatprep.subr.mxu0 %v1216
    %1964 = vmatpush1.msra.mxu0 %v1215
    %1965 = vmatprep.subr.mxu0 %v1214
    %1966 = vmatpush1.msra.mxu0 %v1213
    %1967 = vmatprep.subr.mxu0 %v1212
    %1968 = vmatpush1.msra.mxu0 %v1211
    %1969 = vmatprep.subr.mxu0 %v1210
    %1970 = vmatpush1.msra.mxu0 %v1209
    %1971 = vmatprep.subr.mxu0 0.0
    %1972 = vmatpush2.msra.mxu0 0.0
    %1973 = vmatprep.subr.mxu0 0.0
    %1974 = vmatpush2.msra.mxu0 0.0
    %1975 = vmatprep.subr.mxu0 0.0
    %1976 = vmatpush2.msra.mxu0 0.0
    %1977 = vmatprep.subr.mxu0 0.0
    %1978 = vmatpush2.msra.mxu0 0.0
    %1979 = vmatprep.subr.mxu0 0.0
    %1980 = vmatpush2.msra.mxu0 0.0
    %1981 = vmatprep.subr.mxu0 0.0
    %1982 = vmatpush2.msra.mxu0 0.0
    %1983 = vmatprep.subr.mxu0 0.0
    %1984 = vmatpush2.msra.mxu0 0.0
    %1985 = vmatprep.subr.mxu0 0.0
    %1986 = vmatpush2.msra.mxu0 0.0
    %1987 = vmatprep.subr.mxu0 0.0
    %1988 = vmatpush2.msra.mxu0 0.0
    %1989 = vmatprep.subr.mxu0 0.0
    %1990 = vmatpush2.msra.mxu0 0.0
    %1991 = vmatprep.subr.mxu0 0.0
    %1992 = vmatpush2.msra.mxu0 0.0
    %1993 = vmatprep.subr.mxu0 0.0
    %1994 = vmatpush2.msra.mxu0 0.0
    %1995 = vmatprep.subr.mxu0 0.0
    %1996 = vmatpush2.msra.mxu0 0.0
    %1997 = vmatprep.subr.mxu0 0.0
    %1998 = vmatpush2.msra.mxu0 0.0
    %1999 = vmatprep.subr.mxu0 0.0
    %2000 = vmatpush2.msra.mxu0 0.0
    %2001 = vmatprep.subr.mxu0 0.0
    %2002 = vmatpush2.msra.mxu0 0.0
    %2003 = vmatprep.mubr.f32.mxu0 0.0
    %2004 = vmatmul.mubr.f32.gmra.mxu0 %v1937
    %v2005 = vpop.f32.mrf.mxu0
    %v2006 = vadd.f32 0.0, %v2005
    %v2007 = vpop.f32.mrf.mxu0
    %v2008 = vadd.f32 0.0, %v2007
    %2009 = vdwg.mxu0
    %v2012 = vrot.slane %v2006, 2
    %v2013 = vrot.slane %v2008, 2
    %v2016 = vadd.f32 %v1205, %v2012
    %v2017 = vadd.f32 %v1207, %v2013
    %v2018 = vxor.u32 %v2016, 2147483648
    %v2019 = vxor.u32 %v2017, 2147483648
    %v2020 = vmul.f32 %v2018, 1.442695
    %v2021 = vpow.pop %v2020
    %v2022 = vmul.f32 %v2019, 1.442695
    %v2023 = vpow.pop %v2022
    %v2024 = vadd.f32 %v2021, 1.0
    %v2025 = vadd.f32 %v2023, 1.0
    %v2026 = vrcp.pop %v2024
    %v2027 = vmul.f32 1.0, %v2026
    %v2028 = vrcp.pop %v2025
    %v2029 = vmul.f32 1.0, %v2028
    %v2030 = vtanh.pop %v2017
    %v2032 = vrot.slane %v1928, 6
    %v2034 = vmul.f32 %v2027, %v2032
    %2036 = vrot.lane.b32.xlu0 %v2030, 64
    %v2037 = vpop.permute.xlu0 %2036
    %v2039 = vmul.f32 %v2027, %v2037
    %2041 = vrot.lane.b32.xlu0 %v2039, 64
    %v2042 = vpop.permute.xlu0 %2041
    %v2044 = vadd.f32 %v2034, %v2042
    %v2045 = vtanh.pop %v2044
    %2047 = vrot.lane.b32.xlu0 %v2045, 64
    %v2048 = vpop.permute.xlu0 %2047
    %v2050 = vmul.f32 %v2029, %v2048
    %v2052 = vrot.slane %v2050, 6
    %2053 = vrot.lane.b32.xlu0 %v2052, 64
    %v2054 = vpop.permute.xlu0 %2053
    %v2056 = vsel %vm232, %v1244, %v2054
    %v2057 = vrot.slane %v1934, 2
    %2058 = vrot.lane.b32.xlu0 %v2057, 64
    %v2059 = vpop.permute.xlu0 %2058
    %v2061 = vsel %vm232, %v1361, %v2059
    %v2062 = vrot.slane %v1818, 6
    %2063 = vrot.lane.b32.xlu0 %v2062, 64
    %v2064 = vpop.permute.xlu0 %2063
    %v2066 = vsel %vm232, %v1477, %v2064
    %v2067 = vrot.slane %v1703, 2
    %2068 = vrot.lane.b32.xlu0 %v2067, 64
    %v2069 = vpop.permute.xlu0 %2068
    %v2071 = vsel %vm232, %v1593, %v2069
    %2072 = vrot.lane.b32.xlu0 %v1595, 64
    %v2073 = vpop.permute.xlu0 %2072
    %v2075 = vsel %vm232, %v1703, %v2073
    %v2076 = vrot.slane %v1477, 2
    %2077 = vrot.lane.b32.xlu0 %v2076, 64
    %v2078 = vpop.permute.xlu0 %2077
    %v2080 = vsel %vm232, %v1818, %v2078
    %v2081 = vrot.slane %v1361, 6
    %2082 = vrot.lane.b32.xlu0 %v2081, 64
    %v2083 = vpop.permute.xlu0 %2082
    %v2085 = vsel %vm232, %v1934, %v2083
    %v2086 = vrot.slane %v1244, 2
    %2087 = vrot.lane.b32.xlu0 %v2086, 64
    %v2088 = vpop.permute.xlu0 %2087
    %v2090 = vsel %vm232, %v2050, %v2088
    %v2091 = vsel %vm1079, %v2056, %v2061
    %v2092 = vsel %vm1081, %v2091, %v2066
    %v2093 = vsel %vm1083, %v2092, %v2071
    %v2094 = vsel %vm1079, %v2075, %v2080
    %v2095 = vsel %vm1081, %v2094, %v2085
    %v2096 = vsel %vm1083, %v2095, %v2090
    %v2097 = vld [vmem:[%s9] sm:$0xff]
    %v2098 = vld [vmem:[%s9 + $0x8] sm:$0xff]
    %v2099 = vld [vmem:[%s9 + $0x10] sm:$0xff]
    %v2100 = vld [vmem:[%s9 + $0x18] sm:$0xff]
    %v2101 = vld [vmem:[%s9 + $0x20] sm:$0xff]
    %v2102 = vld [vmem:[%s9 + $0x28] sm:$0xff]
    %v2103 = vld [vmem:[%s9 + $0x30] sm:$0xff]
    %v2104 = vld [vmem:[%s9 + $0x38] sm:$0xff]
    %v2105 = vld [vmem:[%s9 + $0x40] sm:$0xff]
    %v2106 = vld [vmem:[%s9 + $0x48] sm:$0xff]
    %v2107 = vld [vmem:[%s9 + $0x50] sm:$0xff]
    %v2108 = vld [vmem:[%s9 + $0x58] sm:$0xff]
    %v2109 = vld [vmem:[%s9 + $0x60] sm:$0xff]
    %v2110 = vld [vmem:[%s9 + $0x68] sm:$0xff]
    %v2111 = vld [vmem:[%s9 + $0x70] sm:$0xff]
    %v2112 = vld [vmem:[%s9 + $0x78] sm:$0xff]
    %v2113 = vld [vmem:[%s10] sm:$0x1]
    %v2115 = vlaneseq
    %v2116 = vshrl.u32 %v2115, 7
    %v2117 = vsub.s32 0, %v2116
    %v2118 = vrot.slane %v2113, %v2117
    %2120 = vmatprep.subr.mxu0 0.0
    %2121 = vmatpush1.msra.mxu0 %v2112
    %2122 = vmatprep.subr.mxu0 0.0
    %2123 = vmatpush1.msra.mxu0 %v2111
    %2124 = vmatprep.subr.mxu0 0.0
    %2125 = vmatpush1.msra.mxu0 %v2110
    %2126 = vmatprep.subr.mxu0 0.0
    %2127 = vmatpush1.msra.mxu0 %v2109
    %2128 = vmatprep.subr.mxu0 0.0
    %2129 = vmatpush1.msra.mxu0 %v2108
    %2130 = vmatprep.subr.mxu0 0.0
    %2131 = vmatpush1.msra.mxu0 %v2107
    %2132 = vmatprep.subr.mxu0 0.0
    %2133 = vmatpush1.msra.mxu0 %v2106
    %2134 = vmatprep.subr.mxu0 0.0
    %2135 = vmatpush1.msra.mxu0 %v2105
    %2136 = vmatprep.subr.mxu0 0.0
    %2137 = vmatpush1.msra.mxu0 %v2104
    %2138 = vmatprep.subr.mxu0 0.0
    %2139 = vmatpush1.msra.mxu0 %v2103
    %2140 = vmatprep.subr.mxu0 0.0
    %2141 = vmatpush1.msra.mxu0 %v2102
    %2142 = vmatprep.subr.mxu0 0.0
    %2143 = vmatpush1.msra.mxu0 %v2101
    %2144 = vmatprep.subr.mxu0 0.0
    %2145 = vmatpush1.msra.mxu0 %v2100
    %2146 = vmatprep.subr.mxu0 0.0
    %2147 = vmatpush1.msra.mxu0 %v2099
    %2148 = vmatprep.subr.mxu0 0.0
    %2149 = vmatpush1.msra.mxu0 %v2098
    %2150 = vmatprep.subr.mxu0 0.0
    %2151 = vmatpush1.msra.mxu0 %v2097
    %2152 = vmatprep.subr.mxu0 0.0
    %2153 = vmatpush2.msra.mxu0 0.0
    %2154 = vmatprep.subr.mxu0 0.0
    %2155 = vmatpush2.msra.mxu0 0.0
    %2156 = vmatprep.subr.mxu0 0.0
    %2157 = vmatpush2.msra.mxu0 0.0
    %2158 = vmatprep.subr.mxu0 0.0
    %2159 = vmatpush2.msra.mxu0 0.0
    %2160 = vmatprep.subr.mxu0 0.0
    %2161 = vmatpush2.msra.mxu0 0.0
    %2162 = vmatprep.subr.mxu0 0.0
    %2163 = vmatpush2.msra.mxu0 0.0
    %2164 = vmatprep.subr.mxu0 0.0
    %2165 = vmatpush2.msra.mxu0 0.0
    %2166 = vmatprep.subr.mxu0 0.0
    %2167 = vmatpush2.msra.mxu0 0.0
    %2168 = vmatprep.subr.mxu0 0.0
    %2169 = vmatpush2.msra.mxu0 0.0
    %2170 = vmatprep.subr.mxu0 0.0
    %2171 = vmatpush2.msra.mxu0 0.0
    %2172 = vmatprep.subr.mxu0 0.0
    %2173 = vmatpush2.msra.mxu0 0.0
    %2174 = vmatprep.subr.mxu0 0.0
    %2175 = vmatpush2.msra.mxu0 0.0
    %2176 = vmatprep.subr.mxu0 0.0
    %2177 = vmatpush2.msra.mxu0 0.0
    %2178 = vmatprep.subr.mxu0 0.0
    %2179 = vmatpush2.msra.mxu0 0.0
    %2180 = vmatprep.subr.mxu0 0.0
    %2181 = vmatpush2.msra.mxu0 0.0
    %2182 = vmatprep.subr.mxu0 0.0
    %2183 = vmatpush2.msra.mxu0 0.0
    %2184 = vmatprep.mubr.f32.mxu0 0.0
    %2185 = vmatmul.mubr.f32.gmra.mxu0 %v2093
    %v2186 = vpop.f32.mrf.mxu0
    %v2187 = vadd.f32 %v2118, %v2186
    %v2188 = vpop.f32.mrf.mxu0
    %2189 = vmatprep.mubr.f32.mxu0 0.0
    %2190 = vmatmul.mubr.f32.gmra.mxu0 %v2096
    %v2191 = vpop.f32.mrf.mxu0
    %v2192 = vadd.f32 %v2118, %v2191
    %v2193 = vpop.f32.mrf.mxu0
    %2194 = vdwg.mxu0
    %v2195 = vld [vmem:[%s11] sm:$0xff]
    %v2196 = vld [vmem:[%s11 + $0x8] sm:$0xff]
    %v2197 = vld [vmem:[%s11 + $0x10] sm:$0xff]
    %v2198 = vld [vmem:[%s11 + $0x18] sm:$0xff]
    %v2199 = vld [vmem:[%s11 + $0x20] sm:$0xff]
    %v2200 = vld [vmem:[%s11 + $0x28] sm:$0xff]
    %v2201 = vld [vmem:[%s11 + $0x30] sm:$0xff]
    %v2202 = vld [vmem:[%s11 + $0x38] sm:$0xff]
    %v2203 = vld [vmem:[%s11 + $0x40] sm:$0xff]
    %v2204 = vld [vmem:[%s11 + $0x48] sm:$0xff]
    %v2205 = vld [vmem:[%s11 + $0x50] sm:$0xff]
    %v2206 = vld [vmem:[%s11 + $0x58] sm:$0xff]
    %v2207 = vld [vmem:[%s11 + $0x60] sm:$0xff]
    %v2208 = vld [vmem:[%s11 + $0x68] sm:$0xff]
    %v2209 = vld [vmem:[%s11 + $0x70] sm:$0xff]
    %v2210 = vld [vmem:[%s11 + $0x78] sm:$0xff]
    %v2211 = vld [vmem:[%s12] sm:$0x1]
    %v2213 = vlaneseq
    %v2214 = vshrl.u32 %v2213, 7
    %v2215 = vsub.s32 0, %v2214
    %v2216 = vrot.slane %v2211, %v2215
    %2218 = vmatprep.subr.mxu0 0.0
    %2219 = vmatpush1.msra.mxu0 %v2210
    %2220 = vmatprep.subr.mxu0 0.0
    %2221 = vmatpush1.msra.mxu0 %v2209
    %2222 = vmatprep.subr.mxu0 0.0
    %2223 = vmatpush1.msra.mxu0 %v2208
    %2224 = vmatprep.subr.mxu0 0.0
    %2225 = vmatpush1.msra.mxu0 %v2207
    %2226 = vmatprep.subr.mxu0 0.0
    %2227 = vmatpush1.msra.mxu0 %v2206
    %2228 = vmatprep.subr.mxu0 0.0
    %2229 = vmatpush1.msra.mxu0 %v2205
    %2230 = vmatprep.subr.mxu0 0.0
    %2231 = vmatpush1.msra.mxu0 %v2204
    %2232 = vmatprep.subr.mxu0 0.0
    %2233 = vmatpush1.msra.mxu0 %v2203
    %2234 = vmatprep.subr.mxu0 0.0
    %2235 = vmatpush1.msra.mxu0 %v2202
    %2236 = vmatprep.subr.mxu0 0.0
    %2237 = vmatpush1.msra.mxu0 %v2201
    %2238 = vmatprep.subr.mxu0 0.0
    %2239 = vmatpush1.msra.mxu0 %v2200
    %2240 = vmatprep.subr.mxu0 0.0
    %2241 = vmatpush1.msra.mxu0 %v2199
    %2242 = vmatprep.subr.mxu0 0.0
    %2243 = vmatpush1.msra.mxu0 %v2198
    %2244 = vmatprep.subr.mxu0 0.0
    %2245 = vmatpush1.msra.mxu0 %v2197
    %2246 = vmatprep.subr.mxu0 0.0
    %2247 = vmatpush1.msra.mxu0 %v2196
    %2248 = vmatprep.subr.mxu0 0.0
    %2249 = vmatpush1.msra.mxu0 %v2195
    %2250 = vmatprep.subr.mxu0 0.0
    %2251 = vmatpush2.msra.mxu0 0.0
    %2252 = vmatprep.subr.mxu0 0.0
    %2253 = vmatpush2.msra.mxu0 0.0
    %2254 = vmatprep.subr.mxu0 0.0
    %2255 = vmatpush2.msra.mxu0 0.0
    %2256 = vmatprep.subr.mxu0 0.0
    %2257 = vmatpush2.msra.mxu0 0.0
    %2258 = vmatprep.subr.mxu0 0.0
    %2259 = vmatpush2.msra.mxu0 0.0
    %2260 = vmatprep.subr.mxu0 0.0
    %2261 = vmatpush2.msra.mxu0 0.0
    %2262 = vmatprep.subr.mxu0 0.0
    %2263 = vmatpush2.msra.mxu0 0.0
    %2264 = vmatprep.subr.mxu0 0.0
    %2265 = vmatpush2.msra.mxu0 0.0
    %2266 = vmatprep.subr.mxu0 0.0
    %2267 = vmatpush2.msra.mxu0 0.0
    %2268 = vmatprep.subr.mxu0 0.0
    %2269 = vmatpush2.msra.mxu0 0.0
    %2270 = vmatprep.subr.mxu0 0.0
    %2271 = vmatpush2.msra.mxu0 0.0
    %2272 = vmatprep.subr.mxu0 0.0
    %2273 = vmatpush2.msra.mxu0 0.0
    %2274 = vmatprep.subr.mxu0 0.0
    %2275 = vmatpush2.msra.mxu0 0.0
    %2276 = vmatprep.subr.mxu0 0.0
    %2277 = vmatpush2.msra.mxu0 0.0
    %2278 = vmatprep.subr.mxu0 0.0
    %2279 = vmatpush2.msra.mxu0 0.0
    %2280 = vmatprep.subr.mxu0 0.0
    %2281 = vmatpush2.msra.mxu0 0.0
    %2282 = vmatprep.mubr.f32.mxu0 0.0
    %2283 = vmatmul.mubr.f32.gmra.mxu0 %v2093
    %v2284 = vpop.f32.mrf.mxu0
    %v2285 = vadd.f32 %v2216, %v2284
    %v2286 = vpop.f32.mrf.mxu0
    %2287 = vmatprep.mubr.f32.mxu0 0.0
    %2288 = vmatmul.mubr.f32.gmra.mxu0 %v2096
    %v2289 = vpop.f32.mrf.mxu0
    %v2290 = vadd.f32 %v2216, %v2289
    %v2291 = vpop.f32.mrf.mxu0
    %2292 = vdwg.mxu0
    %v2293 = vld [vmem:[%s13] sm:$0xff]
    %v2294 = vld [vmem:[%s13 + $0x8] sm:$0xff]
    %v2295 = vld [vmem:[%s13 + $0x10] sm:$0xff]
    %v2296 = vld [vmem:[%s13 + $0x18] sm:$0xff]
    %v2297 = vld [vmem:[%s13 + $0x20] sm:$0xff]
    %v2298 = vld [vmem:[%s13 + $0x28] sm:$0xff]
    %v2299 = vld [vmem:[%s13 + $0x30] sm:$0xff]
    %v2300 = vld [vmem:[%s13 + $0x38] sm:$0xff]
    %v2301 = vld [vmem:[%s13 + $0x40] sm:$0xff]
    %v2302 = vld [vmem:[%s13 + $0x48] sm:$0xff]
    %v2303 = vld [vmem:[%s13 + $0x50] sm:$0xff]
    %v2304 = vld [vmem:[%s13 + $0x58] sm:$0xff]
    %v2305 = vld [vmem:[%s13 + $0x60] sm:$0xff]
    %v2306 = vld [vmem:[%s13 + $0x68] sm:$0xff]
    %v2307 = vld [vmem:[%s13 + $0x70] sm:$0xff]
    %v2308 = vld [vmem:[%s13 + $0x78] sm:$0xff]
    %v2309 = vld [vmem:[%s14] sm:$0x1]
    %v2311 = vlaneseq
    %v2312 = vshrl.u32 %v2311, 7
    %v2313 = vsub.s32 0, %v2312
    %v2314 = vrot.slane %v2309, %v2313
    %2316 = vmatprep.subr.mxu0 0.0
    %2317 = vmatpush1.msra.mxu0 %v2308
    %2318 = vmatprep.subr.mxu0 0.0
    %2319 = vmatpush1.msra.mxu0 %v2307
    %2320 = vmatprep.subr.mxu0 0.0
    %2321 = vmatpush1.msra.mxu0 %v2306
    %2322 = vmatprep.subr.mxu0 0.0
    %2323 = vmatpush1.msra.mxu0 %v2305
    %2324 = vmatprep.subr.mxu0 0.0
    %2325 = vmatpush1.msra.mxu0 %v2304
    %2326 = vmatprep.subr.mxu0 0.0
    %2327 = vmatpush1.msra.mxu0 %v2303
    %2328 = vmatprep.subr.mxu0 0.0
    %2329 = vmatpush1.msra.mxu0 %v2302
    %2330 = vmatprep.subr.mxu0 0.0
    %2331 = vmatpush1.msra.mxu0 %v2301
    %2332 = vmatprep.subr.mxu0 0.0
    %2333 = vmatpush1.msra.mxu0 %v2300
    %2334 = vmatprep.subr.mxu0 0.0
    %2335 = vmatpush1.msra.mxu0 %v2299
    %2336 = vmatprep.subr.mxu0 0.0
    %2337 = vmatpush1.msra.mxu0 %v2298
    %2338 = vmatprep.subr.mxu0 0.0
    %2339 = vmatpush1.msra.mxu0 %v2297
    %2340 = vmatprep.subr.mxu0 0.0
    %2341 = vmatpush1.msra.mxu0 %v2296
    %2342 = vmatprep.subr.mxu0 0.0
    %2343 = vmatpush1.msra.mxu0 %v2295
    %2344 = vmatprep.subr.mxu0 0.0
    %2345 = vmatpush1.msra.mxu0 %v2294
    %2346 = vmatprep.subr.mxu0 0.0
    %2347 = vmatpush1.msra.mxu0 %v2293
    %2348 = vmatprep.subr.mxu0 0.0
    %2349 = vmatpush2.msra.mxu0 0.0
    %2350 = vmatprep.subr.mxu0 0.0
    %2351 = vmatpush2.msra.mxu0 0.0
    %2352 = vmatprep.subr.mxu0 0.0
    %2353 = vmatpush2.msra.mxu0 0.0
    %2354 = vmatprep.subr.mxu0 0.0
    %2355 = vmatpush2.msra.mxu0 0.0
    %2356 = vmatprep.subr.mxu0 0.0
    %2357 = vmatpush2.msra.mxu0 0.0
    %2358 = vmatprep.subr.mxu0 0.0
    %2359 = vmatpush2.msra.mxu0 0.0
    %2360 = vmatprep.subr.mxu0 0.0
    %2361 = vmatpush2.msra.mxu0 0.0
    %2362 = vmatprep.subr.mxu0 0.0
    %2363 = vmatpush2.msra.mxu0 0.0
    %2364 = vmatprep.subr.mxu0 0.0
    %2365 = vmatpush2.msra.mxu0 0.0
    %2366 = vmatprep.subr.mxu0 0.0
    %2367 = vmatpush2.msra.mxu0 0.0
    %2368 = vmatprep.subr.mxu0 0.0
    %2369 = vmatpush2.msra.mxu0 0.0
    %2370 = vmatprep.subr.mxu0 0.0
    %2371 = vmatpush2.msra.mxu0 0.0
    %2372 = vmatprep.subr.mxu0 0.0
    %2373 = vmatpush2.msra.mxu0 0.0
    %2374 = vmatprep.subr.mxu0 0.0
    %2375 = vmatpush2.msra.mxu0 0.0
    %2376 = vmatprep.subr.mxu0 0.0
    %2377 = vmatpush2.msra.mxu0 0.0
    %2378 = vmatprep.subr.mxu0 0.0
    %2379 = vmatpush2.msra.mxu0 0.0
    %2380 = vmatprep.mubr.f32.mxu0 0.0
    %2381 = vmatmul.mubr.f32.gmra.mxu0 %v2093
    %v2382 = vpop.f32.mrf.mxu0
    %v2383 = vadd.f32 %v2314, %v2382
    %v2384 = vpop.f32.mrf.mxu0
    %2385 = vmatprep.mubr.f32.mxu0 0.0
    %2386 = vmatmul.mubr.f32.gmra.mxu0 %v2096
    %v2387 = vpop.f32.mrf.mxu0
    %v2388 = vadd.f32 %v2314, %v2387
    %v2389 = vpop.f32.mrf.mxu0
    %2390 = vdwg.mxu0
    %v2391 = vld [vmem:[%s7] sm:$0xff]
    %v2392 = vld [vmem:[%s7 + $0x8] sm:$0xff]
    %vm2393 = vcmask 64512
    %v2395 = vsel %vm2393, %v2187, 0
    %v2398 = vsel %vm2393, %v2192, 0
    %v2401 = vsel %vm2393, %v2285, 0
    %v2404 = vsel %vm2393, %v2290, 0
    %2406 = vmatprep.subr.mxu0 0.0
    %2407 = vmatpush1.xpose.msra.mxu0 0.0
    %2408 = vmatprep.subr.mxu0 0.0
    %2409 = vmatpush1.xpose.msra.mxu0 0.0
    %2410 = vmatprep.subr.mxu0 0.0
    %2411 = vmatpush1.xpose.msra.mxu0 0.0
    %2412 = vmatprep.subr.mxu0 0.0
    %2413 = vmatpush1.xpose.msra.mxu0 0.0
    %2414 = vmatprep.subr.mxu0 0.0
    %2415 = vmatpush1.xpose.msra.mxu0 0.0
    %2416 = vmatprep.subr.mxu0 0.0
    %2417 = vmatpush1.xpose.msra.mxu0 0.0
    %2418 = vmatprep.subr.mxu0 0.0
    %2419 = vmatpush1.xpose.msra.mxu0 0.0
    %2420 = vmatprep.subr.mxu0 0.0
    %2421 = vmatpush1.xpose.msra.mxu0 0.0
    %2422 = vmatprep.subr.mxu0 0.0
    %2423 = vmatpush1.xpose.msra.mxu0 0.0
    %2424 = vmatprep.subr.mxu0 0.0
    %2425 = vmatpush1.xpose.msra.mxu0 0.0
    %2426 = vmatprep.subr.mxu0 0.0
    %2427 = vmatpush1.xpose.msra.mxu0 0.0
    %2428 = vmatprep.subr.mxu0 0.0
    %2429 = vmatpush1.xpose.msra.mxu0 0.0
    %2430 = vmatprep.subr.mxu0 0.0
    %2431 = vmatpush1.xpose.msra.mxu0 0.0
    %2432 = vmatprep.subr.mxu0 0.0
    %2433 = vmatpush1.xpose.msra.mxu0 0.0
    %2434 = vmatprep.subr.mxu0 0.0
    %2435 = vmatpush1.xpose.msra.mxu0 %v2404
    %2436 = vmatprep.subr.mxu0 0.0
    %2437 = vmatpush1.xpose.msra.mxu0 %v2401
    %2438 = vmatprep.subr.mxu0 0.0
    %2439 = vmatpush2.xpose.msra.mxu0 0.0
    %2440 = vmatprep.subr.mxu0 0.0
    %2441 = vmatpush2.xpose.msra.mxu0 0.0
    %2442 = vmatprep.subr.mxu0 0.0
    %2443 = vmatpush2.xpose.msra.mxu0 0.0
    %2444 = vmatprep.subr.mxu0 0.0
    %2445 = vmatpush2.xpose.msra.mxu0 0.0
    %2446 = vmatprep.subr.mxu0 0.0
    %2447 = vmatpush2.xpose.msra.mxu0 0.0
    %2448 = vmatprep.subr.mxu0 0.0
    %2449 = vmatpush2.xpose.msra.mxu0 0.0
    %2450 = vmatprep.subr.mxu0 0.0
    %2451 = vmatpush2.xpose.msra.mxu0 0.0
    %2452 = vmatprep.subr.mxu0 0.0
    %2453 = vmatpush2.xpose.msra.mxu0 0.0
    %2454 = vmatprep.subr.mxu0 0.0
    %2455 = vmatpush2.xpose.msra.mxu0 0.0
    %2456 = vmatprep.subr.mxu0 0.0
    %2457 = vmatpush2.xpose.msra.mxu0 0.0
    %2458 = vmatprep.subr.mxu0 0.0
    %2459 = vmatpush2.xpose.msra.mxu0 0.0
    %2460 = vmatprep.subr.mxu0 0.0
    %2461 = vmatpush2.xpose.msra.mxu0 0.0
    %2462 = vmatprep.subr.mxu0 0.0
    %2463 = vmatpush2.xpose.msra.mxu0 0.0
    %2464 = vmatprep.subr.mxu0 0.0
    %2465 = vmatpush2.xpose.msra.mxu0 0.0
    %2466 = vmatprep.subr.mxu0 0.0
    %2467 = vmatpush2.xpose.msra.mxu0 0.0
    %2468 = vmatprep.subr.mxu0 0.0
    %2469 = vmatpush2.xpose.msra.mxu0 0.0
    %2470 = vmatprep.mubr.f32.mxu0 0.0
    %2471 = vmatmul.mubr.f32.gmra.mxu0 %v2395
    %v2472 = vpop.f32.mrf.mxu0
    %v2473 = vadd.f32 0.0, %v2472
    %v2474 = vpop.f32.mrf.mxu0
    %2475 = vmatprep.mubr.f32.mxu0 0.0
    %2476 = vmatmul.mubr.f32.gmra.mxu0 %v2398
    %v2477 = vpop.f32.mrf.mxu0
    %v2478 = vadd.f32 0.0, %v2477
    %v2479 = vpop.f32.mrf.mxu0
    %2480 = vdwg.mxu0
    %v2481 = vmul.f32 %v2473, 0.35355338
    %v2482 = vmul.f32 %v2478, 0.35355338
    %v2483 = vadd.f32 %v2481, %v2391
    %v2484 = vadd.f32 %v2482, %v2392
    %vm2485 = vcmask 130048
    %v2486 = vsel %vm2485, %v2483, -inf
    %2487 = vmax.xlane.f32.xlu0 %v2486
    %v2488 = vpop.xlane.xlu0 %2487
    %v2489 = vsel %vm2485, %v2484, -inf
    %2490 = vmax.xlane.f32.xlu0 %v2489
    %v2491 = vpop.xlane.xlu0 %2490
    %v2492 = vsub.f32 %v2483, %v2488
    %v2493 = vsub.f32 %v2484, %v2491
    %v2494 = vmul.f32 %v2492, 1.442695
    %v2495 = vpow.pop %v2494
    %v2496 = vmul.f32 %v2493, 1.442695
    %v2497 = vpow.pop %v2496
    %v2498 = vsel %vm2485, %v2495, 0.0
    %2499 = vadd.xlane.f32.xlu0 %v2498
    %v2500 = vpop.xlane.xlu0 %2499
    %v2501 = vsel %vm2485, %v2497, 0.0
    %2502 = vadd.xlane.f32.xlu0 %v2501
    %v2503 = vpop.xlane.xlu0 %2502
    %v2504 = vrcp.pop %v2500
    %v2505 = vmul.f32 %v2495, %v2504
    %v2506 = vrcp.pop %v2503
    %v2507 = vmul.f32 %v2497, %v2506
    %v2509 = vsel %vm2485, %v2505, 0
    %v2512 = vsel %vm2485, %v2507, 0
    %2514 = vmatprep.subr.mxu0 0.0
    %2515 = vmatpush1.msra.mxu0 0.0
    %2516 = vmatprep.subr.mxu0 0.0
    %2517 = vmatpush1.msra.mxu0 0.0
    %2518 = vmatprep.subr.mxu0 0.0
    %2519 = vmatpush1.msra.mxu0 0.0
    %2520 = vmatprep.subr.mxu0 0.0
    %2521 = vmatpush1.msra.mxu0 0.0
    %2522 = vmatprep.subr.mxu0 0.0
    %2523 = vmatpush1.msra.mxu0 0.0
    %2524 = vmatprep.subr.mxu0 0.0
    %2525 = vmatpush1.msra.mxu0 0.0
    %2526 = vmatprep.subr.mxu0 0.0
    %2527 = vmatpush1.msra.mxu0 0.0
    %2528 = vmatprep.subr.mxu0 0.0
    %2529 = vmatpush1.msra.mxu0 0.0
    %2530 = vmatprep.subr.mxu0 0.0
    %2531 = vmatpush1.msra.mxu0 0.0
    %2532 = vmatprep.subr.mxu0 0.0
    %2533 = vmatpush1.msra.mxu0 0.0
    %2534 = vmatprep.subr.mxu0 0.0
    %2535 = vmatpush1.msra.mxu0 0.0
    %2536 = vmatprep.subr.mxu0 0.0
    %2537 = vmatpush1.msra.mxu0 0.0
    %2538 = vmatprep.subr.mxu0 0.0
    %2539 = vmatpush1.msra.mxu0 0.0
    %2540 = vmatprep.subr.mxu0 0.0
    %2541 = vmatpush1.msra.mxu0 0.0
    %2542 = vmatprep.subr.mxu0 0.0
    %2543 = vmatpush1.msra.mxu0 %v2388
    %2544 = vmatprep.subr.mxu0 0.0
    %2545 = vmatpush1.msra.mxu0 %v2383
    %2546 = vmatprep.subr.mxu0 0.0
    %2547 = vmatpush2.msra.mxu0 0.0
    %2548 = vmatprep.subr.mxu0 0.0
    %2549 = vmatpush2.msra.mxu0 0.0
    %2550 = vmatprep.subr.mxu0 0.0
    %2551 = vmatpush2.msra.mxu0 0.0
    %2552 = vmatprep.subr.mxu0 0.0
    %2553 = vmatpush2.msra.mxu0 0.0
    %2554 = vmatprep.subr.mxu0 0.0
    %2555 = vmatpush2.msra.mxu0 0.0
    %2556 = vmatprep.subr.mxu0 0.0
    %2557 = vmatpush2.msra.mxu0 0.0
    %2558 = vmatprep.subr.mxu0 0.0
    %2559 = vmatpush2.msra.mxu0 0.0
    %2560 = vmatprep.subr.mxu0 0.0
    %2561 = vmatpush2.msra.mxu0 0.0
    %2562 = vmatprep.subr.mxu0 0.0
    %2563 = vmatpush2.msra.mxu0 0.0
    %2564 = vmatprep.subr.mxu0 0.0
    %2565 = vmatpush2.msra.mxu0 0.0
    %2566 = vmatprep.subr.mxu0 0.0
    %2567 = vmatpush2.msra.mxu0 0.0
    %2568 = vmatprep.subr.mxu0 0.0
    %2569 = vmatpush2.msra.mxu0 0.0
    %2570 = vmatprep.subr.mxu0 0.0
    %2571 = vmatpush2.msra.mxu0 0.0
    %2572 = vmatprep.subr.mxu0 0.0
    %2573 = vmatpush2.msra.mxu0 0.0
    %2574 = vmatprep.subr.mxu0 0.0
    %2575 = vmatpush2.msra.mxu0 0.0
    %2576 = vmatprep.subr.mxu0 0.0
    %2577 = vmatpush2.msra.mxu0 0.0
    %2578 = vmatprep.mubr.f32.mxu0 0.0
    %2579 = vmatmul.mubr.f32.gmra.mxu0 %v2509
    %v2580 = vpop.f32.mrf.mxu0
    %v2581 = vadd.f32 0.0, %v2580
    %v2582 = vpop.f32.mrf.mxu0
    %2583 = vmatprep.mubr.f32.mxu0 0.0
    %2584 = vmatmul.mubr.f32.gmra.mxu0 %v2512
    %v2585 = vpop.f32.mrf.mxu0
    %v2586 = vadd.f32 0.0, %v2585
    %v2587 = vpop.f32.mrf.mxu0
    %2588 = vdwg.mxu0
    %2589 = vrot.lane.b32.xlu0 %v2187, 120
    %v2590 = vpop.permute.xlu0 %2589
    %2591 = vrot.lane.b32.xlu0 %v2192, 120
    %v2592 = vpop.permute.xlu0 %2591
    %2593 = vrot.lane.b32.xlu0 %v2285, 120
    %v2594 = vpop.permute.xlu0 %2593
    %2595 = vrot.lane.b32.xlu0 %v2290, 120
    %v2596 = vpop.permute.xlu0 %2595
    %v2597 = vsel %vm2393, %v2590, 0
    %v2599 = vsel %vm2393, %v2592, 0
    %v2601 = vsel %vm2393, %v2594, 0
    %v2603 = vsel %vm2393, %v2596, 0
    %2605 = vmatprep.subr.mxu0 0.0
    %2606 = vmatpush1.xpose.msra.mxu0 0.0
    %2607 = vmatprep.subr.mxu0 0.0
    %2608 = vmatpush1.xpose.msra.mxu0 0.0
    %2609 = vmatprep.subr.mxu0 0.0
    %2610 = vmatpush1.xpose.msra.mxu0 0.0
    %2611 = vmatprep.subr.mxu0 0.0
    %2612 = vmatpush1.xpose.msra.mxu0 0.0
    %2613 = vmatprep.subr.mxu0 0.0
    %2614 = vmatpush1.xpose.msra.mxu0 0.0
    %2615 = vmatprep.subr.mxu0 0.0
    %2616 = vmatpush1.xpose.msra.mxu0 0.0
    %2617 = vmatprep.subr.mxu0 0.0
    %2618 = vmatpush1.xpose.msra.mxu0 0.0
    %2619 = vmatprep.subr.mxu0 0.0
    %2620 = vmatpush1.xpose.msra.mxu0 0.0
    %2621 = vmatprep.subr.mxu0 0.0
    %2622 = vmatpush1.xpose.msra.mxu0 0.0
    %2623 = vmatprep.subr.mxu0 0.0
    %2624 = vmatpush1.xpose.msra.mxu0 0.0
    %2625 = vmatprep.subr.mxu0 0.0
    %2626 = vmatpush1.xpose.msra.mxu0 0.0
    %2627 = vmatprep.subr.mxu0 0.0
    %2628 = vmatpush1.xpose.msra.mxu0 0.0
    %2629 = vmatprep.subr.mxu0 0.0
    %2630 = vmatpush1.xpose.msra.mxu0 0.0
    %2631 = vmatprep.subr.mxu0 0.0
    %2632 = vmatpush1.xpose.msra.mxu0 0.0
    %2633 = vmatprep.subr.mxu0 0.0
    %2634 = vmatpush1.xpose.msra.mxu0 %v2603
    %2635 = vmatprep.subr.mxu0 0.0
    %2636 = vmatpush1.xpose.msra.mxu0 %v2601
    %2637 = vmatprep.subr.mxu0 0.0
    %2638 = vmatpush2.xpose.msra.mxu0 0.0
    %2639 = vmatprep.subr.mxu0 0.0
    %2640 = vmatpush2.xpose.msra.mxu0 0.0
    %2641 = vmatprep.subr.mxu0 0.0
    %2642 = vmatpush2.xpose.msra.mxu0 0.0
    %2643 = vmatprep.subr.mxu0 0.0
    %2644 = vmatpush2.xpose.msra.mxu0 0.0
    %2645 = vmatprep.subr.mxu0 0.0
    %2646 = vmatpush2.xpose.msra.mxu0 0.0
    %2647 = vmatprep.subr.mxu0 0.0
    %2648 = vmatpush2.xpose.msra.mxu0 0.0
    %2649 = vmatprep.subr.mxu0 0.0
    %2650 = vmatpush2.xpose.msra.mxu0 0.0
    %2651 = vmatprep.subr.mxu0 0.0
    %2652 = vmatpush2.xpose.msra.mxu0 0.0
    %2653 = vmatprep.subr.mxu0 0.0
    %2654 = vmatpush2.xpose.msra.mxu0 0.0
    %2655 = vmatprep.subr.mxu0 0.0
    %2656 = vmatpush2.xpose.msra.mxu0 0.0
    %2657 = vmatprep.subr.mxu0 0.0
    %2658 = vmatpush2.xpose.msra.mxu0 0.0
    %2659 = vmatprep.subr.mxu0 0.0
    %2660 = vmatpush2.xpose.msra.mxu0 0.0
    %2661 = vmatprep.subr.mxu0 0.0
    %2662 = vmatpush2.xpose.msra.mxu0 0.0
    %2663 = vmatprep.subr.mxu0 0.0
    %2664 = vmatpush2.xpose.msra.mxu0 0.0
    %2665 = vmatprep.subr.mxu0 0.0
    %2666 = vmatpush2.xpose.msra.mxu0 0.0
    %2667 = vmatprep.subr.mxu0 0.0
    %2668 = vmatpush2.xpose.msra.mxu0 0.0
    %2669 = vmatprep.mubr.f32.mxu0 0.0
    %2670 = vmatmul.mubr.f32.gmra.mxu0 %v2597
    %v2671 = vpop.f32.mrf.mxu0
    %v2672 = vadd.f32 0.0, %v2671
    %v2673 = vpop.f32.mrf.mxu0
    %2674 = vmatprep.mubr.f32.mxu0 0.0
    %2675 = vmatmul.mubr.f32.gmra.mxu0 %v2599
    %v2676 = vpop.f32.mrf.mxu0
    %v2677 = vadd.f32 0.0, %v2676
    %v2678 = vpop.f32.mrf.mxu0
    %2679 = vdwg.mxu0
    %v2680 = vmul.f32 %v2672, 0.35355338
    %v2681 = vmul.f32 %v2677, 0.35355338
    %v2682 = vadd.f32 %v2680, %v2391
    %v2683 = vadd.f32 %v2681, %v2392
    %v2684 = vsel %vm2485, %v2682, -inf
    %2685 = vmax.xlane.f32.xlu0 %v2684
    %v2686 = vpop.xlane.xlu0 %2685
    %v2687 = vsel %vm2485, %v2683, -inf
    %2688 = vmax.xlane.f32.xlu0 %v2687
    %v2689 = vpop.xlane.xlu0 %2688
    %v2690 = vsub.f32 %v2682, %v2686
    %v2691 = vsub.f32 %v2683, %v2689
    %v2692 = vmul.f32 %v2690, 1.442695
    %v2693 = vpow.pop %v2692
    %v2694 = vmul.f32 %v2691, 1.442695
    %v2695 = vpow.pop %v2694
    %v2696 = vsel %vm2485, %v2693, 0.0
    %2697 = vadd.xlane.f32.xlu0 %v2696
    %v2698 = vpop.xlane.xlu0 %2697
    %v2699 = vsel %vm2485, %v2695, 0.0
    %2700 = vadd.xlane.f32.xlu0 %v2699
    %v2701 = vpop.xlane.xlu0 %2700
    %v2702 = vrcp.pop %v2698
    %v2703 = vmul.f32 %v2693, %v2702
    %v2704 = vrcp.pop %v2701
    %v2705 = vmul.f32 %v2695, %v2704
    %2708 = vrot.lane.b32.xlu0 %v2383, 120
    %v2709 = vpop.permute.xlu0 %2708
    %2710 = vrot.lane.b32.xlu0 %v2388, 120
    %v2711 = vpop.permute.xlu0 %2710
    %v2715 = vsel %vm2485, %v2703, 0
    %v2718 = vsel %vm2485, %v2705, 0
    %2720 = vmatprep.subr.mxu0 0.0
    %2721 = vmatpush1.msra.mxu0 0.0
    %2722 = vmatprep.subr.mxu0 0.0
    %2723 = vmatpush1.msra.mxu0 0.0
    %2724 = vmatprep.subr.mxu0 0.0
    %2725 = vmatpush1.msra.mxu0 0.0
    %2726 = vmatprep.subr.mxu0 0.0
    %2727 = vmatpush1.msra.mxu0 0.0
    %2728 = vmatprep.subr.mxu0 0.0
    %2729 = vmatpush1.msra.mxu0 0.0
    %2730 = vmatprep.subr.mxu0 0.0
    %2731 = vmatpush1.msra.mxu0 0.0
    %2732 = vmatprep.subr.mxu0 0.0
    %2733 = vmatpush1.msra.mxu0 0.0
    %2734 = vmatprep.subr.mxu0 0.0
    %2735 = vmatpush1.msra.mxu0 0.0
    %2736 = vmatprep.subr.mxu0 0.0
    %2737 = vmatpush1.msra.mxu0 0.0
    %2738 = vmatprep.subr.mxu0 0.0
    %2739 = vmatpush1.msra.mxu0 0.0
    %2740 = vmatprep.subr.mxu0 0.0
    %2741 = vmatpush1.msra.mxu0 0.0
    %2742 = vmatprep.subr.mxu0 0.0
    %2743 = vmatpush1.msra.mxu0 0.0
    %2744 = vmatprep.subr.mxu0 0.0
    %2745 = vmatpush1.msra.mxu0 0.0
    %2746 = vmatprep.subr.mxu0 0.0
    %2747 = vmatpush1.msra.mxu0 0.0
    %2748 = vmatprep.subr.mxu0 0.0
    %2749 = vmatpush1.msra.mxu0 %v2711
    %2750 = vmatprep.subr.mxu0 0.0
    %2751 = vmatpush1.msra.mxu0 %v2709
    %2752 = vmatprep.subr.mxu0 0.0
    %2753 = vmatpush2.msra.mxu0 0.0
    %2754 = vmatprep.subr.mxu0 0.0
    %2755 = vmatpush2.msra.mxu0 0.0
    %2756 = vmatprep.subr.mxu0 0.0
    %2757 = vmatpush2.msra.mxu0 0.0
    %2758 = vmatprep.subr.mxu0 0.0
    %2759 = vmatpush2.msra.mxu0 0.0
    %2760 = vmatprep.subr.mxu0 0.0
    %2761 = vmatpush2.msra.mxu0 0.0
    %2762 = vmatprep.subr.mxu0 0.0
    %2763 = vmatpush2.msra.mxu0 0.0
    %2764 = vmatprep.subr.mxu0 0.0
    %2765 = vmatpush2.msra.mxu0 0.0
    %2766 = vmatprep.subr.mxu0 0.0
    %2767 = vmatpush2.msra.mxu0 0.0
    %2768 = vmatprep.subr.mxu0 0.0
    %2769 = vmatpush2.msra.mxu0 0.0
    %2770 = vmatprep.subr.mxu0 0.0
    %2771 = vmatpush2.msra.mxu0 0.0
    %2772 = vmatprep.subr.mxu0 0.0
    %2773 = vmatpush2.msra.mxu0 0.0
    %2774 = vmatprep.subr.mxu0 0.0
    %2775 = vmatpush2.msra.mxu0 0.0
    %2776 = vmatprep.subr.mxu0 0.0
    %2777 = vmatpush2.msra.mxu0 0.0
    %2778 = vmatprep.subr.mxu0 0.0
    %2779 = vmatpush2.msra.mxu0 0.0
    %2780 = vmatprep.subr.mxu0 0.0
    %2781 = vmatpush2.msra.mxu0 0.0
    %2782 = vmatprep.subr.mxu0 0.0
    %2783 = vmatpush2.msra.mxu0 0.0
    %2784 = vmatprep.mubr.f32.mxu0 0.0
    %2785 = vmatmul.mubr.f32.gmra.mxu0 %v2715
    %v2786 = vpop.f32.mrf.mxu0
    %v2787 = vadd.f32 0.0, %v2786
    %v2788 = vpop.f32.mrf.mxu0
    %2789 = vmatprep.mubr.f32.mxu0 0.0
    %2790 = vmatmul.mubr.f32.gmra.mxu0 %v2718
    %v2791 = vpop.f32.mrf.mxu0
    %v2792 = vadd.f32 0.0, %v2791
    %v2793 = vpop.f32.mrf.mxu0
    %2794 = vdwg.mxu0
    %2795 = vrot.lane.b32.xlu0 %v2187, 112
    %v2796 = vpop.permute.xlu0 %2795
    %2797 = vrot.lane.b32.xlu0 %v2192, 112
    %v2798 = vpop.permute.xlu0 %2797
    %2799 = vrot.lane.b32.xlu0 %v2285, 112
    %v2800 = vpop.permute.xlu0 %2799
    %2801 = vrot.lane.b32.xlu0 %v2290, 112
    %v2802 = vpop.permute.xlu0 %2801
    %v2803 = vsel %vm2393, %v2796, 0
    %v2805 = vsel %vm2393, %v2798, 0
    %v2807 = vsel %vm2393, %v2800, 0
    %v2809 = vsel %vm2393, %v2802, 0
    %2811 = vmatprep.subr.mxu0 0.0
    %2812 = vmatpush1.xpose.msra.mxu0 0.0
    %2813 = vmatprep.subr.mxu0 0.0
    %2814 = vmatpush1.xpose.msra.mxu0 0.0
    %2815 = vmatprep.subr.mxu0 0.0
    %2816 = vmatpush1.xpose.msra.mxu0 0.0
    %2817 = vmatprep.subr.mxu0 0.0
    %2818 = vmatpush1.xpose.msra.mxu0 0.0
    %2819 = vmatprep.subr.mxu0 0.0
    %2820 = vmatpush1.xpose.msra.mxu0 0.0
    %2821 = vmatprep.subr.mxu0 0.0
    %2822 = vmatpush1.xpose.msra.mxu0 0.0
    %2823 = vmatprep.subr.mxu0 0.0
    %2824 = vmatpush1.xpose.msra.mxu0 0.0
    %2825 = vmatprep.subr.mxu0 0.0
    %2826 = vmatpush1.xpose.msra.mxu0 0.0
    %2827 = vmatprep.subr.mxu0 0.0
    %2828 = vmatpush1.xpose.msra.mxu0 0.0
    %2829 = vmatprep.subr.mxu0 0.0
    %2830 = vmatpush1.xpose.msra.mxu0 0.0
    %2831 = vmatprep.subr.mxu0 0.0
    %2832 = vmatpush1.xpose.msra.mxu0 0.0
    %2833 = vmatprep.subr.mxu0 0.0
    %2834 = vmatpush1.xpose.msra.mxu0 0.0
    %2835 = vmatprep.subr.mxu0 0.0
    %2836 = vmatpush1.xpose.msra.mxu0 0.0
    %2837 = vmatprep.subr.mxu0 0.0
    %2838 = vmatpush1.xpose.msra.mxu0 0.0
    %2839 = vmatprep.subr.mxu0 0.0
    %2840 = vmatpush1.xpose.msra.mxu0 %v2809
    %2841 = vmatprep.subr.mxu0 0.0
    %2842 = vmatpush1.xpose.msra.mxu0 %v2807
    %2843 = vmatprep.subr.mxu0 0.0
    %2844 = vmatpush2.xpose.msra.mxu0 0.0
    %2845 = vmatprep.subr.mxu0 0.0
    %2846 = vmatpush2.xpose.msra.mxu0 0.0
    %2847 = vmatprep.subr.mxu0 0.0
    %2848 = vmatpush2.xpose.msra.mxu0 0.0
    %2849 = vmatprep.subr.mxu0 0.0
    %2850 = vmatpush2.xpose.msra.mxu0 0.0
    %2851 = vmatprep.subr.mxu0 0.0
    %2852 = vmatpush2.xpose.msra.mxu0 0.0
    %2853 = vmatprep.subr.mxu0 0.0
    %2854 = vmatpush2.xpose.msra.mxu0 0.0
    %2855 = vmatprep.subr.mxu0 0.0
    %2856 = vmatpush2.xpose.msra.mxu0 0.0
    %2857 = vmatprep.subr.mxu0 0.0
    %2858 = vmatpush2.xpose.msra.mxu0 0.0
    %2859 = vmatprep.subr.mxu0 0.0
    %2860 = vmatpush2.xpose.msra.mxu0 0.0
    %2861 = vmatprep.subr.mxu0 0.0
    %2862 = vmatpush2.xpose.msra.mxu0 0.0
    %2863 = vmatprep.subr.mxu0 0.0
    %2864 = vmatpush2.xpose.msra.mxu0 0.0
    %2865 = vmatprep.subr.mxu0 0.0
    %2866 = vmatpush2.xpose.msra.mxu0 0.0
    %2867 = vmatprep.subr.mxu0 0.0
    %2868 = vmatpush2.xpose.msra.mxu0 0.0
    %2869 = vmatprep.subr.mxu0 0.0
    %2870 = vmatpush2.xpose.msra.mxu0 0.0
    %2871 = vmatprep.subr.mxu0 0.0
    %2872 = vmatpush2.xpose.msra.mxu0 0.0
    %2873 = vmatprep.subr.mxu0 0.0
    %2874 = vmatpush2.xpose.msra.mxu0 0.0
    %2875 = vmatprep.mubr.f32.mxu0 0.0
    %2876 = vmatmul.mubr.f32.gmra.mxu0 %v2803
    %v2877 = vpop.f32.mrf.mxu0
    %v2878 = vadd.f32 0.0, %v2877
    %v2879 = vpop.f32.mrf.mxu0
    %2880 = vmatprep.mubr.f32.mxu0 0.0
    %2881 = vmatmul.mubr.f32.gmra.mxu0 %v2805
    %v2882 = vpop.f32.mrf.mxu0
    %v2883 = vadd.f32 0.0, %v2882
    %v2884 = vpop.f32.mrf.mxu0
    %2885 = vdwg.mxu0
    %v2886 = vmul.f32 %v2878, 0.35355338
    %v2887 = vmul.f32 %v2883, 0.35355338
    %v2888 = vadd.f32 %v2886, %v2391
    %v2889 = vadd.f32 %v2887, %v2392
    %v2890 = vsel %vm2485, %v2888, -inf
    %2891 = vmax.xlane.f32.xlu0 %v2890
    %v2892 = vpop.xlane.xlu0 %2891
    %v2893 = vsel %vm2485, %v2889, -inf
    %2894 = vmax.xlane.f32.xlu0 %v2893
    %v2895 = vpop.xlane.xlu0 %2894
    %v2896 = vsub.f32 %v2888, %v2892
    %v2897 = vsub.f32 %v2889, %v2895
    %v2898 = vmul.f32 %v2896, 1.442695
    %v2899 = vpow.pop %v2898
    %v2900 = vmul.f32 %v2897, 1.442695
    %v2901 = vpow.pop %v2900
    %v2902 = vsel %vm2485, %v2899, 0.0
    %2903 = vadd.xlane.f32.xlu0 %v2902
    %v2904 = vpop.xlane.xlu0 %2903
    %v2905 = vsel %vm2485, %v2901, 0.0
    %2906 = vadd.xlane.f32.xlu0 %v2905
    %v2907 = vpop.xlane.xlu0 %2906
    %v2908 = vrcp.pop %v2904
    %v2909 = vmul.f32 %v2899, %v2908
    %v2910 = vrcp.pop %v2907
    %v2911 = vmul.f32 %v2901, %v2910
    %2912 = vrot.lane.b32.xlu0 %v2383, 112
    %v2913 = vpop.permute.xlu0 %2912
    %2914 = vrot.lane.b32.xlu0 %v2388, 112
    %v2915 = vpop.permute.xlu0 %2914
    %v2919 = vsel %vm2485, %v2909, 0
    %v2922 = vsel %vm2485, %v2911, 0
    %2924 = vmatprep.subr.mxu0 0.0
    %2925 = vmatpush1.msra.mxu0 0.0
    %2926 = vmatprep.subr.mxu0 0.0
    %2927 = vmatpush1.msra.mxu0 0.0
    %2928 = vmatprep.subr.mxu0 0.0
    %2929 = vmatpush1.msra.mxu0 0.0
    %2930 = vmatprep.subr.mxu0 0.0
    %2931 = vmatpush1.msra.mxu0 0.0
    %2932 = vmatprep.subr.mxu0 0.0
    %2933 = vmatpush1.msra.mxu0 0.0
    %2934 = vmatprep.subr.mxu0 0.0
    %2935 = vmatpush1.msra.mxu0 0.0
    %2936 = vmatprep.subr.mxu0 0.0
    %2937 = vmatpush1.msra.mxu0 0.0
    %2938 = vmatprep.subr.mxu0 0.0
    %2939 = vmatpush1.msra.mxu0 0.0
    %2940 = vmatprep.subr.mxu0 0.0
    %2941 = vmatpush1.msra.mxu0 0.0
    %2942 = vmatprep.subr.mxu0 0.0
    %2943 = vmatpush1.msra.mxu0 0.0
    %2944 = vmatprep.subr.mxu0 0.0
    %2945 = vmatpush1.msra.mxu0 0.0
    %2946 = vmatprep.subr.mxu0 0.0
    %2947 = vmatpush1.msra.mxu0 0.0
    %2948 = vmatprep.subr.mxu0 0.0
    %2949 = vmatpush1.msra.mxu0 0.0
    %2950 = vmatprep.subr.mxu0 0.0
    %2951 = vmatpush1.msra.mxu0 0.0
    %2952 = vmatprep.subr.mxu0 0.0
    %2953 = vmatpush1.msra.mxu0 %v2915
    %2954 = vmatprep.subr.mxu0 0.0
    %2955 = vmatpush1.msra.mxu0 %v2913
    %2956 = vmatprep.subr.mxu0 0.0
    %2957 = vmatpush2.msra.mxu0 0.0
    %2958 = vmatprep.subr.mxu0 0.0
    %2959 = vmatpush2.msra.mxu0 0.0
    %2960 = vmatprep.subr.mxu0 0.0
    %2961 = vmatpush2.msra.mxu0 0.0
    %2962 = vmatprep.subr.mxu0 0.0
    %2963 = vmatpush2.msra.mxu0 0.0
    %2964 = vmatprep.subr.mxu0 0.0
    %2965 = vmatpush2.msra.mxu0 0.0
    %2966 = vmatprep.subr.mxu0 0.0
    %2967 = vmatpush2.msra.mxu0 0.0
    %2968 = vmatprep.subr.mxu0 0.0
    %2969 = vmatpush2.msra.mxu0 0.0
    %2970 = vmatprep.subr.mxu0 0.0
    %2971 = vmatpush2.msra.mxu0 0.0
    %2972 = vmatprep.subr.mxu0 0.0
    %2973 = vmatpush2.msra.mxu0 0.0
    %2974 = vmatprep.subr.mxu0 0.0
    %2975 = vmatpush2.msra.mxu0 0.0
    %2976 = vmatprep.subr.mxu0 0.0
    %2977 = vmatpush2.msra.mxu0 0.0
    %2978 = vmatprep.subr.mxu0 0.0
    %2979 = vmatpush2.msra.mxu0 0.0
    %2980 = vmatprep.subr.mxu0 0.0
    %2981 = vmatpush2.msra.mxu0 0.0
    %2982 = vmatprep.subr.mxu0 0.0
    %2983 = vmatpush2.msra.mxu0 0.0
    %2984 = vmatprep.subr.mxu0 0.0
    %2985 = vmatpush2.msra.mxu0 0.0
    %2986 = vmatprep.subr.mxu0 0.0
    %2987 = vmatpush2.msra.mxu0 0.0
    %2988 = vmatprep.mubr.f32.mxu0 0.0
    %2989 = vmatmul.mubr.f32.gmra.mxu0 %v2919
    %v2990 = vpop.f32.mrf.mxu0
    %v2991 = vadd.f32 0.0, %v2990
    %v2992 = vpop.f32.mrf.mxu0
    %2993 = vmatprep.mubr.f32.mxu0 0.0
    %2994 = vmatmul.mubr.f32.gmra.mxu0 %v2922
    %v2995 = vpop.f32.mrf.mxu0
    %v2996 = vadd.f32 0.0, %v2995
    %v2997 = vpop.f32.mrf.mxu0
    %2998 = vdwg.mxu0
    %2999 = vrot.lane.b32.xlu0 %v2187, 104
    %v3000 = vpop.permute.xlu0 %2999
    %3001 = vrot.lane.b32.xlu0 %v2192, 104
    %v3002 = vpop.permute.xlu0 %3001
    %3003 = vrot.lane.b32.xlu0 %v2285, 104
    %v3004 = vpop.permute.xlu0 %3003
    %3005 = vrot.lane.b32.xlu0 %v2290, 104
    %v3006 = vpop.permute.xlu0 %3005
    %v3007 = vsel %vm2393, %v3000, 0
    %v3009 = vsel %vm2393, %v3002, 0
    %v3011 = vsel %vm2393, %v3004, 0
    %v3013 = vsel %vm2393, %v3006, 0
    %3015 = vmatprep.subr.mxu0 0.0
    %3016 = vmatpush1.xpose.msra.mxu0 0.0
    %3017 = vmatprep.subr.mxu0 0.0
    %3018 = vmatpush1.xpose.msra.mxu0 0.0
    %3019 = vmatprep.subr.mxu0 0.0
    %3020 = vmatpush1.xpose.msra.mxu0 0.0
    %3021 = vmatprep.subr.mxu0 0.0
    %3022 = vmatpush1.xpose.msra.mxu0 0.0
    %3023 = vmatprep.subr.mxu0 0.0
    %3024 = vmatpush1.xpose.msra.mxu0 0.0
    %3025 = vmatprep.subr.mxu0 0.0
    %3026 = vmatpush1.xpose.msra.mxu0 0.0
    %3027 = vmatprep.subr.mxu0 0.0
    %3028 = vmatpush1.xpose.msra.mxu0 0.0
    %3029 = vmatprep.subr.mxu0 0.0
    %3030 = vmatpush1.xpose.msra.mxu0 0.0
    %3031 = vmatprep.subr.mxu0 0.0
    %3032 = vmatpush1.xpose.msra.mxu0 0.0
    %3033 = vmatprep.subr.mxu0 0.0
    %3034 = vmatpush1.xpose.msra.mxu0 0.0
    %3035 = vmatprep.subr.mxu0 0.0
    %3036 = vmatpush1.xpose.msra.mxu0 0.0
    %3037 = vmatprep.subr.mxu0 0.0
    %3038 = vmatpush1.xpose.msra.mxu0 0.0
    %3039 = vmatprep.subr.mxu0 0.0
    %3040 = vmatpush1.xpose.msra.mxu0 0.0
    %3041 = vmatprep.subr.mxu0 0.0
    %3042 = vmatpush1.xpose.msra.mxu0 0.0
    %3043 = vmatprep.subr.mxu0 0.0
    %3044 = vmatpush1.xpose.msra.mxu0 %v3013
    %3045 = vmatprep.subr.mxu0 0.0
    %3046 = vmatpush1.xpose.msra.mxu0 %v3011
    %3047 = vmatprep.subr.mxu0 0.0
    %3048 = vmatpush2.xpose.msra.mxu0 0.0
    %3049 = vmatprep.subr.mxu0 0.0
    %3050 = vmatpush2.xpose.msra.mxu0 0.0
    %3051 = vmatprep.subr.mxu0 0.0
    %3052 = vmatpush2.xpose.msra.mxu0 0.0
    %3053 = vmatprep.subr.mxu0 0.0
    %3054 = vmatpush2.xpose.msra.mxu0 0.0
    %3055 = vmatprep.subr.mxu0 0.0
    %3056 = vmatpush2.xpose.msra.mxu0 0.0
    %3057 = vmatprep.subr.mxu0 0.0
    %3058 = vmatpush2.xpose.msra.mxu0 0.0
    %3059 = vmatprep.subr.mxu0 0.0
    %3060 = vmatpush2.xpose.msra.mxu0 0.0
    %3061 = vmatprep.subr.mxu0 0.0
    %3062 = vmatpush2.xpose.msra.mxu0 0.0
    %3063 = vmatprep.subr.mxu0 0.0
    %3064 = vmatpush2.xpose.msra.mxu0 0.0
    %3065 = vmatprep.subr.mxu0 0.0
    %3066 = vmatpush2.xpose.msra.mxu0 0.0
    %3067 = vmatprep.subr.mxu0 0.0
    %3068 = vmatpush2.xpose.msra.mxu0 0.0
    %3069 = vmatprep.subr.mxu0 0.0
    %3070 = vmatpush2.xpose.msra.mxu0 0.0
    %3071 = vmatprep.subr.mxu0 0.0
    %3072 = vmatpush2.xpose.msra.mxu0 0.0
    %3073 = vmatprep.subr.mxu0 0.0
    %3074 = vmatpush2.xpose.msra.mxu0 0.0
    %3075 = vmatprep.subr.mxu0 0.0
    %3076 = vmatpush2.xpose.msra.mxu0 0.0
    %3077 = vmatprep.subr.mxu0 0.0
    %3078 = vmatpush2.xpose.msra.mxu0 0.0
    %3079 = vmatprep.mubr.f32.mxu0 0.0
    %3080 = vmatmul.mubr.f32.gmra.mxu0 %v3007
    %v3081 = vpop.f32.mrf.mxu0
    %v3082 = vadd.f32 0.0, %v3081
    %v3083 = vpop.f32.mrf.mxu0
    %3084 = vmatprep.mubr.f32.mxu0 0.0
    %3085 = vmatmul.mubr.f32.gmra.mxu0 %v3009
    %v3086 = vpop.f32.mrf.mxu0
    %v3087 = vadd.f32 0.0, %v3086
    %v3088 = vpop.f32.mrf.mxu0
    %3089 = vdwg.mxu0
    %v3090 = vmul.f32 %v3082, 0.35355338
    %v3091 = vmul.f32 %v3087, 0.35355338
    %v3092 = vadd.f32 %v3090, %v2391
    %v3093 = vadd.f32 %v3091, %v2392
    %v3094 = vsel %vm2485, %v3092, -inf
    %3095 = vmax.xlane.f32.xlu0 %v3094
    %v3096 = vpop.xlane.xlu0 %3095
    %v3097 = vsel %vm2485, %v3093, -inf
    %3098 = vmax.xlane.f32.xlu0 %v3097
    %v3099 = vpop.xlane.xlu0 %3098
    %v3100 = vsub.f32 %v3092, %v3096
    %v3101 = vsub.f32 %v3093, %v3099
    %v3102 = vmul.f32 %v3100, 1.442695
    %v3103 = vpow.pop %v3102
    %v3104 = vmul.f32 %v3101, 1.442695
    %v3105 = vpow.pop %v3104
    %v3106 = vsel %vm2485, %v3103, 0.0
    %3107 = vadd.xlane.f32.xlu0 %v3106
    %v3108 = vpop.xlane.xlu0 %3107
    %v3109 = vsel %vm2485, %v3105, 0.0
    %3110 = vadd.xlane.f32.xlu0 %v3109
    %v3111 = vpop.xlane.xlu0 %3110
    %v3112 = vrcp.pop %v3108
    %v3113 = vmul.f32 %v3103, %v3112
    %v3114 = vrcp.pop %v3111
    %v3115 = vmul.f32 %v3105, %v3114
    %3116 = vrot.lane.b32.xlu0 %v2383, 104
    %v3117 = vpop.permute.xlu0 %3116
    %3118 = vrot.lane.b32.xlu0 %v2388, 104
    %v3119 = vpop.permute.xlu0 %3118
    %v3123 = vsel %vm2485, %v3113, 0
    %v3126 = vsel %vm2485, %v3115, 0
    %3128 = vmatprep.subr.mxu0 0.0
    %3129 = vmatpush1.msra.mxu0 0.0
    %3130 = vmatprep.subr.mxu0 0.0
    %3131 = vmatpush1.msra.mxu0 0.0
    %3132 = vmatprep.subr.mxu0 0.0
    %3133 = vmatpush1.msra.mxu0 0.0
    %3134 = vmatprep.subr.mxu0 0.0
    %3135 = vmatpush1.msra.mxu0 0.0
    %3136 = vmatprep.subr.mxu0 0.0
    %3137 = vmatpush1.msra.mxu0 0.0
    %3138 = vmatprep.subr.mxu0 0.0
    %3139 = vmatpush1.msra.mxu0 0.0
    %3140 = vmatprep.subr.mxu0 0.0
    %3141 = vmatpush1.msra.mxu0 0.0
    %3142 = vmatprep.subr.mxu0 0.0
    %3143 = vmatpush1.msra.mxu0 0.0
    %3144 = vmatprep.subr.mxu0 0.0
    %3145 = vmatpush1.msra.mxu0 0.0
    %3146 = vmatprep.subr.mxu0 0.0
    %3147 = vmatpush1.msra.mxu0 0.0
    %3148 = vmatprep.subr.mxu0 0.0
    %3149 = vmatpush1.msra.mxu0 0.0
    %3150 = vmatprep.subr.mxu0 0.0
    %3151 = vmatpush1.msra.mxu0 0.0
    %3152 = vmatprep.subr.mxu0 0.0
    %3153 = vmatpush1.msra.mxu0 0.0
    %3154 = vmatprep.subr.mxu0 0.0
    %3155 = vmatpush1.msra.mxu0 0.0
    %3156 = vmatprep.subr.mxu0 0.0
    %3157 = vmatpush1.msra.mxu0 %v3119
    %3158 = vmatprep.subr.mxu0 0.0
    %3159 = vmatpush1.msra.mxu0 %v3117
    %3160 = vmatprep.subr.mxu0 0.0
    %3161 = vmatpush2.msra.mxu0 0.0
    %3162 = vmatprep.subr.mxu0 0.0
    %3163 = vmatpush2.msra.mxu0 0.0
    %3164 = vmatprep.subr.mxu0 0.0
    %3165 = vmatpush2.msra.mxu0 0.0
    %3166 = vmatprep.subr.mxu0 0.0
    %3167 = vmatpush2.msra.mxu0 0.0
    %3168 = vmatprep.subr.mxu0 0.0
    %3169 = vmatpush2.msra.mxu0 0.0
    %3170 = vmatprep.subr.mxu0 0.0
    %3171 = vmatpush2.msra.mxu0 0.0
    %3172 = vmatprep.subr.mxu0 0.0
    %3173 = vmatpush2.msra.mxu0 0.0
    %3174 = vmatprep.subr.mxu0 0.0
    %3175 = vmatpush2.msra.mxu0 0.0
    %3176 = vmatprep.subr.mxu0 0.0
    %3177 = vmatpush2.msra.mxu0 0.0
    %3178 = vmatprep.subr.mxu0 0.0
    %3179 = vmatpush2.msra.mxu0 0.0
    %3180 = vmatprep.subr.mxu0 0.0
    %3181 = vmatpush2.msra.mxu0 0.0
    %3182 = vmatprep.subr.mxu0 0.0
    %3183 = vmatpush2.msra.mxu0 0.0
    %3184 = vmatprep.subr.mxu0 0.0
    %3185 = vmatpush2.msra.mxu0 0.0
    %3186 = vmatprep.subr.mxu0 0.0
    %3187 = vmatpush2.msra.mxu0 0.0
    %3188 = vmatprep.subr.mxu0 0.0
    %3189 = vmatpush2.msra.mxu0 0.0
    %3190 = vmatprep.subr.mxu0 0.0
    %3191 = vmatpush2.msra.mxu0 0.0
    %3192 = vmatprep.mubr.f32.mxu0 0.0
    %3193 = vmatmul.mubr.f32.gmra.mxu0 %v3123
    %v3194 = vpop.f32.mrf.mxu0
    %v3195 = vadd.f32 0.0, %v3194
    %v3196 = vpop.f32.mrf.mxu0
    %3197 = vmatprep.mubr.f32.mxu0 0.0
    %3198 = vmatmul.mubr.f32.gmra.mxu0 %v3126
    %v3199 = vpop.f32.mrf.mxu0
    %v3200 = vadd.f32 0.0, %v3199
    %v3201 = vpop.f32.mrf.mxu0
    %3202 = vdwg.mxu0
    %3203 = vrot.lane.b32.xlu0 %v2187, 96
    %v3204 = vpop.permute.xlu0 %3203
    %3205 = vrot.lane.b32.xlu0 %v2192, 96
    %v3206 = vpop.permute.xlu0 %3205
    %3207 = vrot.lane.b32.xlu0 %v2285, 96
    %v3208 = vpop.permute.xlu0 %3207
    %3209 = vrot.lane.b32.xlu0 %v2290, 96
    %v3210 = vpop.permute.xlu0 %3209
    %v3211 = vsel %vm2393, %v3204, 0
    %v3213 = vsel %vm2393, %v3206, 0
    %v3215 = vsel %vm2393, %v3208, 0
    %v3217 = vsel %vm2393, %v3210, 0
    %3219 = vmatprep.subr.mxu0 0.0
    %3220 = vmatpush1.xpose.msra.mxu0 0.0
    %3221 = vmatprep.subr.mxu0 0.0
    %3222 = vmatpush1.xpose.msra.mxu0 0.0
    %3223 = vmatprep.subr.mxu0 0.0
    %3224 = vmatpush1.xpose.msra.mxu0 0.0
    %3225 = vmatprep.subr.mxu0 0.0
    %3226 = vmatpush1.xpose.msra.mxu0 0.0
    %3227 = vmatprep.subr.mxu0 0.0
    %3228 = vmatpush1.xpose.msra.mxu0 0.0
    %3229 = vmatprep.subr.mxu0 0.0
    %3230 = vmatpush1.xpose.msra.mxu0 0.0
    %3231 = vmatprep.subr.mxu0 0.0
    %3232 = vmatpush1.xpose.msra.mxu0 0.0
    %3233 = vmatprep.subr.mxu0 0.0
    %3234 = vmatpush1.xpose.msra.mxu0 0.0
    %3235 = vmatprep.subr.mxu0 0.0
    %3236 = vmatpush1.xpose.msra.mxu0 0.0
    %3237 = vmatprep.subr.mxu0 0.0
    %3238 = vmatpush1.xpose.msra.mxu0 0.0
    %3239 = vmatprep.subr.mxu0 0.0
    %3240 = vmatpush1.xpose.msra.mxu0 0.0
    %3241 = vmatprep.subr.mxu0 0.0
    %3242 = vmatpush1.xpose.msra.mxu0 0.0
    %3243 = vmatprep.subr.mxu0 0.0
    %3244 = vmatpush1.xpose.msra.mxu0 0.0
    %3245 = vmatprep.subr.mxu0 0.0
    %3246 = vmatpush1.xpose.msra.mxu0 0.0
    %3247 = vmatprep.subr.mxu0 0.0
    %3248 = vmatpush1.xpose.msra.mxu0 %v3217
    %3249 = vmatprep.subr.mxu0 0.0
    %3250 = vmatpush1.xpose.msra.mxu0 %v3215
    %3251 = vmatprep.subr.mxu0 0.0
    %3252 = vmatpush2.xpose.msra.mxu0 0.0
    %3253 = vmatprep.subr.mxu0 0.0
    %3254 = vmatpush2.xpose.msra.mxu0 0.0
    %3255 = vmatprep.subr.mxu0 0.0
    %3256 = vmatpush2.xpose.msra.mxu0 0.0
    %3257 = vmatprep.subr.mxu0 0.0
    %3258 = vmatpush2.xpose.msra.mxu0 0.0
    %3259 = vmatprep.subr.mxu0 0.0
    %3260 = vmatpush2.xpose.msra.mxu0 0.0
    %3261 = vmatprep.subr.mxu0 0.0
    %3262 = vmatpush2.xpose.msra.mxu0 0.0
    %3263 = vmatprep.subr.mxu0 0.0
    %3264 = vmatpush2.xpose.msra.mxu0 0.0
    %3265 = vmatprep.subr.mxu0 0.0
    %3266 = vmatpush2.xpose.msra.mxu0 0.0
    %3267 = vmatprep.subr.mxu0 0.0
    %3268 = vmatpush2.xpose.msra.mxu0 0.0
    %3269 = vmatprep.subr.mxu0 0.0
    %3270 = vmatpush2.xpose.msra.mxu0 0.0
    %3271 = vmatprep.subr.mxu0 0.0
    %3272 = vmatpush2.xpose.msra.mxu0 0.0
    %3273 = vmatprep.subr.mxu0 0.0
    %3274 = vmatpush2.xpose.msra.mxu0 0.0
    %3275 = vmatprep.subr.mxu0 0.0
    %3276 = vmatpush2.xpose.msra.mxu0 0.0
    %3277 = vmatprep.subr.mxu0 0.0
    %3278 = vmatpush2.xpose.msra.mxu0 0.0
    %3279 = vmatprep.subr.mxu0 0.0
    %3280 = vmatpush2.xpose.msra.mxu0 0.0
    %3281 = vmatprep.subr.mxu0 0.0
    %3282 = vmatpush2.xpose.msra.mxu0 0.0
    %3283 = vmatprep.mubr.f32.mxu0 0.0
    %3284 = vmatmul.mubr.f32.gmra.mxu0 %v3211
    %v3285 = vpop.f32.mrf.mxu0
    %v3286 = vadd.f32 0.0, %v3285
    %v3287 = vpop.f32.mrf.mxu0
    %3288 = vmatprep.mubr.f32.mxu0 0.0
    %3289 = vmatmul.mubr.f32.gmra.mxu0 %v3213
    %v3290 = vpop.f32.mrf.mxu0
    %v3291 = vadd.f32 0.0, %v3290
    %v3292 = vpop.f32.mrf.mxu0
    %3293 = vdwg.mxu0
    %v3294 = vmul.f32 %v3286, 0.35355338
    %v3295 = vmul.f32 %v3291, 0.35355338
    %v3296 = vadd.f32 %v3294, %v2391
    %v3297 = vadd.f32 %v3295, %v2392
    %v3298 = vsel %vm2485, %v3296, -inf
    %3299 = vmax.xlane.f32.xlu0 %v3298
    %v3300 = vpop.xlane.xlu0 %3299
    %v3301 = vsel %vm2485, %v3297, -inf
    %3302 = vmax.xlane.f32.xlu0 %v3301
    %v3303 = vpop.xlane.xlu0 %3302
    %v3304 = vsub.f32 %v3296, %v3300
    %v3305 = vsub.f32 %v3297, %v3303
    %v3306 = vmul.f32 %v3304, 1.442695
    %v3307 = vpow.pop %v3306
    %v3308 = vmul.f32 %v3305, 1.442695
    %v3309 = vpow.pop %v3308
    %v3310 = vsel %vm2485, %v3307, 0.0
    %3311 = vadd.xlane.f32.xlu0 %v3310
    %v3312 = vpop.xlane.xlu0 %3311
    %v3313 = vsel %vm2485, %v3309, 0.0
    %3314 = vadd.xlane.f32.xlu0 %v3313
    %v3315 = vpop.xlane.xlu0 %3314
    %v3316 = vrcp.pop %v3312
    %v3317 = vmul.f32 %v3307, %v3316
    %v3318 = vrcp.pop %v3315
    %v3319 = vmul.f32 %v3309, %v3318
    %3320 = vrot.lane.b32.xlu0 %v2383, 96
    %v3321 = vpop.permute.xlu0 %3320
    %3322 = vrot.lane.b32.xlu0 %v2388, 96
    %v3323 = vpop.permute.xlu0 %3322
    %v3327 = vsel %vm2485, %v3317, 0
    %v3330 = vsel %vm2485, %v3319, 0
    %3332 = vmatprep.subr.mxu0 0.0
    %3333 = vmatpush1.msra.mxu0 0.0
    %3334 = vmatprep.subr.mxu0 0.0
    %3335 = vmatpush1.msra.mxu0 0.0
    %3336 = vmatprep.subr.mxu0 0.0
    %3337 = vmatpush1.msra.mxu0 0.0
    %3338 = vmatprep.subr.mxu0 0.0
    %3339 = vmatpush1.msra.mxu0 0.0
    %3340 = vmatprep.subr.mxu0 0.0
    %3341 = vmatpush1.msra.mxu0 0.0
    %3342 = vmatprep.subr.mxu0 0.0
    %3343 = vmatpush1.msra.mxu0 0.0
    %3344 = vmatprep.subr.mxu0 0.0
    %3345 = vmatpush1.msra.mxu0 0.0
    %3346 = vmatprep.subr.mxu0 0.0
    %3347 = vmatpush1.msra.mxu0 0.0
    %3348 = vmatprep.subr.mxu0 0.0
    %3349 = vmatpush1.msra.mxu0 0.0
    %3350 = vmatprep.subr.mxu0 0.0
    %3351 = vmatpush1.msra.mxu0 0.0
    %3352 = vmatprep.subr.mxu0 0.0
    %3353 = vmatpush1.msra.mxu0 0.0
    %3354 = vmatprep.subr.mxu0 0.0
    %3355 = vmatpush1.msra.mxu0 0.0
    %3356 = vmatprep.subr.mxu0 0.0
    %3357 = vmatpush1.msra.mxu0 0.0
    %3358 = vmatprep.subr.mxu0 0.0
    %3359 = vmatpush1.msra.mxu0 0.0
    %3360 = vmatprep.subr.mxu0 0.0
    %3361 = vmatpush1.msra.mxu0 %v3323
    %3362 = vmatprep.subr.mxu0 0.0
    %3363 = vmatpush1.msra.mxu0 %v3321
    %3364 = vmatprep.subr.mxu0 0.0
    %3365 = vmatpush2.msra.mxu0 0.0
    %3366 = vmatprep.subr.mxu0 0.0
    %3367 = vmatpush2.msra.mxu0 0.0
    %3368 = vmatprep.subr.mxu0 0.0
    %3369 = vmatpush2.msra.mxu0 0.0
    %3370 = vmatprep.subr.mxu0 0.0
    %3371 = vmatpush2.msra.mxu0 0.0
    %3372 = vmatprep.subr.mxu0 0.0
    %3373 = vmatpush2.msra.mxu0 0.0
    %3374 = vmatprep.subr.mxu0 0.0
    %3375 = vmatpush2.msra.mxu0 0.0
    %3376 = vmatprep.subr.mxu0 0.0
    %3377 = vmatpush2.msra.mxu0 0.0
    %3378 = vmatprep.subr.mxu0 0.0
    %3379 = vmatpush2.msra.mxu0 0.0
    %3380 = vmatprep.subr.mxu0 0.0
    %3381 = vmatpush2.msra.mxu0 0.0
    %3382 = vmatprep.subr.mxu0 0.0
    %3383 = vmatpush2.msra.mxu0 0.0
    %3384 = vmatprep.subr.mxu0 0.0
    %3385 = vmatpush2.msra.mxu0 0.0
    %3386 = vmatprep.subr.mxu0 0.0
    %3387 = vmatpush2.msra.mxu0 0.0
    %3388 = vmatprep.subr.mxu0 0.0
    %3389 = vmatpush2.msra.mxu0 0.0
    %3390 = vmatprep.subr.mxu0 0.0
    %3391 = vmatpush2.msra.mxu0 0.0
    %3392 = vmatprep.subr.mxu0 0.0
    %3393 = vmatpush2.msra.mxu0 0.0
    %3394 = vmatprep.subr.mxu0 0.0
    %3395 = vmatpush2.msra.mxu0 0.0
    %3396 = vmatprep.mubr.f32.mxu0 0.0
    %3397 = vmatmul.mubr.f32.gmra.mxu0 %v3327
    %v3398 = vpop.f32.mrf.mxu0
    %v3399 = vadd.f32 0.0, %v3398
    %v3400 = vpop.f32.mrf.mxu0
    %3401 = vmatprep.mubr.f32.mxu0 0.0
    %3402 = vmatmul.mubr.f32.gmra.mxu0 %v3330
    %v3403 = vpop.f32.mrf.mxu0
    %v3404 = vadd.f32 0.0, %v3403
    %v3405 = vpop.f32.mrf.mxu0
    %3406 = vdwg.mxu0
    %3407 = vrot.lane.b32.xlu0 %v2187, 88
    %v3408 = vpop.permute.xlu0 %3407
    %3409 = vrot.lane.b32.xlu0 %v2192, 88
    %v3410 = vpop.permute.xlu0 %3409
    %3411 = vrot.lane.b32.xlu0 %v2285, 88
    %v3412 = vpop.permute.xlu0 %3411
    %3413 = vrot.lane.b32.xlu0 %v2290, 88
    %v3414 = vpop.permute.xlu0 %3413
    %v3415 = vsel %vm2393, %v3408, 0
    %v3417 = vsel %vm2393, %v3410, 0
    %v3419 = vsel %vm2393, %v3412, 0
    %v3421 = vsel %vm2393, %v3414, 0
    %3423 = vmatprep.subr.mxu0 0.0
    %3424 = vmatpush1.xpose.msra.mxu0 0.0
    %3425 = vmatprep.subr.mxu0 0.0
    %3426 = vmatpush1.xpose.msra.mxu0 0.0
    %3427 = vmatprep.subr.mxu0 0.0
    %3428 = vmatpush1.xpose.msra.mxu0 0.0
    %3429 = vmatprep.subr.mxu0 0.0
    %3430 = vmatpush1.xpose.msra.mxu0 0.0
    %3431 = vmatprep.subr.mxu0 0.0
    %3432 = vmatpush1.xpose.msra.mxu0 0.0
    %3433 = vmatprep.subr.mxu0 0.0
    %3434 = vmatpush1.xpose.msra.mxu0 0.0
    %3435 = vmatprep.subr.mxu0 0.0
    %3436 = vmatpush1.xpose.msra.mxu0 0.0
    %3437 = vmatprep.subr.mxu0 0.0
    %3438 = vmatpush1.xpose.msra.mxu0 0.0
    %3439 = vmatprep.subr.mxu0 0.0
    %3440 = vmatpush1.xpose.msra.mxu0 0.0
    %3441 = vmatprep.subr.mxu0 0.0
    %3442 = vmatpush1.xpose.msra.mxu0 0.0
    %3443 = vmatprep.subr.mxu0 0.0
    %3444 = vmatpush1.xpose.msra.mxu0 0.0
    %3445 = vmatprep.subr.mxu0 0.0
    %3446 = vmatpush1.xpose.msra.mxu0 0.0
    %3447 = vmatprep.subr.mxu0 0.0
    %3448 = vmatpush1.xpose.msra.mxu0 0.0
    %3449 = vmatprep.subr.mxu0 0.0
    %3450 = vmatpush1.xpose.msra.mxu0 0.0
    %3451 = vmatprep.subr.mxu0 0.0
    %3452 = vmatpush1.xpose.msra.mxu0 %v3421
    %3453 = vmatprep.subr.mxu0 0.0
    %3454 = vmatpush1.xpose.msra.mxu0 %v3419
    %3455 = vmatprep.subr.mxu0 0.0
    %3456 = vmatpush2.xpose.msra.mxu0 0.0
    %3457 = vmatprep.subr.mxu0 0.0
    %3458 = vmatpush2.xpose.msra.mxu0 0.0
    %3459 = vmatprep.subr.mxu0 0.0
    %3460 = vmatpush2.xpose.msra.mxu0 0.0
    %3461 = vmatprep.subr.mxu0 0.0
    %3462 = vmatpush2.xpose.msra.mxu0 0.0
    %3463 = vmatprep.subr.mxu0 0.0
    %3464 = vmatpush2.xpose.msra.mxu0 0.0
    %3465 = vmatprep.subr.mxu0 0.0
    %3466 = vmatpush2.xpose.msra.mxu0 0.0
    %3467 = vmatprep.subr.mxu0 0.0
    %3468 = vmatpush2.xpose.msra.mxu0 0.0
    %3469 = vmatprep.subr.mxu0 0.0
    %3470 = vmatpush2.xpose.msra.mxu0 0.0
    %3471 = vmatprep.subr.mxu0 0.0
    %3472 = vmatpush2.xpose.msra.mxu0 0.0
    %3473 = vmatprep.subr.mxu0 0.0
    %3474 = vmatpush2.xpose.msra.mxu0 0.0
    %3475 = vmatprep.subr.mxu0 0.0
    %3476 = vmatpush2.xpose.msra.mxu0 0.0
    %3477 = vmatprep.subr.mxu0 0.0
    %3478 = vmatpush2.xpose.msra.mxu0 0.0
    %3479 = vmatprep.subr.mxu0 0.0
    %3480 = vmatpush2.xpose.msra.mxu0 0.0
    %3481 = vmatprep.subr.mxu0 0.0
    %3482 = vmatpush2.xpose.msra.mxu0 0.0
    %3483 = vmatprep.subr.mxu0 0.0
    %3484 = vmatpush2.xpose.msra.mxu0 0.0
    %3485 = vmatprep.subr.mxu0 0.0
    %3486 = vmatpush2.xpose.msra.mxu0 0.0
    %3487 = vmatprep.mubr.f32.mxu0 0.0
    %3488 = vmatmul.mubr.f32.gmra.mxu0 %v3415
    %v3489 = vpop.f32.mrf.mxu0
    %v3490 = vadd.f32 0.0, %v3489
    %v3491 = vpop.f32.mrf.mxu0
    %3492 = vmatprep.mubr.f32.mxu0 0.0
    %3493 = vmatmul.mubr.f32.gmra.mxu0 %v3417
    %v3494 = vpop.f32.mrf.mxu0
    %v3495 = vadd.f32 0.0, %v3494
    %v3496 = vpop.f32.mrf.mxu0
    %3497 = vdwg.mxu0
    %v3498 = vmul.f32 %v3490, 0.35355338
    %v3499 = vmul.f32 %v3495, 0.35355338
    %v3500 = vadd.f32 %v3498, %v2391
    %v3501 = vadd.f32 %v3499, %v2392
    %v3502 = vsel %vm2485, %v3500, -inf
    %3503 = vmax.xlane.f32.xlu0 %v3502
    %v3504 = vpop.xlane.xlu0 %3503
    %v3505 = vsel %vm2485, %v3501, -inf
    %3506 = vmax.xlane.f32.xlu0 %v3505
    %v3507 = vpop.xlane.xlu0 %3506
    %v3508 = vsub.f32 %v3500, %v3504
    %v3509 = vsub.f32 %v3501, %v3507
    %v3510 = vmul.f32 %v3508, 1.442695
    %v3511 = vpow.pop %v3510
    %v3512 = vmul.f32 %v3509, 1.442695
    %v3513 = vpow.pop %v3512
    %v3514 = vsel %vm2485, %v3511, 0.0
    %3515 = vadd.xlane.f32.xlu0 %v3514
    %v3516 = vpop.xlane.xlu0 %3515
    %v3517 = vsel %vm2485, %v3513, 0.0
    %3518 = vadd.xlane.f32.xlu0 %v3517
    %v3519 = vpop.xlane.xlu0 %3518
    %v3520 = vrcp.pop %v3516
    %v3521 = vmul.f32 %v3511, %v3520
    %v3522 = vrcp.pop %v3519
    %v3523 = vmul.f32 %v3513, %v3522
    %3524 = vrot.lane.b32.xlu0 %v2383, 88
    %v3525 = vpop.permute.xlu0 %3524
    %3526 = vrot.lane.b32.xlu0 %v2388, 88
    %v3527 = vpop.permute.xlu0 %3526
    %v3531 = vsel %vm2485, %v3521, 0
    %v3534 = vsel %vm2485, %v3523, 0
    %3536 = vmatprep.subr.mxu0 0.0
    %3537 = vmatpush1.msra.mxu0 0.0
    %3538 = vmatprep.subr.mxu0 0.0
    %3539 = vmatpush1.msra.mxu0 0.0
    %3540 = vmatprep.subr.mxu0 0.0
    %3541 = vmatpush1.msra.mxu0 0.0
    %3542 = vmatprep.subr.mxu0 0.0
    %3543 = vmatpush1.msra.mxu0 0.0
    %3544 = vmatprep.subr.mxu0 0.0
    %3545 = vmatpush1.msra.mxu0 0.0
    %3546 = vmatprep.subr.mxu0 0.0
    %3547 = vmatpush1.msra.mxu0 0.0
    %3548 = vmatprep.subr.mxu0 0.0
    %3549 = vmatpush1.msra.mxu0 0.0
    %3550 = vmatprep.subr.mxu0 0.0
    %3551 = vmatpush1.msra.mxu0 0.0
    %3552 = vmatprep.subr.mxu0 0.0
    %3553 = vmatpush1.msra.mxu0 0.0
    %3554 = vmatprep.subr.mxu0 0.0
    %3555 = vmatpush1.msra.mxu0 0.0
    %3556 = vmatprep.subr.mxu0 0.0
    %3557 = vmatpush1.msra.mxu0 0.0
    %3558 = vmatprep.subr.mxu0 0.0
    %3559 = vmatpush1.msra.mxu0 0.0
    %3560 = vmatprep.subr.mxu0 0.0
    %3561 = vmatpush1.msra.mxu0 0.0
    %3562 = vmatprep.subr.mxu0 0.0
    %3563 = vmatpush1.msra.mxu0 0.0
    %3564 = vmatprep.subr.mxu0 0.0
    %3565 = vmatpush1.msra.mxu0 %v3527
    %3566 = vmatprep.subr.mxu0 0.0
    %3567 = vmatpush1.msra.mxu0 %v3525
    %3568 = vmatprep.subr.mxu0 0.0
    %3569 = vmatpush2.msra.mxu0 0.0
    %3570 = vmatprep.subr.mxu0 0.0
    %3571 = vmatpush2.msra.mxu0 0.0
    %3572 = vmatprep.subr.mxu0 0.0
    %3573 = vmatpush2.msra.mxu0 0.0
    %3574 = vmatprep.subr.mxu0 0.0
    %3575 = vmatpush2.msra.mxu0 0.0
    %3576 = vmatprep.subr.mxu0 0.0
    %3577 = vmatpush2.msra.mxu0 0.0
    %3578 = vmatprep.subr.mxu0 0.0
    %3579 = vmatpush2.msra.mxu0 0.0
    %3580 = vmatprep.subr.mxu0 0.0
    %3581 = vmatpush2.msra.mxu0 0.0
    %3582 = vmatprep.subr.mxu0 0.0
    %3583 = vmatpush2.msra.mxu0 0.0
    %3584 = vmatprep.subr.mxu0 0.0
    %3585 = vmatpush2.msra.mxu0 0.0
    %3586 = vmatprep.subr.mxu0 0.0
    %3587 = vmatpush2.msra.mxu0 0.0
    %3588 = vmatprep.subr.mxu0 0.0
    %3589 = vmatpush2.msra.mxu0 0.0
    %3590 = vmatprep.subr.mxu0 0.0
    %3591 = vmatpush2.msra.mxu0 0.0
    %3592 = vmatprep.subr.mxu0 0.0
    %3593 = vmatpush2.msra.mxu0 0.0
    %3594 = vmatprep.subr.mxu0 0.0
    %3595 = vmatpush2.msra.mxu0 0.0
    %3596 = vmatprep.subr.mxu0 0.0
    %3597 = vmatpush2.msra.mxu0 0.0
    %3598 = vmatprep.subr.mxu0 0.0
    %3599 = vmatpush2.msra.mxu0 0.0
    %3600 = vmatprep.mubr.f32.mxu0 0.0
    %3601 = vmatmul.mubr.f32.gmra.mxu0 %v3531
    %v3602 = vpop.f32.mrf.mxu0
    %v3603 = vadd.f32 0.0, %v3602
    %v3604 = vpop.f32.mrf.mxu0
    %3605 = vmatprep.mubr.f32.mxu0 0.0
    %3606 = vmatmul.mubr.f32.gmra.mxu0 %v3534
    %v3607 = vpop.f32.mrf.mxu0
    %v3608 = vadd.f32 0.0, %v3607
    %v3609 = vpop.f32.mrf.mxu0
    %3610 = vdwg.mxu0
    %3611 = vrot.lane.b32.xlu0 %v2187, 80
    %v3612 = vpop.permute.xlu0 %3611
    %3613 = vrot.lane.b32.xlu0 %v2192, 80
    %v3614 = vpop.permute.xlu0 %3613
    %3615 = vrot.lane.b32.xlu0 %v2285, 80
    %v3616 = vpop.permute.xlu0 %3615
    %3617 = vrot.lane.b32.xlu0 %v2290, 80
    %v3618 = vpop.permute.xlu0 %3617
    %v3619 = vsel %vm2393, %v3612, 0
    %v3621 = vsel %vm2393, %v3614, 0
    %v3623 = vsel %vm2393, %v3616, 0
    %v3625 = vsel %vm2393, %v3618, 0
    %3627 = vmatprep.subr.mxu0 0.0
    %3628 = vmatpush1.xpose.msra.mxu0 0.0
    %3629 = vmatprep.subr.mxu0 0.0
    %3630 = vmatpush1.xpose.msra.mxu0 0.0
    %3631 = vmatprep.subr.mxu0 0.0
    %3632 = vmatpush1.xpose.msra.mxu0 0.0
    %3633 = vmatprep.subr.mxu0 0.0
    %3634 = vmatpush1.xpose.msra.mxu0 0.0
    %3635 = vmatprep.subr.mxu0 0.0
    %3636 = vmatpush1.xpose.msra.mxu0 0.0
    %3637 = vmatprep.subr.mxu0 0.0
    %3638 = vmatpush1.xpose.msra.mxu0 0.0
    %3639 = vmatprep.subr.mxu0 0.0
    %3640 = vmatpush1.xpose.msra.mxu0 0.0
    %3641 = vmatprep.subr.mxu0 0.0
    %3642 = vmatpush1.xpose.msra.mxu0 0.0
    %3643 = vmatprep.subr.mxu0 0.0
    %3644 = vmatpush1.xpose.msra.mxu0 0.0
    %3645 = vmatprep.subr.mxu0 0.0
    %3646 = vmatpush1.xpose.msra.mxu0 0.0
    %3647 = vmatprep.subr.mxu0 0.0
    %3648 = vmatpush1.xpose.msra.mxu0 0.0
    %3649 = vmatprep.subr.mxu0 0.0
    %3650 = vmatpush1.xpose.msra.mxu0 0.0
    %3651 = vmatprep.subr.mxu0 0.0
    %3652 = vmatpush1.xpose.msra.mxu0 0.0
    %3653 = vmatprep.subr.mxu0 0.0
    %3654 = vmatpush1.xpose.msra.mxu0 0.0
    %3655 = vmatprep.subr.mxu0 0.0
    %3656 = vmatpush1.xpose.msra.mxu0 %v3625
    %3657 = vmatprep.subr.mxu0 0.0
    %3658 = vmatpush1.xpose.msra.mxu0 %v3623
    %3659 = vmatprep.subr.mxu0 0.0
    %3660 = vmatpush2.xpose.msra.mxu0 0.0
    %3661 = vmatprep.subr.mxu0 0.0
    %3662 = vmatpush2.xpose.msra.mxu0 0.0
    %3663 = vmatprep.subr.mxu0 0.0
    %3664 = vmatpush2.xpose.msra.mxu0 0.0
    %3665 = vmatprep.subr.mxu0 0.0
    %3666 = vmatpush2.xpose.msra.mxu0 0.0
    %3667 = vmatprep.subr.mxu0 0.0
    %3668 = vmatpush2.xpose.msra.mxu0 0.0
    %3669 = vmatprep.subr.mxu0 0.0
    %3670 = vmatpush2.xpose.msra.mxu0 0.0
    %3671 = vmatprep.subr.mxu0 0.0
    %3672 = vmatpush2.xpose.msra.mxu0 0.0
    %3673 = vmatprep.subr.mxu0 0.0
    %3674 = vmatpush2.xpose.msra.mxu0 0.0
    %3675 = vmatprep.subr.mxu0 0.0
    %3676 = vmatpush2.xpose.msra.mxu0 0.0
    %3677 = vmatprep.subr.mxu0 0.0
    %3678 = vmatpush2.xpose.msra.mxu0 0.0
    %3679 = vmatprep.subr.mxu0 0.0
    %3680 = vmatpush2.xpose.msra.mxu0 0.0
    %3681 = vmatprep.subr.mxu0 0.0
    %3682 = vmatpush2.xpose.msra.mxu0 0.0
    %3683 = vmatprep.subr.mxu0 0.0
    %3684 = vmatpush2.xpose.msra.mxu0 0.0
    %3685 = vmatprep.subr.mxu0 0.0
    %3686 = vmatpush2.xpose.msra.mxu0 0.0
    %3687 = vmatprep.subr.mxu0 0.0
    %3688 = vmatpush2.xpose.msra.mxu0 0.0
    %3689 = vmatprep.subr.mxu0 0.0
    %3690 = vmatpush2.xpose.msra.mxu0 0.0
    %3691 = vmatprep.mubr.f32.mxu0 0.0
    %3692 = vmatmul.mubr.f32.gmra.mxu0 %v3619
    %v3693 = vpop.f32.mrf.mxu0
    %v3694 = vadd.f32 0.0, %v3693
    %v3695 = vpop.f32.mrf.mxu0
    %3696 = vmatprep.mubr.f32.mxu0 0.0
    %3697 = vmatmul.mubr.f32.gmra.mxu0 %v3621
    %v3698 = vpop.f32.mrf.mxu0
    %v3699 = vadd.f32 0.0, %v3698
    %v3700 = vpop.f32.mrf.mxu0
    %3701 = vdwg.mxu0
    %v3702 = vmul.f32 %v3694, 0.35355338
    %v3703 = vmul.f32 %v3699, 0.35355338
    %v3704 = vadd.f32 %v3702, %v2391
    %v3705 = vadd.f32 %v3703, %v2392
    %v3706 = vsel %vm2485, %v3704, -inf
    %3707 = vmax.xlane.f32.xlu0 %v3706
    %v3708 = vpop.xlane.xlu0 %3707
    %v3709 = vsel %vm2485, %v3705, -inf
    %3710 = vmax.xlane.f32.xlu0 %v3709
    %v3711 = vpop.xlane.xlu0 %3710
    %v3712 = vsub.f32 %v3704, %v3708
    %v3713 = vsub.f32 %v3705, %v3711
    %v3714 = vmul.f32 %v3712, 1.442695
    %v3715 = vpow.pop %v3714
    %v3716 = vmul.f32 %v3713, 1.442695
    %v3717 = vpow.pop %v3716
    %v3718 = vsel %vm2485, %v3715, 0.0
    %3719 = vadd.xlane.f32.xlu0 %v3718
    %v3720 = vpop.xlane.xlu0 %3719
    %v3721 = vsel %vm2485, %v3717, 0.0
    %3722 = vadd.xlane.f32.xlu0 %v3721
    %v3723 = vpop.xlane.xlu0 %3722
    %v3724 = vrcp.pop %v3720
    %v3725 = vmul.f32 %v3715, %v3724
    %v3726 = vrcp.pop %v3723
    %v3727 = vmul.f32 %v3717, %v3726
    %3728 = vrot.lane.b32.xlu0 %v2383, 80
    %v3729 = vpop.permute.xlu0 %3728
    %3730 = vrot.lane.b32.xlu0 %v2388, 80
    %v3731 = vpop.permute.xlu0 %3730
    %v3735 = vsel %vm2485, %v3725, 0
    %v3738 = vsel %vm2485, %v3727, 0
    %3740 = vmatprep.subr.mxu0 0.0
    %3741 = vmatpush1.msra.mxu0 0.0
    %3742 = vmatprep.subr.mxu0 0.0
    %3743 = vmatpush1.msra.mxu0 0.0
    %3744 = vmatprep.subr.mxu0 0.0
    %3745 = vmatpush1.msra.mxu0 0.0
    %3746 = vmatprep.subr.mxu0 0.0
    %3747 = vmatpush1.msra.mxu0 0.0
    %3748 = vmatprep.subr.mxu0 0.0
    %3749 = vmatpush1.msra.mxu0 0.0
    %3750 = vmatprep.subr.mxu0 0.0
    %3751 = vmatpush1.msra.mxu0 0.0
    %3752 = vmatprep.subr.mxu0 0.0
    %3753 = vmatpush1.msra.mxu0 0.0
    %3754 = vmatprep.subr.mxu0 0.0
    %3755 = vmatpush1.msra.mxu0 0.0
    %3756 = vmatprep.subr.mxu0 0.0
    %3757 = vmatpush1.msra.mxu0 0.0
    %3758 = vmatprep.subr.mxu0 0.0
    %3759 = vmatpush1.msra.mxu0 0.0
    %3760 = vmatprep.subr.mxu0 0.0
    %3761 = vmatpush1.msra.mxu0 0.0
    %3762 = vmatprep.subr.mxu0 0.0
    %3763 = vmatpush1.msra.mxu0 0.0
    %3764 = vmatprep.subr.mxu0 0.0
    %3765 = vmatpush1.msra.mxu0 0.0
    %3766 = vmatprep.subr.mxu0 0.0
    %3767 = vmatpush1.msra.mxu0 0.0
    %3768 = vmatprep.subr.mxu0 0.0
    %3769 = vmatpush1.msra.mxu0 %v3731
    %3770 = vmatprep.subr.mxu0 0.0
    %3771 = vmatpush1.msra.mxu0 %v3729
    %3772 = vmatprep.subr.mxu0 0.0
    %3773 = vmatpush2.msra.mxu0 0.0
    %3774 = vmatprep.subr.mxu0 0.0
    %3775 = vmatpush2.msra.mxu0 0.0
    %3776 = vmatprep.subr.mxu0 0.0
    %3777 = vmatpush2.msra.mxu0 0.0
    %3778 = vmatprep.subr.mxu0 0.0
    %3779 = vmatpush2.msra.mxu0 0.0
    %3780 = vmatprep.subr.mxu0 0.0
    %3781 = vmatpush2.msra.mxu0 0.0
    %3782 = vmatprep.subr.mxu0 0.0
    %3783 = vmatpush2.msra.mxu0 0.0
    %3784 = vmatprep.subr.mxu0 0.0
    %3785 = vmatpush2.msra.mxu0 0.0
    %3786 = vmatprep.subr.mxu0 0.0
    %3787 = vmatpush2.msra.mxu0 0.0
    %3788 = vmatprep.subr.mxu0 0.0
    %3789 = vmatpush2.msra.mxu0 0.0
    %3790 = vmatprep.subr.mxu0 0.0
    %3791 = vmatpush2.msra.mxu0 0.0
    %3792 = vmatprep.subr.mxu0 0.0
    %3793 = vmatpush2.msra.mxu0 0.0
    %3794 = vmatprep.subr.mxu0 0.0
    %3795 = vmatpush2.msra.mxu0 0.0
    %3796 = vmatprep.subr.mxu0 0.0
    %3797 = vmatpush2.msra.mxu0 0.0
    %3798 = vmatprep.subr.mxu0 0.0
    %3799 = vmatpush2.msra.mxu0 0.0
    %3800 = vmatprep.subr.mxu0 0.0
    %3801 = vmatpush2.msra.mxu0 0.0
    %3802 = vmatprep.subr.mxu0 0.0
    %3803 = vmatpush2.msra.mxu0 0.0
    %3804 = vmatprep.mubr.f32.mxu0 0.0
    %3805 = vmatmul.mubr.f32.gmra.mxu0 %v3735
    %v3806 = vpop.f32.mrf.mxu0
    %v3807 = vadd.f32 0.0, %v3806
    %v3808 = vpop.f32.mrf.mxu0
    %3809 = vmatprep.mubr.f32.mxu0 0.0
    %3810 = vmatmul.mubr.f32.gmra.mxu0 %v3738
    %v3811 = vpop.f32.mrf.mxu0
    %v3812 = vadd.f32 0.0, %v3811
    %v3813 = vpop.f32.mrf.mxu0
    %3814 = vdwg.mxu0
    %3815 = vrot.lane.b32.xlu0 %v2187, 72
    %v3816 = vpop.permute.xlu0 %3815
    %3817 = vrot.lane.b32.xlu0 %v2192, 72
    %v3818 = vpop.permute.xlu0 %3817
    %3819 = vrot.lane.b32.xlu0 %v2285, 72
    %v3820 = vpop.permute.xlu0 %3819
    %3821 = vrot.lane.b32.xlu0 %v2290, 72
    %v3822 = vpop.permute.xlu0 %3821
    %v3823 = vsel %vm2393, %v3816, 0
    %v3825 = vsel %vm2393, %v3818, 0
    %v3827 = vsel %vm2393, %v3820, 0
    %v3829 = vsel %vm2393, %v3822, 0
    %3831 = vmatprep.subr.mxu0 0.0
    %3832 = vmatpush1.xpose.msra.mxu0 0.0
    %3833 = vmatprep.subr.mxu0 0.0
    %3834 = vmatpush1.xpose.msra.mxu0 0.0
    %3835 = vmatprep.subr.mxu0 0.0
    %3836 = vmatpush1.xpose.msra.mxu0 0.0
    %3837 = vmatprep.subr.mxu0 0.0
    %3838 = vmatpush1.xpose.msra.mxu0 0.0
    %3839 = vmatprep.subr.mxu0 0.0
    %3840 = vmatpush1.xpose.msra.mxu0 0.0
    %3841 = vmatprep.subr.mxu0 0.0
    %3842 = vmatpush1.xpose.msra.mxu0 0.0
    %3843 = vmatprep.subr.mxu0 0.0
    %3844 = vmatpush1.xpose.msra.mxu0 0.0
    %3845 = vmatprep.subr.mxu0 0.0
    %3846 = vmatpush1.xpose.msra.mxu0 0.0
    %3847 = vmatprep.subr.mxu0 0.0
    %3848 = vmatpush1.xpose.msra.mxu0 0.0
    %3849 = vmatprep.subr.mxu0 0.0
    %3850 = vmatpush1.xpose.msra.mxu0 0.0
    %3851 = vmatprep.subr.mxu0 0.0
    %3852 = vmatpush1.xpose.msra.mxu0 0.0
    %3853 = vmatprep.subr.mxu0 0.0
    %3854 = vmatpush1.xpose.msra.mxu0 0.0
    %3855 = vmatprep.subr.mxu0 0.0
    %3856 = vmatpush1.xpose.msra.mxu0 0.0
    %3857 = vmatprep.subr.mxu0 0.0
    %3858 = vmatpush1.xpose.msra.mxu0 0.0
    %3859 = vmatprep.subr.mxu0 0.0
    %3860 = vmatpush1.xpose.msra.mxu0 %v3829
    %3861 = vmatprep.subr.mxu0 0.0
    %3862 = vmatpush1.xpose.msra.mxu0 %v3827
    %3863 = vmatprep.subr.mxu0 0.0
    %3864 = vmatpush2.xpose.msra.mxu0 0.0
    %3865 = vmatprep.subr.mxu0 0.0
    %3866 = vmatpush2.xpose.msra.mxu0 0.0
    %3867 = vmatprep.subr.mxu0 0.0
    %3868 = vmatpush2.xpose.msra.mxu0 0.0
    %3869 = vmatprep.subr.mxu0 0.0
    %3870 = vmatpush2.xpose.msra.mxu0 0.0
    %3871 = vmatprep.subr.mxu0 0.0
    %3872 = vmatpush2.xpose.msra.mxu0 0.0
    %3873 = vmatprep.subr.mxu0 0.0
    %3874 = vmatpush2.xpose.msra.mxu0 0.0
    %3875 = vmatprep.subr.mxu0 0.0
    %3876 = vmatpush2.xpose.msra.mxu0 0.0
    %3877 = vmatprep.subr.mxu0 0.0
    %3878 = vmatpush2.xpose.msra.mxu0 0.0
    %3879 = vmatprep.subr.mxu0 0.0
    %3880 = vmatpush2.xpose.msra.mxu0 0.0
    %3881 = vmatprep.subr.mxu0 0.0
    %3882 = vmatpush2.xpose.msra.mxu0 0.0
    %3883 = vmatprep.subr.mxu0 0.0
    %3884 = vmatpush2.xpose.msra.mxu0 0.0
    %3885 = vmatprep.subr.mxu0 0.0
    %3886 = vmatpush2.xpose.msra.mxu0 0.0
    %3887 = vmatprep.subr.mxu0 0.0
    %3888 = vmatpush2.xpose.msra.mxu0 0.0
    %3889 = vmatprep.subr.mxu0 0.0
    %3890 = vmatpush2.xpose.msra.mxu0 0.0
    %3891 = vmatprep.subr.mxu0 0.0
    %3892 = vmatpush2.xpose.msra.mxu0 0.0
    %3893 = vmatprep.subr.mxu0 0.0
    %3894 = vmatpush2.xpose.msra.mxu0 0.0
    %3895 = vmatprep.mubr.f32.mxu0 0.0
    %3896 = vmatmul.mubr.f32.gmra.mxu0 %v3823
    %v3897 = vpop.f32.mrf.mxu0
    %v3898 = vadd.f32 0.0, %v3897
    %v3899 = vpop.f32.mrf.mxu0
    %3900 = vmatprep.mubr.f32.mxu0 0.0
    %3901 = vmatmul.mubr.f32.gmra.mxu0 %v3825
    %v3902 = vpop.f32.mrf.mxu0
    %v3903 = vadd.f32 0.0, %v3902
    %v3904 = vpop.f32.mrf.mxu0
    %3905 = vdwg.mxu0
    %v3906 = vmul.f32 %v3898, 0.35355338
    %v3907 = vmul.f32 %v3903, 0.35355338
    %v3908 = vadd.f32 %v3906, %v2391
    %v3909 = vadd.f32 %v3907, %v2392
    %v3910 = vsel %vm2485, %v3908, -inf
    %3911 = vmax.xlane.f32.xlu0 %v3910
    %v3912 = vpop.xlane.xlu0 %3911
    %v3913 = vsel %vm2485, %v3909, -inf
    %3914 = vmax.xlane.f32.xlu0 %v3913
    %v3915 = vpop.xlane.xlu0 %3914
    %v3916 = vsub.f32 %v3908, %v3912
    %v3917 = vsub.f32 %v3909, %v3915
    %v3918 = vmul.f32 %v3916, 1.442695
    %v3919 = vpow.pop %v3918
    %v3920 = vmul.f32 %v3917, 1.442695
    %v3921 = vpow.pop %v3920
    %v3922 = vsel %vm2485, %v3919, 0.0
    %3923 = vadd.xlane.f32.xlu0 %v3922
    %v3924 = vpop.xlane.xlu0 %3923
    %v3925 = vsel %vm2485, %v3921, 0.0
    %3926 = vadd.xlane.f32.xlu0 %v3925
    %v3927 = vpop.xlane.xlu0 %3926
    %v3928 = vrcp.pop %v3924
    %v3929 = vmul.f32 %v3919, %v3928
    %v3930 = vrcp.pop %v3927
    %v3931 = vmul.f32 %v3921, %v3930
    %3932 = vrot.lane.b32.xlu0 %v2383, 72
    %v3933 = vpop.permute.xlu0 %3932
    %3934 = vrot.lane.b32.xlu0 %v2388, 72
    %v3935 = vpop.permute.xlu0 %3934
    %v3939 = vsel %vm2485, %v3929, 0
    %v3942 = vsel %vm2485, %v3931, 0
    %3944 = vmatprep.subr.mxu0 0.0
    %3945 = vmatpush1.msra.mxu0 0.0
    %3946 = vmatprep.subr.mxu0 0.0
    %3947 = vmatpush1.msra.mxu0 0.0
    %3948 = vmatprep.subr.mxu0 0.0
    %3949 = vmatpush1.msra.mxu0 0.0
    %3950 = vmatprep.subr.mxu0 0.0
    %3951 = vmatpush1.msra.mxu0 0.0
    %3952 = vmatprep.subr.mxu0 0.0
    %3953 = vmatpush1.msra.mxu0 0.0
    %3954 = vmatprep.subr.mxu0 0.0
    %3955 = vmatpush1.msra.mxu0 0.0
    %3956 = vmatprep.subr.mxu0 0.0
    %3957 = vmatpush1.msra.mxu0 0.0
    %3958 = vmatprep.subr.mxu0 0.0
    %3959 = vmatpush1.msra.mxu0 0.0
    %3960 = vmatprep.subr.mxu0 0.0
    %3961 = vmatpush1.msra.mxu0 0.0
    %3962 = vmatprep.subr.mxu0 0.0
    %3963 = vmatpush1.msra.mxu0 0.0
    %3964 = vmatprep.subr.mxu0 0.0
    %3965 = vmatpush1.msra.mxu0 0.0
    %3966 = vmatprep.subr.mxu0 0.0
    %3967 = vmatpush1.msra.mxu0 0.0
    %3968 = vmatprep.subr.mxu0 0.0
    %3969 = vmatpush1.msra.mxu0 0.0
    %3970 = vmatprep.subr.mxu0 0.0
    %3971 = vmatpush1.msra.mxu0 0.0
    %3972 = vmatprep.subr.mxu0 0.0
    %3973 = vmatpush1.msra.mxu0 %v3935
    %3974 = vmatprep.subr.mxu0 0.0
    %3975 = vmatpush1.msra.mxu0 %v3933
    %3976 = vmatprep.subr.mxu0 0.0
    %3977 = vmatpush2.msra.mxu0 0.0
    %3978 = vmatprep.subr.mxu0 0.0
    %3979 = vmatpush2.msra.mxu0 0.0
    %3980 = vmatprep.subr.mxu0 0.0
    %3981 = vmatpush2.msra.mxu0 0.0
    %3982 = vmatprep.subr.mxu0 0.0
    %3983 = vmatpush2.msra.mxu0 0.0
    %3984 = vmatprep.subr.mxu0 0.0
    %3985 = vmatpush2.msra.mxu0 0.0
    %3986 = vmatprep.subr.mxu0 0.0
    %3987 = vmatpush2.msra.mxu0 0.0
    %3988 = vmatprep.subr.mxu0 0.0
    %3989 = vmatpush2.msra.mxu0 0.0
    %3990 = vmatprep.subr.mxu0 0.0
    %3991 = vmatpush2.msra.mxu0 0.0
    %3992 = vmatprep.subr.mxu0 0.0
    %3993 = vmatpush2.msra.mxu0 0.0
    %3994 = vmatprep.subr.mxu0 0.0
    %3995 = vmatpush2.msra.mxu0 0.0
    %3996 = vmatprep.subr.mxu0 0.0
    %3997 = vmatpush2.msra.mxu0 0.0
    %3998 = vmatprep.subr.mxu0 0.0
    %3999 = vmatpush2.msra.mxu0 0.0
    %4000 = vmatprep.subr.mxu0 0.0
    %4001 = vmatpush2.msra.mxu0 0.0
    %4002 = vmatprep.subr.mxu0 0.0
    %4003 = vmatpush2.msra.mxu0 0.0
    %4004 = vmatprep.subr.mxu0 0.0
    %4005 = vmatpush2.msra.mxu0 0.0
    %4006 = vmatprep.subr.mxu0 0.0
    %4007 = vmatpush2.msra.mxu0 0.0
    %4008 = vmatprep.mubr.f32.mxu0 0.0
    %4009 = vmatmul.mubr.f32.gmra.mxu0 %v3939
    %v4010 = vpop.f32.mrf.mxu0
    %v4011 = vadd.f32 0.0, %v4010
    %v4012 = vpop.f32.mrf.mxu0
    %4013 = vmatprep.mubr.f32.mxu0 0.0
    %4014 = vmatmul.mubr.f32.gmra.mxu0 %v3942
    %v4015 = vpop.f32.mrf.mxu0
    %v4016 = vadd.f32 0.0, %v4015
    %v4017 = vpop.f32.mrf.mxu0
    %4018 = vdwg.mxu0
    %4021 = vrot.lane.b32.xlu0 %v2787, 8
    %v4022 = vpop.permute.xlu0 %4021
    %4023 = vrot.lane.b32.xlu0 %v2792, 8
    %v4024 = vpop.permute.xlu0 %4023
    %4029 = vrot.lane.b32.xlu0 %v2991, 16
    %v4030 = vpop.permute.xlu0 %4029
    %4031 = vrot.lane.b32.xlu0 %v2996, 16
    %v4032 = vpop.permute.xlu0 %4031
    %4037 = vrot.lane.b32.xlu0 %v3195, 24
    %v4038 = vpop.permute.xlu0 %4037
    %4039 = vrot.lane.b32.xlu0 %v3200, 24
    %v4040 = vpop.permute.xlu0 %4039
    %4045 = vrot.lane.b32.xlu0 %v3399, 32
    %v4046 = vpop.permute.xlu0 %4045
    %4047 = vrot.lane.b32.xlu0 %v3404, 32
    %v4048 = vpop.permute.xlu0 %4047
    %4053 = vrot.lane.b32.xlu0 %v3603, 40
    %v4054 = vpop.permute.xlu0 %4053
    %4055 = vrot.lane.b32.xlu0 %v3608, 40
    %v4056 = vpop.permute.xlu0 %4055
    %4061 = vrot.lane.b32.xlu0 %v3807, 48
    %v4062 = vpop.permute.xlu0 %4061
    %4063 = vrot.lane.b32.xlu0 %v3812, 48
    %v4064 = vpop.permute.xlu0 %4063
    %4069 = vrot.lane.b32.xlu0 %v4011, 56
    %v4070 = vpop.permute.xlu0 %4069
    %4071 = vrot.lane.b32.xlu0 %v4016, 56
    %v4072 = vpop.permute.xlu0 %4071
    %v4075 = vsel %vm2393, %v2581, %v4022
    %v4076 = vsel %vm2393, %v2586, %v4024
    %v4077 = vsel %vm2485, %v4075, %v4030
    %v4078 = vsel %vm2485, %v4076, %v4032
    %vm4079 = vcmask 195584
    %v4080 = vsel %vm4079, %v4077, %v4038
    %v4081 = vsel %vm4079, %v4078, %v4040
    %v4082 = vsel %vm112, %v4080, %v4046
    %v4083 = vsel %vm112, %v4081, %v4048
    %vm4084 = vcmask 326656
    %v4085 = vsel %vm4084, %v4082, %v4054
    %v4086 = vsel %vm4084, %v4083, %v4056
    %vm4087 = vcmask 392192
    %v4088 = vsel %vm4087, %v4085, %v4062
    %v4089 = vsel %vm4087, %v4086, %v4064
    %vm4090 = vcmask 457728
    %v4091 = vsel %vm4090, %v4088, %v4070
    %v4092 = vsel %vm4090, %v4089, %v4072
    %v4093 = vld [vmem:[%s8] sm:$0x3]
    %v4095 = vsel %vm2485, %v4093, 0
    %4097 = vmatprep.subr.mxu0 0.0
    %4098 = vmatpush1.msra.mxu0 0.0
    %4099 = vmatprep.subr.mxu0 0.0
    %4100 = vmatpush1.msra.mxu0 0.0
    %4101 = vmatprep.subr.mxu0 0.0
    %4102 = vmatpush1.msra.mxu0 0.0
    %4103 = vmatprep.subr.mxu0 0.0
    %4104 = vmatpush1.msra.mxu0 0.0
    %4105 = vmatprep.subr.mxu0 0.0
    %4106 = vmatpush1.msra.mxu0 0.0
    %4107 = vmatprep.subr.mxu0 0.0
    %4108 = vmatpush1.msra.mxu0 0.0
    %4109 = vmatprep.subr.mxu0 0.0
    %4110 = vmatpush1.msra.mxu0 0.0
    %4111 = vmatprep.subr.mxu0 0.0
    %4112 = vmatpush1.msra.mxu0 0.0
    %4113 = vmatprep.subr.mxu0 0.0
    %4114 = vmatpush1.msra.mxu0 0.0
    %4115 = vmatprep.subr.mxu0 0.0
    %4116 = vmatpush1.msra.mxu0 0.0
    %4117 = vmatprep.subr.mxu0 0.0
    %4118 = vmatpush1.msra.mxu0 0.0
    %4119 = vmatprep.subr.mxu0 0.0
    %4120 = vmatpush1.msra.mxu0 0.0
    %4121 = vmatprep.subr.mxu0 0.0
    %4122 = vmatpush1.msra.mxu0 0.0
    %4123 = vmatprep.subr.mxu0 0.0
    %4124 = vmatpush1.msra.mxu0 0.0
    %4125 = vmatprep.subr.mxu0 0.0
    %4126 = vmatpush1.msra.mxu0 %v4092
    %4127 = vmatprep.subr.mxu0 0.0
    %4128 = vmatpush1.msra.mxu0 %v4091
    %4129 = vmatprep.subr.mxu0 0.0
    %4130 = vmatpush2.msra.mxu0 0.0
    %4131 = vmatprep.subr.mxu0 0.0
    %4132 = vmatpush2.msra.mxu0 0.0
    %4133 = vmatprep.subr.mxu0 0.0
    %4134 = vmatpush2.msra.mxu0 0.0
    %4135 = vmatprep.subr.mxu0 0.0
    %4136 = vmatpush2.msra.mxu0 0.0
    %4137 = vmatprep.subr.mxu0 0.0
    %4138 = vmatpush2.msra.mxu0 0.0
    %4139 = vmatprep.subr.mxu0 0.0
    %4140 = vmatpush2.msra.mxu0 0.0
    %4141 = vmatprep.subr.mxu0 0.0
    %4142 = vmatpush2.msra.mxu0 0.0
    %4143 = vmatprep.subr.mxu0 0.0
    %4144 = vmatpush2.msra.mxu0 0.0
    %4145 = vmatprep.subr.mxu0 0.0
    %4146 = vmatpush2.msra.mxu0 0.0
    %4147 = vmatprep.subr.mxu0 0.0
    %4148 = vmatpush2.msra.mxu0 0.0
    %4149 = vmatprep.subr.mxu0 0.0
    %4150 = vmatpush2.msra.mxu0 0.0
    %4151 = vmatprep.subr.mxu0 0.0
    %4152 = vmatpush2.msra.mxu0 0.0
    %4153 = vmatprep.subr.mxu0 0.0
    %4154 = vmatpush2.msra.mxu0 0.0
    %4155 = vmatprep.subr.mxu0 0.0
    %4156 = vmatpush2.msra.mxu0 0.0
    %4157 = vmatprep.subr.mxu0 0.0
    %4158 = vmatpush2.msra.mxu0 0.0
    %4159 = vmatprep.subr.mxu0 0.0
    %4160 = vmatpush2.msra.mxu0 0.0
    %4161 = vmatprep.mubr.f32.mxu0 0.0
    %4162 = vmatmul.mubr.f32.gmra.mxu0 %v4095
    %v4163 = vpop.f32.mrf.mxu0
    %v4164 = vadd.f32 0.0, %v4163
    %v4165 = vpop.f32.mrf.mxu0
    %4166 = vdwg.mxu0
    %v4167 = vld [vmem:[%s15] sm:$0xff]
    %v4168 = vld [vmem:[%s15 + $0x8] sm:$0xff]
    %v4169 = vld [vmem:[%s15 + $0x10] sm:$0xff]
    %v4170 = vld [vmem:[%s15 + $0x18] sm:$0xff]
    %v4171 = vld [vmem:[%s15 + $0x20] sm:$0xff]
    %v4172 = vld [vmem:[%s15 + $0x28] sm:$0xff]
    %v4173 = vld [vmem:[%s15 + $0x30] sm:$0xff]
    %v4174 = vld [vmem:[%s15 + $0x38] sm:$0xff]
    %v4175 = vld [vmem:[%s16] sm:$0x1]
    %v4177 = vlaneseq
    %v4178 = vshrl.u32 %v4177, 7
    %v4179 = vsub.s32 0, %v4178
    %v4180 = vrot.slane %v4175, %v4179
    %v4183 = vsel %vm232, %v4164, 0
    %4185 = vmatprep.subr.mxu0 0.0
    %4186 = vmatpush1.msra.mxu0 0.0
    %4187 = vmatprep.subr.mxu0 0.0
    %4188 = vmatpush1.msra.mxu0 0.0
    %4189 = vmatprep.subr.mxu0 0.0
    %4190 = vmatpush1.msra.mxu0 0.0
    %4191 = vmatprep.subr.mxu0 0.0
    %4192 = vmatpush1.msra.mxu0 0.0
    %4193 = vmatprep.subr.mxu0 0.0
    %4194 = vmatpush1.msra.mxu0 0.0
    %4195 = vmatprep.subr.mxu0 0.0
    %4196 = vmatpush1.msra.mxu0 0.0
    %4197 = vmatprep.subr.mxu0 0.0
    %4198 = vmatpush1.msra.mxu0 0.0
    %4199 = vmatprep.subr.mxu0 0.0
    %4200 = vmatpush1.msra.mxu0 0.0
    %4201 = vmatprep.subr.mxu0 0.0
    %4202 = vmatpush1.msra.mxu0 %v4174
    %4203 = vmatprep.subr.mxu0 0.0
    %4204 = vmatpush1.msra.mxu0 %v4173
    %4205 = vmatprep.subr.mxu0 0.0
    %4206 = vmatpush1.msra.mxu0 %v4172
    %4207 = vmatprep.subr.mxu0 0.0
    %4208 = vmatpush1.msra.mxu0 %v4171
    %4209 = vmatprep.subr.mxu0 0.0
    %4210 = vmatpush1.msra.mxu0 %v4170
    %4211 = vmatprep.subr.mxu0 0.0
    %4212 = vmatpush1.msra.mxu0 %v4169
    %4213 = vmatprep.subr.mxu0 0.0
    %4214 = vmatpush1.msra.mxu0 %v4168
    %4215 = vmatprep.subr.mxu0 0.0
    %4216 = vmatpush1.msra.mxu0 %v4167
    %4217 = vmatprep.subr.mxu0 0.0
    %4218 = vmatpush2.msra.mxu0 0.0
    %4219 = vmatprep.subr.mxu0 0.0
    %4220 = vmatpush2.msra.mxu0 0.0
    %4221 = vmatprep.subr.mxu0 0.0
    %4222 = vmatpush2.msra.mxu0 0.0
    %4223 = vmatprep.subr.mxu0 0.0
    %4224 = vmatpush2.msra.mxu0 0.0
    %4225 = vmatprep.subr.mxu0 0.0
    %4226 = vmatpush2.msra.mxu0 0.0
    %4227 = vmatprep.subr.mxu0 0.0
    %4228 = vmatpush2.msra.mxu0 0.0
    %4229 = vmatprep.subr.mxu0 0.0
    %4230 = vmatpush2.msra.mxu0 0.0
    %4231 = vmatprep.subr.mxu0 0.0
    %4232 = vmatpush2.msra.mxu0 0.0
    %4233 = vmatprep.subr.mxu0 0.0
    %4234 = vmatpush2.msra.mxu0 0.0
    %4235 = vmatprep.subr.mxu0 0.0
    %4236 = vmatpush2.msra.mxu0 0.0
    %4237 = vmatprep.subr.mxu0 0.0
    %4238 = vmatpush2.msra.mxu0 0.0
    %4239 = vmatprep.subr.mxu0 0.0
    %4240 = vmatpush2.msra.mxu0 0.0
    %4241 = vmatprep.subr.mxu0 0.0
    %4242 = vmatpush2.msra.mxu0 0.0
    %4243 = vmatprep.subr.mxu0 0.0
    %4244 = vmatpush2.msra.mxu0 0.0
    %4245 = vmatprep.subr.mxu0 0.0
    %4246 = vmatpush2.msra.mxu0 0.0
    %4247 = vmatprep.subr.mxu0 0.0
    %4248 = vmatpush2.msra.mxu0 0.0
    %4249 = vmatprep.mubr.f32.mxu0 0.0
    %4250 = vmatmul.mubr.f32.gmra.mxu0 %v4183
    %v4251 = vpop.f32.mrf.mxu0
    %v4252 = vadd.f32 %v4180, %v4251
    %v4253 = vpop.f32.mrf.mxu0
    %4254 = vdwg.mxu0
    %v4255 = vld [vmem:[%s17] sm:$0xff]
    %v4256 = vld [vmem:[%s17 + $0x8] sm:$0xff]
    %v4257 = vld [vmem:[%s17 + $0x10] sm:$0xff]
    %v4258 = vld [vmem:[%s17 + $0x18] sm:$0xff]
    %v4259 = vld [vmem:[%s17 + $0x20] sm:$0xff]
    %v4260 = vld [vmem:[%s17 + $0x28] sm:$0xff]
    %v4261 = vld [vmem:[%s17 + $0x30] sm:$0xff]
    %v4262 = vld [vmem:[%s17 + $0x38] sm:$0xff]
    %v4263 = vld [vmem:[%s18] sm:$0x1]
    %v4265 = vlaneseq
    %v4266 = vshrl.u32 %v4265, 7
    %v4267 = vsub.s32 0, %v4266
    %v4268 = vrot.slane %v4263, %v4267
    %v4271 = vsel %vm232, %v4252, 0
    %4273 = vmatprep.subr.mxu0 0.0
    %4274 = vmatpush1.msra.mxu0 0.0
    %4275 = vmatprep.subr.mxu0 0.0
    %4276 = vmatpush1.msra.mxu0 0.0
    %4277 = vmatprep.subr.mxu0 0.0
    %4278 = vmatpush1.msra.mxu0 0.0
    %4279 = vmatprep.subr.mxu0 0.0
    %4280 = vmatpush1.msra.mxu0 0.0
    %4281 = vmatprep.subr.mxu0 0.0
    %4282 = vmatpush1.msra.mxu0 0.0
    %4283 = vmatprep.subr.mxu0 0.0
    %4284 = vmatpush1.msra.mxu0 0.0
    %4285 = vmatprep.subr.mxu0 0.0
    %4286 = vmatpush1.msra.mxu0 0.0
    %4287 = vmatprep.subr.mxu0 0.0
    %4288 = vmatpush1.msra.mxu0 0.0
    %4289 = vmatprep.subr.mxu0 0.0
    %4290 = vmatpush1.msra.mxu0 %v4262
    %4291 = vmatprep.subr.mxu0 0.0
    %4292 = vmatpush1.msra.mxu0 %v4261
    %4293 = vmatprep.subr.mxu0 0.0
    %4294 = vmatpush1.msra.mxu0 %v4260
    %4295 = vmatprep.subr.mxu0 0.0
    %4296 = vmatpush1.msra.mxu0 %v4259
    %4297 = vmatprep.subr.mxu0 0.0
    %4298 = vmatpush1.msra.mxu0 %v4258
    %4299 = vmatprep.subr.mxu0 0.0
    %4300 = vmatpush1.msra.mxu0 %v4257
    %4301 = vmatprep.subr.mxu0 0.0
    %4302 = vmatpush1.msra.mxu0 %v4256
    %4303 = vmatprep.subr.mxu0 0.0
    %4304 = vmatpush1.msra.mxu0 %v4255
    %4305 = vmatprep.subr.mxu0 0.0
    %4306 = vmatpush2.msra.mxu0 0.0
    %4307 = vmatprep.subr.mxu0 0.0
    %4308 = vmatpush2.msra.mxu0 0.0
    %4309 = vmatprep.subr.mxu0 0.0
    %4310 = vmatpush2.msra.mxu0 0.0
    %4311 = vmatprep.subr.mxu0 0.0
    %4312 = vmatpush2.msra.mxu0 0.0
    %4313 = vmatprep.subr.mxu0 0.0
    %4314 = vmatpush2.msra.mxu0 0.0
    %4315 = vmatprep.subr.mxu0 0.0
    %4316 = vmatpush2.msra.mxu0 0.0
    %4317 = vmatprep.subr.mxu0 0.0
    %4318 = vmatpush2.msra.mxu0 0.0
    %4319 = vmatprep.subr.mxu0 0.0
    %4320 = vmatpush2.msra.mxu0 0.0
    %4321 = vmatprep.subr.mxu0 0.0
    %4322 = vmatpush2.msra.mxu0 0.0
    %4323 = vmatprep.subr.mxu0 0.0
    %4324 = vmatpush2.msra.mxu0 0.0
    %4325 = vmatprep.subr.mxu0 0.0
    %4326 = vmatpush2.msra.mxu0 0.0
    %4327 = vmatprep.subr.mxu0 0.0
    %4328 = vmatpush2.msra.mxu0 0.0
    %4329 = vmatprep.subr.mxu0 0.0
    %4330 = vmatpush2.msra.mxu0 0.0
    %4331 = vmatprep.subr.mxu0 0.0
    %4332 = vmatpush2.msra.mxu0 0.0
    %4333 = vmatprep.subr.mxu0 0.0
    %4334 = vmatpush2.msra.mxu0 0.0
    %4335 = vmatprep.subr.mxu0 0.0
    %4336 = vmatpush2.msra.mxu0 0.0
    %4337 = vmatprep.mubr.f32.mxu0 0.0
    %4338 = vmatmul.mubr.f32.gmra.mxu0 %v4271
    %v4339 = vpop.f32.mrf.mxu0
    %v4340 = vadd.f32 %v4268, %v4339
    %v4341 = vpop.f32.mrf.mxu0
    %4342 = vdwg.mxu0
    %v4343 = vmax.f32 %v4340, 0.0
    %v4344 = vld [vmem:[#allocation3] sm:$0xff]
    %v4345 = vld [vmem:[#allocation3 + $0x8] sm:$0xff]
    %v4346 = vld [vmem:[#allocation3 + $0x10] sm:$0xff]
    %v4347 = vld [vmem:[#allocation3 + $0x18] sm:$0xff]
    %v4348 = vld [vmem:[%s20] sm:$0x1]
    %v4350 = vlaneseq
    %v4351 = vshrl.u32 %v4350, 7
    %v4352 = vsub.s32 0, %v4351
    %v4353 = vrot.slane %v4348, %v4352
    %v4356 = vsel %vm112, %v4343, 0
    %4358 = vmatprep.subr.mxu0 0.0
    %4359 = vmatpush1.msra.mxu0 0.0
    %4360 = vmatprep.subr.mxu0 0.0
    %4361 = vmatpush1.msra.mxu0 0.0
    %4362 = vmatprep.subr.mxu0 0.0
    %4363 = vmatpush1.msra.mxu0 0.0
    %4364 = vmatprep.subr.mxu0 0.0
    %4365 = vmatpush1.msra.mxu0 0.0
    %4366 = vmatprep.subr.mxu0 0.0
    %4367 = vmatpush1.msra.mxu0 0.0
    %4368 = vmatprep.subr.mxu0 0.0
    %4369 = vmatpush1.msra.mxu0 0.0
    %4370 = vmatprep.subr.mxu0 0.0
    %4371 = vmatpush1.msra.mxu0 0.0
    %4372 = vmatprep.subr.mxu0 0.0
    %4373 = vmatpush1.msra.mxu0 0.0
    %4374 = vmatprep.subr.mxu0 0.0
    %4375 = vmatpush1.msra.mxu0 0.0
    %4376 = vmatprep.subr.mxu0 0.0
    %4377 = vmatpush1.msra.mxu0 0.0
    %4378 = vmatprep.subr.mxu0 0.0
    %4379 = vmatpush1.msra.mxu0 0.0
    %4380 = vmatprep.subr.mxu0 0.0
    %4381 = vmatpush1.msra.mxu0 0.0
    %4382 = vmatprep.subr.mxu0 0.0
    %4383 = vmatpush1.msra.mxu0 %v4347
    %4384 = vmatprep.subr.mxu0 0.0
    %4385 = vmatpush1.msra.mxu0 %v4346
    %4386 = vmatprep.subr.mxu0 0.0
    %4387 = vmatpush1.msra.mxu0 %v4345
    %4388 = vmatprep.subr.mxu0 0.0
    %4389 = vmatpush1.msra.mxu0 %v4344
    %4390 = vmatprep.subr.mxu0 0.0
    %4391 = vmatpush2.msra.mxu0 0.0
    %4392 = vmatprep.subr.mxu0 0.0
    %4393 = vmatpush2.msra.mxu0 0.0
    %4394 = vmatprep.subr.mxu0 0.0
    %4395 = vmatpush2.msra.mxu0 0.0
    %4396 = vmatprep.subr.mxu0 0.0
    %4397 = vmatpush2.msra.mxu0 0.0
    %4398 = vmatprep.subr.mxu0 0.0
    %4399 = vmatpush2.msra.mxu0 0.0
    %4400 = vmatprep.subr.mxu0 0.0
    %4401 = vmatpush2.msra.mxu0 0.0
    %4402 = vmatprep.subr.mxu0 0.0
    %4403 = vmatpush2.msra.mxu0 0.0
    %4404 = vmatprep.subr.mxu0 0.0
    %4405 = vmatpush2.msra.mxu0 0.0
    %4406 = vmatprep.subr.mxu0 0.0
    %4407 = vmatpush2.msra.mxu0 0.0
    %4408 = vmatprep.subr.mxu0 0.0
    %4409 = vmatpush2.msra.mxu0 0.0
    %4410 = vmatprep.subr.mxu0 0.0
    %4411 = vmatpush2.msra.mxu0 0.0
    %4412 = vmatprep.subr.mxu0 0.0
    %4413 = vmatpush2.msra.mxu0 0.0
    %4414 = vmatprep.subr.mxu0 0.0
    %4415 = vmatpush2.msra.mxu0 0.0
    %4416 = vmatprep.subr.mxu0 0.0
    %4417 = vmatpush2.msra.mxu0 0.0
    %4418 = vmatprep.subr.mxu0 0.0
    %4419 = vmatpush2.msra.mxu0 0.0
    %4420 = vmatprep.subr.mxu0 0.0
    %4421 = vmatpush2.msra.mxu0 0.0
    %4422 = vmatprep.mubr.f32.mxu0 0.0
    %4423 = vmatmul.mubr.f32.gmra.mxu0 %v4356
    %v4424 = vpop.f32.mrf.mxu0
    %v4425 = vadd.f32 %v4353, %v4424
    %v4426 = vpop.f32.mrf.mxu0
    %4427 = vdwg.mxu0
    %v4428 = vmax.f32 %v4425, 0.0
    %v4429 = vld [vmem:[%s21] sm:$0xff]
    %v4430 = vld [vmem:[%s21 + $0x8] sm:$0xff]
    %v4431 = vld [vmem:[%s21 + $0x10] sm:$0xff]
    %v4432 = vld [vmem:[%s21 + $0x18] sm:$0xff]
    %v4433 = vld [vmem:[#allocation2] sm:$0x1]
    %v4435 = vlaneseq
    %v4436 = vshrl.u32 %v4435, 7
    %v4437 = vsub.s32 0, %v4436
    %v4438 = vrot.slane %v4433, %v4437
    %v4441 = vsel %vm112, %v4428, 0
    %4443 = vmatprep.subr.mxu0 0.0
    %4444 = vmatpush1.msra.mxu0 0.0
    %4445 = vmatprep.subr.mxu0 0.0
    %4446 = vmatpush1.msra.mxu0 0.0
    %4447 = vmatprep.subr.mxu0 0.0
    %4448 = vmatpush1.msra.mxu0 0.0
    %4449 = vmatprep.subr.mxu0 0.0
    %4450 = vmatpush1.msra.mxu0 0.0
    %4451 = vmatprep.subr.mxu0 0.0
    %4452 = vmatpush1.msra.mxu0 0.0
    %4453 = vmatprep.subr.mxu0 0.0
    %4454 = vmatpush1.msra.mxu0 0.0
    %4455 = vmatprep.subr.mxu0 0.0
    %4456 = vmatpush1.msra.mxu0 0.0
    %4457 = vmatprep.subr.mxu0 0.0
    %4458 = vmatpush1.msra.mxu0 0.0
    %4459 = vmatprep.subr.mxu0 0.0
    %4460 = vmatpush1.msra.mxu0 0.0
    %4461 = vmatprep.subr.mxu0 0.0
    %4462 = vmatpush1.msra.mxu0 0.0
    %4463 = vmatprep.subr.mxu0 0.0
    %4464 = vmatpush1.msra.mxu0 0.0
    %4465 = vmatprep.subr.mxu0 0.0
    %4466 = vmatpush1.msra.mxu0 0.0
    %4467 = vmatprep.subr.mxu0 0.0
    %4468 = vmatpush1.msra.mxu0 %v4432
    %4469 = vmatprep.subr.mxu0 0.0
    %4470 = vmatpush1.msra.mxu0 %v4431
    %4471 = vmatprep.subr.mxu0 0.0
    %4472 = vmatpush1.msra.mxu0 %v4430
    %4473 = vmatprep.subr.mxu0 0.0
    %4474 = vmatpush1.msra.mxu0 %v4429
    %4475 = vmatprep.subr.mxu0 0.0
    %4476 = vmatpush2.msra.mxu0 0.0
    %4477 = vmatprep.subr.mxu0 0.0
    %4478 = vmatpush2.msra.mxu0 0.0
    %4479 = vmatprep.subr.mxu0 0.0
    %4480 = vmatpush2.msra.mxu0 0.0
    %4481 = vmatprep.subr.mxu0 0.0
    %4482 = vmatpush2.msra.mxu0 0.0
    %4483 = vmatprep.subr.mxu0 0.0
    %4484 = vmatpush2.msra.mxu0 0.0
    %4485 = vmatprep.subr.mxu0 0.0
    %4486 = vmatpush2.msra.mxu0 0.0
    %4487 = vmatprep.subr.mxu0 0.0
    %4488 = vmatpush2.msra.mxu0 0.0
    %4489 = vmatprep.subr.mxu0 0.0
    %4490 = vmatpush2.msra.mxu0 0.0
    %4491 = vmatprep.subr.mxu0 0.0
    %4492 = vmatpush2.msra.mxu0 0.0
    %4493 = vmatprep.subr.mxu0 0.0
    %4494 = vmatpush2.msra.mxu0 0.0
    %4495 = vmatprep.subr.mxu0 0.0
    %4496 = vmatpush2.msra.mxu0 0.0
    %4497 = vmatprep.subr.mxu0 0.0
    %4498 = vmatpush2.msra.mxu0 0.0
    %4499 = vmatprep.subr.mxu0 0.0
    %4500 = vmatpush2.msra.mxu0 0.0
    %4501 = vmatprep.subr.mxu0 0.0
    %4502 = vmatpush2.msra.mxu0 0.0
    %4503 = vmatprep.subr.mxu0 0.0
    %4504 = vmatpush2.msra.mxu0 0.0
    %4505 = vmatprep.subr.mxu0 0.0
    %4506 = vmatpush2.msra.mxu0 0.0
    %4507 = vmatprep.mubr.f32.mxu0 0.0
    %4508 = vmatmul.mubr.f32.gmra.mxu0 %v4441
    %v4509 = vpop.f32.mrf.mxu0
    %v4510 = vadd.f32 %v4438, %v4509
    %v4511 = vpop.f32.mrf.mxu0
    %4512 = vdwg.mxu0
    %vm4513 = vcmask 1024
    %4514 = vst.msk [vmem:[%s23] sm:$0x3] %vm4513, %v4510
    // Predicated region
    $region98: #{forward.1} parent=1 // pred_check
      _
    $region99: #{forward.1} parent=1 // pred_check_branch
      %4516 = sbr.rel (0) target = $region101
    $region100: #{forward.1} parent=1 // pred_region
      _
    $region101: #{forward.1} parent=1 // pred_fallthru
      _
    // Predicated region
    $region102: #{forward.1} parent=1 // pred_check
      _
    $region103: #{forward.1} parent=1 // pred_check_branch
      %4518 = sbr.rel (0) target = $region105
    $region104: #{forward.1} parent=1 // pred_region
      _
    $region105: #{forward.1} parent=1 // pred_fallthru
      _
    %4519 = vsyncpa [#allocation4], 1

</llo_original>
